<compile_context>
chip_gen: v6e
topology: v6e:2x2x1
jax: 0.10.0
libtpu: 0.0.40
codegen_flags: <defaults>
</compile_context>

<pallas_src>
import jax
import jax.numpy as jnp
from jax.experimental import pallas as pl
from jax.experimental.pallas import tpu as pltpu

# ---------------- config (small shapes consistent with the module) -----------
BATCH = 2
NODES = 4
HIST = 8          # history_len == seq_len
IN_DIM = 4        # gru_input_size == input_dim
HID = 32          # gru_hidden_size
GAT_OUT = 16      # gat_out_channel
PRED = 4          # prediction_len
HEADS = 3

GAT_FEAT = GAT_OUT * HIST          # 128 (GAT output channels, concat=False)
GAT_IN = HID * HIST                # 256 (GAT input channels)
GATE_PAD = 128                     # each GRU gate gets its own 128-lane block
LAB_ROWS = 8                       # label rows in the fused output slab

_VMEM = pl.BlockSpec(memory_space=pltpu.MemorySpace.VMEM)


# ----------------------------- fused forward kernel --------------------------
def _grugat_kernel(x_ref, wih_ref, bih_ref, whh_ref, bhh_ref,
                   wsrc_ref, attsrc_ref, attdst_ref, aedge_ref, mask_ref,
                   gbias_ref, p1w_ref, p1b_ref, p3w_ref, p3b_ref,
                   c1w_ref, c1b_ref, c2w_ref, c2b_ref,
                   out_ref, gi_s, hs_s):
    # x: (Nn, L*D)     wih: (D, 3*128) gate-padded    bih/bhh: (1, 3*128)
    # whh: (H, 3*128)  wsrc: (L*H, HEADS*C) bf16      attsrc/attdst: (HEADS, C)
    # aedge: (HEADS, Nn, Nn) with additive -1e30 on non-edges   mask: (Nn, Nn)
    # gbias: (1, C)    p1w: (C, L)  p1b: (1,1)  p3w: (L, 128)   p3b: (1, 128)
    # c1w: (C, 16)     c1b: (1,16)  c2w: (16, 128)  c2b: (1,128) (-1e30 padded)
    # out: (Nn + 8, 128) fused slab  |  scratch: gi_s (L,Nn,3*128), hs_s (L,Nn,128)
    Nn = BATCH * NODES
    GP = GATE_PAD
    C = GAT_FEAT

    # ---- 1) GRU input projection, hoisted: all timesteps before the recurrence
    # (off the serial chain; parked in VMEM scratch so the recurrence issues
    #  exactly one MXU op per step -> no interleaved MRF pops on v5e/v6e).
    x2 = x_ref[...]                                   # (Nn, L*D)
    wih = wih_ref[...]                                # (D, 3*GP)
    bih = bih_ref[...]                                # (1, 3*GP)
    for t in range(HIST):                             # static unroll, off-chain
        xt = x2[:, t * IN_DIM:(t + 1) * IN_DIM]       # (Nn, D)
        gi_s[t] = jnp.dot(xt, wih, preferred_element_type=jnp.float32) + bih

    # ---- 2) GRU recurrence (fully unrolled).  Gates live in 128-lane blocks:
    # slices at lane offsets 0/128/256 are vreg-aligned (no cross-lane rotates
    # on the critical path).  h is carried 128-wide; padded lanes stay 0.
    whh = whh_ref[...]                                # (H, 3*GP)
    bhh = bhh_ref[...]                                # (1, 3*GP)
    h = jnp.zeros((Nn, GP), jnp.float32)
    for t in range(HIST):
        gi = gi_s[t]                                              # (Nn, 3*GP)
        gh = jnp.dot(h[:, :HID], whh, preferred_element_type=jnp.float32) + bhh
        r = jax.nn.sigmoid(gi[:, 0:GP] + gh[:, 0:GP])
        z = jax.nn.sigmoid(gi[:, GP:2 * GP] + gh[:, GP:2 * GP])
        n = jnp.tanh(gi[:, 2 * GP:3 * GP] + r * gh[:, 2 * GP:3 * GP])
        h = (1.0 - z) * n + z * h
        hs_s[t] = h                                   # off-chain full-vreg store

    # ---- 3) GAT input projection, issued AFTER the loop (off the serial chain)
    # bf16 weights/lhs, f32 accumulation.
    xp = jnp.zeros((Nn, HEADS * C), jnp.float32)
    for t in range(HIST):
        ht = hs_s[t][:, :HID].astype(jnp.bfloat16)    # (Nn, H)
        xp = xp + jnp.dot(ht, wsrc_ref[t * HID:(t + 1) * HID, :],
                          preferred_element_type=jnp.float32)

    # ---- 4) GAT: dense masked multi-head attention, mean over heads ---------
    mask = mask_ref[...]                              # (Nn, Nn) in {0,1}
    acc = jnp.zeros((Nn, C), jnp.float32)
    for hh in range(HEADS):                           # static unroll over heads
        xh = xp[:, hh * C:(hh + 1) * C]               # (Nn, C), 128-aligned slice
        a_src = jnp.sum(xh * attsrc_ref[hh:hh + 1, :], axis=-1, keepdims=True)
        a_dst = jnp.sum(xh * attdst_ref[hh:hh + 1, :], axis=-1, keepdims=True)
        # aedge already carries the additive -1e30 non-edge mask (prep-time).
        logits = a_dst + jnp.transpose(a_src) + aedge_ref[hh]     # (dst, src)
        logits = jnp.maximum(logits, 0.2 * logits)                # LeakyReLU(0.2)
        m = jnp.max(logits, axis=-1, keepdims=True)
        e = jnp.exp(logits - m) * mask                            # zero non-edges
        denom = jnp.maximum(jnp.sum(e, axis=-1, keepdims=True), 1e-16)
        att = e / denom                          # exact softmax (matches torch)
        acc = acc + jnp.dot(att, xh, preferred_element_type=jnp.float32)
    gat_out = acc * jnp.float32(1.0 / HEADS) + gbias_ref[...]     # (Nn, C)

    # ---- 5) predictor branch: block-diag predictor_1, lane-padded predictor_3
    h1 = jnp.dot(gat_out, p1w_ref[...], preferred_element_type=jnp.float32)
    h1 = jnp.maximum(h1 + p1b_ref[...], 0.0)                      # (Nn, L), ReLU
    pred = jnp.dot(h1, p3w_ref[...], preferred_element_type=jnp.float32) + p3b_ref[...]
    pred = jnp.maximum(pred, 0.0)                 # (Nn, 128); lanes >= PRED are 0

    # ---- 6) classifier branch: GRL identity, per-graph max pool, vectorized
    # matmuls + single row softmax over graphs (c2 bias padded with -1e30).
    pooled = jnp.concatenate(
        [jnp.max(gat_out[b * NODES:(b + 1) * NODES, :], axis=0, keepdims=True)
         for b in range(BATCH)], axis=0)                          # (B, C)
    hc1 = jnp.dot(pooled, c1w_ref[...], preferred_element_type=jnp.float32) + c1b_ref[...]
    hc2 = jnp.dot(hc1, c2w_ref[...], preferred_element_type=jnp.float32) + c2b_ref[...]
    mm = jnp.max(hc2, axis=-1, keepdims=True)
    ee = jnp.exp(hc2 - mm)                        # padded lanes underflow to 0
    label = ee / jnp.sum(ee, axis=-1, keepdims=True)              # (B, 128)

    # ---- 7) single lane-dense output store (one writeback DMA) --------------
    tail = jnp.concatenate(
        [label, jnp.zeros((LAB_ROWS - BATCH, GP), jnp.float32)], axis=0)  # (8,128)
    out_ref[...] = jnp.concatenate([pred, tail], axis=0)          # (Nn+8, 128)


# ------------------------------- forward wrapper ------------------------------
def grugat_forward(x, aedge, mask, alpha, params):
    """x: (batch, node, seq_len, input_dim). alpha only affects backward (GRL)."""
    del alpha  # ReverseLayerF.forward is identity
    B, N, L, D = x.shape
    Nn = B * N
    x2 = x.reshape(Nn, L * D)          # free (contiguous) reshape, no transpose
    out = pl.pallas_call(
        _grugat_kernel,
        out_shape=jax.ShapeDtypeStruct((Nn + LAB_ROWS, GATE_PAD), jnp.float32),
        in_specs=[_VMEM] * 19,
        out_specs=_VMEM,
        scratch_shapes=[
            pltpu.VMEM((HIST, Nn, 3 * GATE_PAD), jnp.float32),   # gi per timestep
            pltpu.VMEM((HIST, Nn, GATE_PAD), jnp.float32),       # h per timestep
        ],
    )(x2, params["w_ih_p"], params["b_ih_p"], params["w_hh_p"], params["b_hh_p"],
      params["w_src_t"], params["att_src"], params["att_dst"], aedge, mask,
      params["gat_bias"], params["p1_bd"], params["p1_b"], params["p3_w_pad"],
      params["p3_b_pad"], params["c1_w_t"], params["c1_b"], params["c2_w_pad"],
      params["c2_b_pad"])
    pred = out[:Nn, :PRED].reshape(B, N, PRED)
    label = out[Nn:Nn + B, :2]
    return pred, label


# ------------------------- one-time parameter preparation ---------------------
def prepare_params(raw):
    """Transpose / pad PyTorch-layout weights once, outside the hot path."""
    f32 = jnp.float32
    GP = GATE_PAD
    # Gate-padded GRU weights: gate g occupies lanes [g*128, g*128+H).
    w_ih_p = jnp.zeros((IN_DIM, 3 * GP), f32)
    w_hh_p = jnp.zeros((HID, 3 * GP), f32)
    b_ih_p = jnp.zeros((1, 3 * GP), f32)
    b_hh_p = jnp.zeros((1, 3 * GP), f32)
    for g in range(3):                     # PyTorch gate order: r, z, n
        w_ih_p = w_ih_p.at[:, g * GP:g * GP + HID].set(
            raw["gru_w_ih"][g * HID:(g + 1) * HID, :].T)
        w_hh_p = w_hh_p.at[:, g * GP:g * GP + HID].set(
            raw["gru_w_hh"][g * HID:(g + 1) * HID, :].T)
        b_ih_p = b_ih_p.at[0, g * GP:g * GP + HID].set(
            raw["gru_b_ih"][g * HID:(g + 1) * HID])
        b_hh_p = b_hh_p.at[0, g * GP:g * GP + HID].set(
            raw["gru_b_hh"][g * HID:(g + 1) * HID])
    # Block-diagonal predictor_1 weight: (GAT_FEAT, HIST) so that
    # (gat_out @ p1_bd)[n, t] == sum_c gat_out[n, t*GAT_OUT + c] * p1_w[0, c].
    p1_bd = jnp.zeros((GAT_FEAT, HIST), f32)
    for t in range(HIST):
        p1_bd = p1_bd.at[t * GAT_OUT:(t + 1) * GAT_OUT, t].set(raw["p1_w"][0])
    # Lane-padded predictor_3 (padded outputs are exactly 0 after ReLU).
    p3_w_pad = jnp.zeros((HIST, GP), f32).at[:, :PRED].set(raw["p3_w"].T)
    p3_b_pad = jnp.zeros((1, GP), f32).at[0, :PRED].set(raw["p3_b"])
    # Lane-padded classifier_2 with -1e30 bias on padded lanes so the row-wise
    # softmax over 128 lanes equals the exact 2-class softmax.
    c2_w_pad = jnp.zeros((GAT_OUT, GP), f32).at[:, :2].set(raw["c2_w"].T)
    c2_b_pad = jnp.full((1, GP), -1e30, f32).at[0, :2].set(raw["c2_b"])
    return {
        "w_ih_p": w_ih_p, "b_ih_p": b_ih_p,
        "w_hh_p": w_hh_p, "b_hh_p": b_hh_p,
        "w_src_t": raw["lin_src_w"].T.astype(jnp.bfloat16),   # (GAT_IN, HEADS*C) bf16
        "att_src": raw["att_src"][0],          # (HEADS, GAT_FEAT)
        "att_dst": raw["att_dst"][0],          # (HEADS, GAT_FEAT)
        "gat_bias": raw["gat_bias"][None, :],  # (1, GAT_FEAT)
        "p1_bd": p1_bd,                        # (GAT_FEAT, HIST)
        "p1_b": raw["p1_b"].reshape(1, 1),
        "p3_w_pad": p3_w_pad, "p3_b_pad": p3_b_pad,
        "c1_w_t": raw["c1_w"].T,               # (GAT_FEAT, GAT_OUT)
        "c1_b": raw["c1_b"][None, :],
        "c2_w_pad": c2_w_pad, "c2_b_pad": c2_b_pad,
    }


def prepare_graph(edge_index, edge_attr, raw, num_nodes):
    """Precompute the dense edge mask + per-head edge-attention logits once
    (graph is static); fold the additive -1e30 non-edge mask into aedge."""
    e_lin = (edge_attr @ raw["lin_edge_w"].T).reshape(-1, HEADS, GAT_FEAT)
    alpha_e = jnp.sum(e_lin * raw["att_edge"][0], axis=-1)          # (E, HEADS)
    src, dst = edge_index[0], edge_index[1]
    mask = jnp.zeros((num_nodes, num_nodes), jnp.float32).at[dst, src].set(1.0)
    aedge = jnp.zeros((HEADS, num_nodes, num_nodes), jnp.float32)
    aedge = aedge.at[:, dst, src].set(alpha_e.T)
    aedge = aedge + (mask[None, :, :] - 1.0) * 1e30   # 0 on edges, -1e30 off
    return aedge, mask


# ------------------------------- parameters (PyTorch layout) ------------------
def init_params(key):
    ks = jax.random.split(key, 20)
    p = lambda k, shape, s=0.1: (s * jax.random.normal(k, shape)).astype(jnp.float32)
    return {
        # nn.GRU(IN_DIM, HID)
        "gru_w_ih": p(ks[0], (3 * HID, IN_DIM)),
        "gru_w_hh": p(ks[1], (3 * HID, HID)),
        "gru_b_ih": p(ks[2], (3 * HID,)),
        "gru_b_hh": p(ks[3], (3 * HID,)),
        # GATConv(GAT_IN, GAT_FEAT, heads=3, concat=False, edge_dim=1)
        "lin_src_w": p(ks[4], (HEADS * GAT_FEAT, GAT_IN)),
        "att_src": p(ks[5], (1, HEADS, GAT_FEAT)),
        "att_dst": p(ks[6], (1, HEADS, GAT_FEAT)),
        "lin_edge_w": p(ks[7], (HEADS * GAT_FEAT, 1)),
        "att_edge": p(ks[8], (1, HEADS, GAT_FEAT)),
        "gat_bias": p(ks[9], (GAT_FEAT,)),
        # predictor_1: Linear(GAT_OUT, 1)
        "p1_w": p(ks[10], (1, GAT_OUT)),
        "p1_b": p(ks[11], (1,)),
        # predictor_3: Linear(HIST, PRED)
        "p3_w": p(ks[12], (PRED, HIST)),
        "p3_b": p(ks[13], (PRED,)),
        # classifer_1: Linear(HIST*GAT_OUT, GAT_OUT)
        "c1_w": p(ks[14], (GAT_OUT, HIST * GAT_OUT)),
        "c1_b": p(ks[15], (GAT_OUT,)),
        # classifer_2: Linear(GAT_OUT, 2)
        "c2_w": p(ks[16], (2, GAT_OUT)),
        "c2_b": p(ks[17], (2,)),
    }


if __name__ == "__main__":
    key = jax.random.PRNGKey(0)
    k_x, k_e, k_p = jax.random.split(key, 3)
    raw_params = init_params(k_p)
    params = prepare_params(raw_params)            # one-time weight layout prep

    # data.x : (batch, node, seq, feat)
    x = jax.random.normal(k_x, (BATCH, NODES, HIST, IN_DIM), dtype=jnp.float32)

    # bidirectional ring graph inside each batch element (contiguous data.batch)
    src_list, dst_list = [], []
    for b in range(BATCH):
        base = b * NODES
        for i in range(NODES):
            j = (i + 1) % NODES
            src_list += [base + i, base + j]
            dst_list += [base + j, base + i]
    edge_index = jnp.array([src_list, dst_list], dtype=jnp.int32)      # (2, E)
    edge_attr = jax.random.normal(k_e, (edge_index.shape[1], 1), dtype=jnp.float32)
    aedge, mask = prepare_graph(edge_index, edge_attr, raw_params, BATCH * NODES)
    alpha = 0.5

    fwd = jax.jit(grugat_forward)
    output_predict, output_label = fwd(x, aedge, mask, alpha, params)
    jax.block_until_ready((output_predict, output_label))

    assert output_predict.shape == (BATCH, NODES, PRED)
    assert output_label.shape == (BATCH, 2)
    print("KERNEL_OK")
</pallas_src>

<mosaic_0001>
module attributes {stable_mosaic.version = 11 : i64} {
  func.func @_grugat_kernel(%arg0: memref<8x32xf32, #tpu.memory_space<vmem>>, %arg1: memref<4x384xf32, #tpu.memory_space<vmem>>, %arg2: memref<1x384xf32, #tpu.memory_space<vmem>>, %arg3: memref<32x384xf32, #tpu.memory_space<vmem>>, %arg4: memref<1x384xf32, #tpu.memory_space<vmem>>, %arg5: memref<256x384xbf16, #tpu.memory_space<vmem>>, %arg6: memref<3x128xf32, #tpu.memory_space<vmem>>, %arg7: memref<3x128xf32, #tpu.memory_space<vmem>>, %arg8: memref<3x8x8xf32, #tpu.memory_space<vmem>>, %arg9: memref<8x8xf32, #tpu.memory_space<vmem>>, %arg10: memref<1x128xf32, #tpu.memory_space<vmem>>, %arg11: memref<128x8xf32, #tpu.memory_space<vmem>>, %arg12: memref<1x1xf32, #tpu.memory_space<vmem>>, %arg13: memref<8x128xf32, #tpu.memory_space<vmem>>, %arg14: memref<1x128xf32, #tpu.memory_space<vmem>>, %arg15: memref<128x16xf32, #tpu.memory_space<vmem>>, %arg16: memref<1x16xf32, #tpu.memory_space<vmem>>, %arg17: memref<16x128xf32, #tpu.memory_space<vmem>>, %arg18: memref<1x128xf32, #tpu.memory_space<vmem>>, %arg19: memref<16x128xf32, #tpu.memory_space<vmem>>, %arg20: memref<8x8x384xf32, #tpu.memory_space<vmem>>, %arg21: memref<8x8x128xf32, #tpu.memory_space<vmem>>) attributes {dimension_semantics = [], scalar_prefetch = 0 : i64, scratch_operands = 2 : i64, tpu.core_type = #tpu.core_type<tc>} {
    %c0 = arith.constant 0 : index
    %c0_0 = arith.constant 0 : index
    %0 = vector.load %arg0[%c0, %c0_0] : memref<8x32xf32, #tpu.memory_space<vmem>>, vector<8x32xf32>
    %c0_1 = arith.constant 0 : index
    %c0_2 = arith.constant 0 : index
    %1 = vector.load %arg1[%c0_1, %c0_2] : memref<4x384xf32, #tpu.memory_space<vmem>>, vector<4x384xf32>
    %c0_3 = arith.constant 0 : index
    %c0_4 = arith.constant 0 : index
    %2 = vector.load %arg2[%c0_3, %c0_4] : memref<1x384xf32, #tpu.memory_space<vmem>>, vector<1x384xf32>
    %3 = vector.extract_strided_slice %0 {offsets = [0, 0], sizes = [8, 4], strides = [1, 1]} : vector<8x32xf32> to vector<8x4xf32>
    %cst = arith.constant dense<0.000000e+00> : vector<8x384xf32>
    %4 = tpu.matmul %3, %1, %cst {dimension_numbers = #tpu.dot_dimension_numbers<[1], [0], [0], [1], [0, 0, 1, 1], [], []>} : vector<8x4xf32>, vector<4x384xf32>, vector<8x384xf32> -> vector<8x384xf32>
    %5 = vector.broadcast %2 : vector<1x384xf32> to vector<8x384xf32>
    %6 = arith.addf %4, %5 : vector<8x384xf32>
    %c0_5 = arith.constant 0 : index
    %c0_6 = arith.constant 0 : index
    %c0_7 = arith.constant 0 : index
    %7 = vector.load %arg20[%c0_5, %c0_6, %c0_7] : memref<8x8x384xf32, #tpu.memory_space<vmem>>, vector<1x8x384xf32>
    %8 = vector.shape_cast %7 : vector<1x8x384xf32> to vector<8x384xf32>
    %9 = vector.shape_cast %6 : vector<8x384xf32> to vector<1x8x384xf32>
    tpu.vector_store %arg20[%c0_5, %c0_6, %c0_7], %9 {strides = array<i32>} : memref<8x8x384xf32, #tpu.memory_space<vmem>>, vector<1x8x384xf32>,
    %10 = vector.extract_strided_slice %0 {offsets = [0, 4], sizes = [8, 4], strides = [1, 1]} : vector<8x32xf32> to vector<8x4xf32>
    %cst_8 = arith.constant dense<0.000000e+00> : vector<8x384xf32>
    %11 = tpu.matmul %10, %1, %cst_8 {dimension_numbers = #tpu.dot_dimension_numbers<[1], [0], [0], [1], [0, 0, 1, 1], [], []>} : vector<8x4xf32>, vector<4x384xf32>, vector<8x384xf32> -> vector<8x384xf32>
    %12 = vector.broadcast %2 : vector<1x384xf32> to vector<8x384xf32>
    %13 = arith.addf %11, %12 : vector<8x384xf32>
    %c1 = arith.constant 1 : index
    %c0_9 = arith.constant 0 : index
    %c0_10 = arith.constant 0 : index
    %14 = vector.load %arg20[%c1, %c0_9, %c0_10] : memref<8x8x384xf32, #tpu.memory_space<vmem>>, vector<1x8x384xf32>
    %15 = vector.shape_cast %14 : vector<1x8x384xf32> to vector<8x384xf32>
    %16 = vector.shape_cast %13 : vector<8x384xf32> to vector<1x8x384xf32>
    tpu.vector_store %arg20[%c1, %c0_9, %c0_10], %16 {strides = array<i32>} : memref<8x8x384xf32, #tpu.memory_space<vmem>>, vector<1x8x384xf32>,
    %17 = vector.extract_strided_slice %0 {offsets = [0, 8], sizes = [8, 4], strides = [1, 1]} : vector<8x32xf32> to vector<8x4xf32>
    %cst_11 = arith.constant dense<0.000000e+00> : vector<8x384xf32>
    %18 = tpu.matmul %17, %1, %cst_11 {dimension_numbers = #tpu.dot_dimension_numbers<[1], [0], [0], [1], [0, 0, 1, 1], [], []>} : vector<8x4xf32>, vector<4x384xf32>, vector<8x384xf32> -> vector<8x384xf32>
    %19 = vector.broadcast %2 : vector<1x384xf32> to vector<8x384xf32>
    %20 = arith.addf %18, %19 : vector<8x384xf32>
    %c2 = arith.constant 2 : index
    %c0_12 = arith.constant 0 : index
    %c0_13 = arith.constant 0 : index
    %21 = vector.load %arg20[%c2, %c0_12, %c0_13] : memref<8x8x384xf32, #tpu.memory_space<vmem>>, vector<1x8x384xf32>
    %22 = vector.shape_cast %21 : vector<1x8x384xf32> to vector<8x384xf32>
    %23 = vector.shape_cast %20 : vector<8x384xf32> to vector<1x8x384xf32>
    tpu.vector_store %arg20[%c2, %c0_12, %c0_13], %23 {strides = array<i32>} : memref<8x8x384xf32, #tpu.memory_space<vmem>>, vector<1x8x384xf32>,
    %24 = vector.extract_strided_slice %0 {offsets = [0, 12], sizes = [8, 4], strides = [1, 1]} : vector<8x32xf32> to vector<8x4xf32>
    %cst_14 = arith.constant dense<0.000000e+00> : vector<8x384xf32>
    %25 = tpu.matmul %24, %1, %cst_14 {dimension_numbers = #tpu.dot_dimension_numbers<[1], [0], [0], [1], [0, 0, 1, 1], [], []>} : vector<8x4xf32>, vector<4x384xf32>, vector<8x384xf32> -> vector<8x384xf32>
    %26 = vector.broadcast %2 : vector<1x384xf32> to vector<8x384xf32>
    %27 = arith.addf %25, %26 : vector<8x384xf32>
    %c3 = arith.constant 3 : index
    %c0_15 = arith.constant 0 : index
    %c0_16 = arith.constant 0 : index
    %28 = vector.load %arg20[%c3, %c0_15, %c0_16] : memref<8x8x384xf32, #tpu.memory_space<vmem>>, vector<1x8x384xf32>
    %29 = vector.shape_cast %28 : vector<1x8x384xf32> to vector<8x384xf32>
    %30 = vector.shape_cast %27 : vector<8x384xf32> to vector<1x8x384xf32>
    tpu.vector_store %arg20[%c3, %c0_15, %c0_16], %30 {strides = array<i32>} : memref<8x8x384xf32, #tpu.memory_space<vmem>>, vector<1x8x384xf32>,
    %31 = vector.extract_strided_slice %0 {offsets = [0, 16], sizes = [8, 4], strides = [1, 1]} : vector<8x32xf32> to vector<8x4xf32>
    %cst_17 = arith.constant dense<0.000000e+00> : vector<8x384xf32>
    %32 = tpu.matmul %31, %1, %cst_17 {dimension_numbers = #tpu.dot_dimension_numbers<[1], [0], [0], [1], [0, 0, 1, 1], [], []>} : vector<8x4xf32>, vector<4x384xf32>, vector<8x384xf32> -> vector<8x384xf32>
    %33 = vector.broadcast %2 : vector<1x384xf32> to vector<8x384xf32>
    %34 = arith.addf %32, %33 : vector<8x384xf32>
    %c4 = arith.constant 4 : index
    %c0_18 = arith.constant 0 : index
    %c0_19 = arith.constant 0 : index
    %35 = vector.load %arg20[%c4, %c0_18, %c0_19] : memref<8x8x384xf32, #tpu.memory_space<vmem>>, vector<1x8x384xf32>
    %36 = vector.shape_cast %35 : vector<1x8x384xf32> to vector<8x384xf32>
    %37 = vector.shape_cast %34 : vector<8x384xf32> to vector<1x8x384xf32>
    tpu.vector_store %arg20[%c4, %c0_18, %c0_19], %37 {strides = array<i32>} : memref<8x8x384xf32, #tpu.memory_space<vmem>>, vector<1x8x384xf32>,
    %38 = vector.extract_strided_slice %0 {offsets = [0, 20], sizes = [8, 4], strides = [1, 1]} : vector<8x32xf32> to vector<8x4xf32>
    %cst_20 = arith.constant dense<0.000000e+00> : vector<8x384xf32>
    %39 = tpu.matmul %38, %1, %cst_20 {dimension_numbers = #tpu.dot_dimension_numbers<[1], [0], [0], [1], [0, 0, 1, 1], [], []>} : vector<8x4xf32>, vector<4x384xf32>, vector<8x384xf32> -> vector<8x384xf32>
    %40 = vector.broadcast %2 : vector<1x384xf32> to vector<8x384xf32>
    %41 = arith.addf %39, %40 : vector<8x384xf32>
    %c5 = arith.constant 5 : index
    %c0_21 = arith.constant 0 : index
    %c0_22 = arith.constant 0 : index
    %42 = vector.load %arg20[%c5, %c0_21, %c0_22] : memref<8x8x384xf32, #tpu.memory_space<vmem>>, vector<1x8x384xf32>
    %43 = vector.shape_cast %42 : vector<1x8x384xf32> to vector<8x384xf32>
    %44 = vector.shape_cast %41 : vector<8x384xf32> to vector<1x8x384xf32>
    tpu.vector_store %arg20[%c5, %c0_21, %c0_22], %44 {strides = array<i32>} : memref<8x8x384xf32, #tpu.memory_space<vmem>>, vector<1x8x384xf32>,
    %45 = vector.extract_strided_slice %0 {offsets = [0, 24], sizes = [8, 4], strides = [1, 1]} : vector<8x32xf32> to vector<8x4xf32>
    %cst_23 = arith.constant dense<0.000000e+00> : vector<8x384xf32>
    %46 = tpu.matmul %45, %1, %cst_23 {dimension_numbers = #tpu.dot_dimension_numbers<[1], [0], [0], [1], [0, 0, 1, 1], [], []>} : vector<8x4xf32>, vector<4x384xf32>, vector<8x384xf32> -> vector<8x384xf32>
    %47 = vector.broadcast %2 : vector<1x384xf32> to vector<8x384xf32>
    %48 = arith.addf %46, %47 : vector<8x384xf32>
    %c6 = arith.constant 6 : index
    %c0_24 = arith.constant 0 : index
    %c0_25 = arith.constant 0 : index
    %49 = vector.load %arg20[%c6, %c0_24, %c0_25] : memref<8x8x384xf32, #tpu.memory_space<vmem>>, vector<1x8x384xf32>
    %50 = vector.shape_cast %49 : vector<1x8x384xf32> to vector<8x384xf32>
    %51 = vector.shape_cast %48 : vector<8x384xf32> to vector<1x8x384xf32>
    tpu.vector_store %arg20[%c6, %c0_24, %c0_25], %51 {strides = array<i32>} : memref<8x8x384xf32, #tpu.memory_space<vmem>>, vector<1x8x384xf32>,
    %52 = vector.extract_strided_slice %0 {offsets = [0, 28], sizes = [8, 4], strides = [1, 1]} : vector<8x32xf32> to vector<8x4xf32>
    %cst_26 = arith.constant dense<0.000000e+00> : vector<8x384xf32>
    %53 = tpu.matmul %52, %1, %cst_26 {dimension_numbers = #tpu.dot_dimension_numbers<[1], [0], [0], [1], [0, 0, 1, 1], [], []>} : vector<8x4xf32>, vector<4x384xf32>, vector<8x384xf32> -> vector<8x384xf32>
    %54 = vector.broadcast %2 : vector<1x384xf32> to vector<8x384xf32>
    %55 = arith.addf %53, %54 : vector<8x384xf32>
    %c7 = arith.constant 7 : index
    %c0_27 = arith.constant 0 : index
    %c0_28 = arith.constant 0 : index
    %56 = vector.load %arg20[%c7, %c0_27, %c0_28] : memref<8x8x384xf32, #tpu.memory_space<vmem>>, vector<1x8x384xf32>
    %57 = vector.shape_cast %56 : vector<1x8x384xf32> to vector<8x384xf32>
    %58 = vector.shape_cast %55 : vector<8x384xf32> to vector<1x8x384xf32>
    tpu.vector_store %arg20[%c7, %c0_27, %c0_28], %58 {strides = array<i32>} : memref<8x8x384xf32, #tpu.memory_space<vmem>>, vector<1x8x384xf32>,
    %c0_29 = arith.constant 0 : index
    %c0_30 = arith.constant 0 : index
    %59 = vector.load %arg3[%c0_29, %c0_30] : memref<32x384xf32, #tpu.memory_space<vmem>>, vector<32x384xf32>
    %c0_31 = arith.constant 0 : index
    %c0_32 = arith.constant 0 : index
    %60 = vector.load %arg4[%c0_31, %c0_32] : memref<1x384xf32, #tpu.memory_space<vmem>>, vector<1x384xf32>
    %cst_33 = arith.constant 0.000000e+00 : f32
    %61 = vector.broadcast %cst_33 : f32 to vector<8x128xf32>
    %c0_34 = arith.constant 0 : index
    %c0_35 = arith.constant 0 : index
    %c0_36 = arith.constant 0 : index
    %62 = vector.load %arg20[%c0_34, %c0_35, %c0_36] : memref<8x8x384xf32, #tpu.memory_space<vmem>>, vector<1x8x384xf32>
    %63 = vector.shape_cast %62 : vector<1x8x384xf32> to vector<8x384xf32>
    %64 = vector.extract_strided_slice %61 {offsets = [0, 0], sizes = [8, 32], strides = [1, 1]} : vector<8x128xf32> to vector<8x32xf32>
    %cst_37 = arith.constant dense<0.000000e+00> : vector<8x384xf32>
    %65 = tpu.matmul %64, %59, %cst_37 {dimension_numbers = #tpu.dot_dimension_numbers<[1], [0], [0], [1], [0, 0, 1, 1], [], []>} : vector<8x32xf32>, vector<32x384xf32>, vector<8x384xf32> -> vector<8x384xf32>
    %66 = vector.broadcast %60 : vector<1x384xf32> to vector<8x384xf32>
    %67 = arith.addf %65, %66 : vector<8x384xf32>
    %68 = vector.extract_strided_slice %63 {offsets = [0, 0], sizes = [8, 128], strides = [1, 1]} : vector<8x384xf32> to vector<8x128xf32>
    %69 = vector.extract_strided_slice %67 {offsets = [0, 0], sizes = [8, 128], strides = [1, 1]} : vector<8x384xf32> to vector<8x128xf32>
    %70 = arith.addf %68, %69 : vector<8x128xf32>
    %71 = arith.negf %70 : vector<8x128xf32>
    %72 = math.exp %71 : vector<8x128xf32>
    %cst_38 = arith.constant 1.000000e+00 : f32
    %73 = vector.broadcast %cst_38 : f32 to vector<8x128xf32>
    %74 = arith.addf %73, %72 : vector<8x128xf32>
    %75 = arith.divf %73, %74 : vector<8x128xf32>
    %76 = vector.extract_strided_slice %63 {offsets = [0, 128], sizes = [8, 128], strides = [1, 1]} : vector<8x384xf32> to vector<8x128xf32>
    %77 = vector.extract_strided_slice %67 {offsets = [0, 128], sizes = [8, 128], strides = [1, 1]} : vector<8x384xf32> to vector<8x128xf32>
    %78 = arith.addf %76, %77 : vector<8x128xf32>
    %79 = arith.negf %78 : vector<8x128xf32>
    %80 = math.exp %79 : vector<8x128xf32>
    %cst_39 = arith.constant 1.000000e+00 : f32
    %81 = vector.broadcast %cst_39 : f32 to vector<8x128xf32>
    %82 = arith.addf %81, %80 : vector<8x128xf32>
    %83 = arith.divf %81, %82 : vector<8x128xf32>
    %84 = vector.extract_strided_slice %63 {offsets = [0, 256], sizes = [8, 128], strides = [1, 1]} : vector<8x384xf32> to vector<8x128xf32>
    %85 = vector.extract_strided_slice %67 {offsets = [0, 256], sizes = [8, 128], strides = [1, 1]} : vector<8x384xf32> to vector<8x128xf32>
    %86 = arith.mulf %75, %85 : vector<8x128xf32>
    %87 = arith.addf %84, %86 : vector<8x128xf32>
    %88 = math.tanh %87 : vector<8x128xf32>
    %cst_40 = arith.constant 1.000000e+00 : f32
    %89 = vector.broadcast %cst_40 : f32 to vector<8x128xf32>
    %90 = arith.subf %89, %83 : vector<8x128xf32>
    %91 = arith.mulf %90, %88 : vector<8x128xf32>
    %92 = arith.mulf %83, %61 : vector<8x128xf32>
    %93 = arith.addf %91, %92 : vector<8x128xf32>
    %c0_41 = arith.constant 0 : index
    %c0_42 = arith.constant 0 : index
    %c0_43 = arith.constant 0 : index
    %94 = vector.load %arg21[%c0_41, %c0_42, %c0_43] : memref<8x8x128xf32, #tpu.memory_space<vmem>>, vector<1x8x128xf32>
    %95 = vector.shape_cast %94 : vector<1x8x128xf32> to vector<8x128xf32>
    %96 = vector.shape_cast %93 : vector<8x128xf32> to vector<1x8x128xf32>
    tpu.vector_store %arg21[%c0_41, %c0_42, %c0_43], %96 {strides = array<i32>} : memref<8x8x128xf32, #tpu.memory_space<vmem>>, vector<1x8x128xf32>,
    %c1_44 = arith.constant 1 : index
    %c0_45 = arith.constant 0 : index
    %c0_46 = arith.constant 0 : index
    %97 = vector.load %arg20[%c1_44, %c0_45, %c0_46] : memref<8x8x384xf32, #tpu.memory_space<vmem>>, vector<1x8x384xf32>
    %98 = vector.shape_cast %97 : vector<1x8x384xf32> to vector<8x384xf32>
    %99 = vector.extract_strided_slice %93 {offsets = [0, 0], sizes = [8, 32], strides = [1, 1]} : vector<8x128xf32> to vector<8x32xf32>
    %cst_47 = arith.constant dense<0.000000e+00> : vector<8x384xf32>
    %100 = tpu.matmul %99, %59, %cst_47 {dimension_numbers = #tpu.dot_dimension_numbers<[1], [0], [0], [1], [0, 0, 1, 1], [], []>} : vector<8x32xf32>, vector<32x384xf32>, vector<8x384xf32> -> vector<8x384xf32>
    %101 = vector.broadcast %60 : vector<1x384xf32> to vector<8x384xf32>
    %102 = arith.addf %100, %101 : vector<8x384xf32>
    %103 = vector.extract_strided_slice %98 {offsets = [0, 0], sizes = [8, 128], strides = [1, 1]} : vector<8x384xf32> to vector<8x128xf32>
    %104 = vector.extract_strided_slice %102 {offsets = [0, 0], sizes = [8, 128], strides = [1, 1]} : vector<8x384xf32> to vector<8x128xf32>
    %105 = arith.addf %103, %104 : vector<8x128xf32>
    %106 = arith.negf %105 : vector<8x128xf32>
    %107 = math.exp %106 : vector<8x128xf32>
    %cst_48 = arith.constant 1.000000e+00 : f32
    %108 = vector.broadcast %cst_48 : f32 to vector<8x128xf32>
    %109 = arith.addf %108, %107 : vector<8x128xf32>
    %110 = arith.divf %108, %109 : vector<8x128xf32>
    %111 = vector.extract_strided_slice %98 {offsets = [0, 128], sizes = [8, 128], strides = [1, 1]} : vector<8x384xf32> to vector<8x128xf32>
    %112 = vector.extract_strided_slice %102 {offsets = [0, 128], sizes = [8, 128], strides = [1, 1]} : vector<8x384xf32> to vector<8x128xf32>
    %113 = arith.addf %111, %112 : vector<8x128xf32>
    %114 = arith.negf %113 : vector<8x128xf32>
    %115 = math.exp %114 : vector<8x128xf32>
    %cst_49 = arith.constant 1.000000e+00 : f32
    %116 = vector.broadcast %cst_49 : f32 to vector<8x128xf32>
    %117 = arith.addf %116, %115 : vector<8x128xf32>
    %118 = arith.divf %116, %117 : vector<8x128xf32>
    %119 = vector.extract_strided_slice %98 {offsets = [0, 256], sizes = [8, 128], strides = [1, 1]} : vector<8x384xf32> to vector<8x128xf32>
    %120 = vector.extract_strided_slice %102 {offsets = [0, 256], sizes = [8, 128], strides = [1, 1]} : vector<8x384xf32> to vector<8x128xf32>
    %121 = arith.mulf %110, %120 : vector<8x128xf32>
    %122 = arith.addf %119, %121 : vector<8x128xf32>
    %123 = math.tanh %122 : vector<8x128xf32>
    %cst_50 = arith.constant 1.000000e+00 : f32
    %124 = vector.broadcast %cst_50 : f32 to vector<8x128xf32>
    %125 = arith.subf %124, %118 : vector<8x128xf32>
    %126 = arith.mulf %125, %123 : vector<8x128xf32>
    %127 = arith.mulf %118, %93 : vector<8x128xf32>
    %128 = arith.addf %126, %127 : vector<8x128xf32>
    %c1_51 = arith.constant 1 : index
    %c0_52 = arith.constant 0 : index
    %c0_53 = arith.constant 0 : index
    %129 = vector.load %arg21[%c1_51, %c0_52, %c0_53] : memref<8x8x128xf32, #tpu.memory_space<vmem>>, vector<1x8x128xf32>
    %130 = vector.shape_cast %129 : vector<1x8x128xf32> to vector<8x128xf32>
    %131 = vector.shape_cast %128 : vector<8x128xf32> to vector<1x8x128xf32>
    tpu.vector_store %arg21[%c1_51, %c0_52, %c0_53], %131 {strides = array<i32>} : memref<8x8x128xf32, #tpu.memory_space<vmem>>, vector<1x8x128xf32>,
    %c2_54 = arith.constant 2 : index
    %c0_55 = arith.constant 0 : index
    %c0_56 = arith.constant 0 : index
    %132 = vector.load %arg20[%c2_54, %c0_55, %c0_56] : memref<8x8x384xf32, #tpu.memory_space<vmem>>, vector<1x8x384xf32>
    %133 = vector.shape_cast %132 : vector<1x8x384xf32> to vector<8x384xf32>
    %134 = vector.extract_strided_slice %128 {offsets = [0, 0], sizes = [8, 32], strides = [1, 1]} : vector<8x128xf32> to vector<8x32xf32>
    %cst_57 = arith.constant dense<0.000000e+00> : vector<8x384xf32>
    %135 = tpu.matmul %134, %59, %cst_57 {dimension_numbers = #tpu.dot_dimension_numbers<[1], [0], [0], [1], [0, 0, 1, 1], [], []>} : vector<8x32xf32>, vector<32x384xf32>, vector<8x384xf32> -> vector<8x384xf32>
    %136 = vector.broadcast %60 : vector<1x384xf32> to vector<8x384xf32>
    %137 = arith.addf %135, %136 : vector<8x384xf32>
    %138 = vector.extract_strided_slice %133 {offsets = [0, 0], sizes = [8, 128], strides = [1, 1]} : vector<8x384xf32> to vector<8x128xf32>
    %139 = vector.extract_strided_slice %137 {offsets = [0, 0], sizes = [8, 128], strides = [1, 1]} : vector<8x384xf32> to vector<8x128xf32>
    %140 = arith.addf %138, %139 : vector<8x128xf32>
    %141 = arith.negf %140 : vector<8x128xf32>
    %142 = math.exp %141 : vector<8x128xf32>
    %cst_58 = arith.constant 1.000000e+00 : f32
    %143 = vector.broadcast %cst_58 : f32 to vector<8x128xf32>
    %144 = arith.addf %143, %142 : vector<8x128xf32>
    %145 = arith.divf %143, %144 : vector<8x128xf32>
    %146 = vector.extract_strided_slice %133 {offsets = [0, 128], sizes = [8, 128], strides = [1, 1]} : vector<8x384xf32> to vector<8x128xf32>
    %147 = vector.extract_strided_slice %137 {offsets = [0, 128], sizes = [8, 128], strides = [1, 1]} : vector<8x384xf32> to vector<8x128xf32>
    %148 = arith.addf %146, %147 : vector<8x128xf32>
    %149 = arith.negf %148 : vector<8x128xf32>
    %150 = math.exp %149 : vector<8x128xf32>
    %cst_59 = arith.constant 1.000000e+00 : f32
    %151 = vector.broadcast %cst_59 : f32 to vector<8x128xf32>
    %152 = arith.addf %151, %150 : vector<8x128xf32>
    %153 = arith.divf %151, %152 : vector<8x128xf32>
    %154 = vector.extract_strided_slice %133 {offsets = [0, 256], sizes = [8, 128], strides = [1, 1]} : vector<8x384xf32> to vector<8x128xf32>
    %155 = vector.extract_strided_slice %137 {offsets = [0, 256], sizes = [8, 128], strides = [1, 1]} : vector<8x384xf32> to vector<8x128xf32>
    %156 = arith.mulf %145, %155 : vector<8x128xf32>
    %157 = arith.addf %154, %156 : vector<8x128xf32>
    %158 = math.tanh %157 : vector<8x128xf32>
    %cst_60 = arith.constant 1.000000e+00 : f32
    %159 = vector.broadcast %cst_60 : f32 to vector<8x128xf32>
    %160 = arith.subf %159, %153 : vector<8x128xf32>
    %161 = arith.mulf %160, %158 : vector<8x128xf32>
    %162 = arith.mulf %153, %128 : vector<8x128xf32>
    %163 = arith.addf %161, %162 : vector<8x128xf32>
    %c2_61 = arith.constant 2 : index
    %c0_62 = arith.constant 0 : index
    %c0_63 = arith.constant 0 : index
    %164 = vector.load %arg21[%c2_61, %c0_62, %c0_63] : memref<8x8x128xf32, #tpu.memory_space<vmem>>, vector<1x8x128xf32>
    %165 = vector.shape_cast %164 : vector<1x8x128xf32> to vector<8x128xf32>
    %166 = vector.shape_cast %163 : vector<8x128xf32> to vector<1x8x128xf32>
    tpu.vector_store %arg21[%c2_61, %c0_62, %c0_63], %166 {strides = array<i32>} : memref<8x8x128xf32, #tpu.memory_space<vmem>>, vector<1x8x128xf32>,
    %c3_64 = arith.constant 3 : index
    %c0_65 = arith.constant 0 : index
    %c0_66 = arith.constant 0 : index
    %167 = vector.load %arg20[%c3_64, %c0_65, %c0_66] : memref<8x8x384xf32, #tpu.memory_space<vmem>>, vector<1x8x384xf32>
    %168 = vector.shape_cast %167 : vector<1x8x384xf32> to vector<8x384xf32>
    %169 = vector.extract_strided_slice %163 {offsets = [0, 0], sizes = [8, 32], strides = [1, 1]} : vector<8x128xf32> to vector<8x32xf32>
    %cst_67 = arith.constant dense<0.000000e+00> : vector<8x384xf32>
    %170 = tpu.matmul %169, %59, %cst_67 {dimension_numbers = #tpu.dot_dimension_numbers<[1], [0], [0], [1], [0, 0, 1, 1], [], []>} : vector<8x32xf32>, vector<32x384xf32>, vector<8x384xf32> -> vector<8x384xf32>
    %171 = vector.broadcast %60 : vector<1x384xf32> to vector<8x384xf32>
    %172 = arith.addf %170, %171 : vector<8x384xf32>
    %173 = vector.extract_strided_slice %168 {offsets = [0, 0], sizes = [8, 128], strides = [1, 1]} : vector<8x384xf32> to vector<8x128xf32>
    %174 = vector.extract_strided_slice %172 {offsets = [0, 0], sizes = [8, 128], strides = [1, 1]} : vector<8x384xf32> to vector<8x128xf32>
    %175 = arith.addf %173, %174 : vector<8x128xf32>
    %176 = arith.negf %175 : vector<8x128xf32>
    %177 = math.exp %176 : vector<8x128xf32>
    %cst_68 = arith.constant 1.000000e+00 : f32
    %178 = vector.broadcast %cst_68 : f32 to vector<8x128xf32>
    %179 = arith.addf %178, %177 : vector<8x128xf32>
    %180 = arith.divf %178, %179 : vector<8x128xf32>
    %181 = vector.extract_strided_slice %168 {offsets = [0, 128], sizes = [8, 128], strides = [1, 1]} : vector<8x384xf32> to vector<8x128xf32>
    %182 = vector.extract_strided_slice %172 {offsets = [0, 128], sizes = [8, 128], strides = [1, 1]} : vector<8x384xf32> to vector<8x128xf32>
    %183 = arith.addf %181, %182 : vector<8x128xf32>
    %184 = arith.negf %183 : vector<8x128xf32>
    %185 = math.exp %184 : vector<8x128xf32>
    %cst_69 = arith.constant 1.000000e+00 : f32
    %186 = vector.broadcast %cst_69 : f32 to vector<8x128xf32>
    %187 = arith.addf %186, %185 : vector<8x128xf32>
    %188 = arith.divf %186, %187 : vector<8x128xf32>
    %189 = vector.extract_strided_slice %168 {offsets = [0, 256], sizes = [8, 128], strides = [1, 1]} : vector<8x384xf32> to vector<8x128xf32>
    %190 = vector.extract_strided_slice %172 {offsets = [0, 256], sizes = [8, 128], strides = [1, 1]} : vector<8x384xf32> to vector<8x128xf32>
    %191 = arith.mulf %180, %190 : vector<8x128xf32>
    %192 = arith.addf %189, %191 : vector<8x128xf32>
    %193 = math.tanh %192 : vector<8x128xf32>
    %cst_70 = arith.constant 1.000000e+00 : f32
    %194 = vector.broadcast %cst_70 : f32 to vector<8x128xf32>
    %195 = arith.subf %194, %188 : vector<8x128xf32>
    %196 = arith.mulf %195, %193 : vector<8x128xf32>
    %197 = arith.mulf %188, %163 : vector<8x128xf32>
    %198 = arith.addf %196, %197 : vector<8x128xf32>
    %c3_71 = arith.constant 3 : index
    %c0_72 = arith.constant 0 : index
    %c0_73 = arith.constant 0 : index
    %199 = vector.load %arg21[%c3_71, %c0_72, %c0_73] : memref<8x8x128xf32, #tpu.memory_space<vmem>>, vector<1x8x128xf32>
    %200 = vector.shape_cast %199 : vector<1x8x128xf32> to vector<8x128xf32>
    %201 = vector.shape_cast %198 : vector<8x128xf32> to vector<1x8x128xf32>
    tpu.vector_store %arg21[%c3_71, %c0_72, %c0_73], %201 {strides = array<i32>} : memref<8x8x128xf32, #tpu.memory_space<vmem>>, vector<1x8x128xf32>,
    %c4_74 = arith.constant 4 : index
    %c0_75 = arith.constant 0 : index
    %c0_76 = arith.constant 0 : index
    %202 = vector.load %arg20[%c4_74, %c0_75, %c0_76] : memref<8x8x384xf32, #tpu.memory_space<vmem>>, vector<1x8x384xf32>
    %203 = vector.shape_cast %202 : vector<1x8x384xf32> to vector<8x384xf32>
    %204 = vector.extract_strided_slice %198 {offsets = [0, 0], sizes = [8, 32], strides = [1, 1]} : vector<8x128xf32> to vector<8x32xf32>
    %cst_77 = arith.constant dense<0.000000e+00> : vector<8x384xf32>
    %205 = tpu.matmul %204, %59, %cst_77 {dimension_numbers = #tpu.dot_dimension_numbers<[1], [0], [0], [1], [0, 0, 1, 1], [], []>} : vector<8x32xf32>, vector<32x384xf32>, vector<8x384xf32> -> vector<8x384xf32>
    %206 = vector.broadcast %60 : vector<1x384xf32> to vector<8x384xf32>
    %207 = arith.addf %205, %206 : vector<8x384xf32>
    %208 = vector.extract_strided_slice %203 {offsets = [0, 0], sizes = [8, 128], strides = [1, 1]} : vector<8x384xf32> to vector<8x128xf32>
    %209 = vector.extract_strided_slice %207 {offsets = [0, 0], sizes = [8, 128], strides = [1, 1]} : vector<8x384xf32> to vector<8x128xf32>
    %210 = arith.addf %208, %209 : vector<8x128xf32>
    %211 = arith.negf %210 : vector<8x128xf32>
    %212 = math.exp %211 : vector<8x128xf32>
    %cst_78 = arith.constant 1.000000e+00 : f32
    %213 = vector.broadcast %cst_78 : f32 to vector<8x128xf32>
    %214 = arith.addf %213, %212 : vector<8x128xf32>
    %215 = arith.divf %213, %214 : vector<8x128xf32>
    %216 = vector.extract_strided_slice %203 {offsets = [0, 128], sizes = [8, 128], strides = [1, 1]} : vector<8x384xf32> to vector<8x128xf32>
    %217 = vector.extract_strided_slice %207 {offsets = [0, 128], sizes = [8, 128], strides = [1, 1]} : vector<8x384xf32> to vector<8x128xf32>
    %218 = arith.addf %216, %217 : vector<8x128xf32>
    %219 = arith.negf %218 : vector<8x128xf32>
    %220 = math.exp %219 : vector<8x128xf32>
    %cst_79 = arith.constant 1.000000e+00 : f32
    %221 = vector.broadcast %cst_79 : f32 to vector<8x128xf32>
    %222 = arith.addf %221, %220 : vector<8x128xf32>
    %223 = arith.divf %221, %222 : vector<8x128xf32>
    %224 = vector.extract_strided_slice %203 {offsets = [0, 256], sizes = [8, 128], strides = [1, 1]} : vector<8x384xf32> to vector<8x128xf32>
    %225 = vector.extract_strided_slice %207 {offsets = [0, 256], sizes = [8, 128], strides = [1, 1]} : vector<8x384xf32> to vector<8x128xf32>
    %226 = arith.mulf %215, %225 : vector<8x128xf32>
    %227 = arith.addf %224, %226 : vector<8x128xf32>
    %228 = math.tanh %227 : vector<8x128xf32>
    %cst_80 = arith.constant 1.000000e+00 : f32
    %229 = vector.broadcast %cst_80 : f32 to vector<8x128xf32>
    %230 = arith.subf %229, %223 : vector<8x128xf32>
    %231 = arith.mulf %230, %228 : vector<8x128xf32>
    %232 = arith.mulf %223, %198 : vector<8x128xf32>
    %233 = arith.addf %231, %232 : vector<8x128xf32>
    %c4_81 = arith.constant 4 : index
    %c0_82 = arith.constant 0 : index
    %c0_83 = arith.constant 0 : index
    %234 = vector.load %arg21[%c4_81, %c0_82, %c0_83] : memref<8x8x128xf32, #tpu.memory_space<vmem>>, vector<1x8x128xf32>
    %235 = vector.shape_cast %234 : vector<1x8x128xf32> to vector<8x128xf32>
    %236 = vector.shape_cast %233 : vector<8x128xf32> to vector<1x8x128xf32>
    tpu.vector_store %arg21[%c4_81, %c0_82, %c0_83], %236 {strides = array<i32>} : memref<8x8x128xf32, #tpu.memory_space<vmem>>, vector<1x8x128xf32>,
    %c5_84 = arith.constant 5 : index
    %c0_85 = arith.constant 0 : index
    %c0_86 = arith.constant 0 : index
    %237 = vector.load %arg20[%c5_84, %c0_85, %c0_86] : memref<8x8x384xf32, #tpu.memory_space<vmem>>, vector<1x8x384xf32>
    %238 = vector.shape_cast %237 : vector<1x8x384xf32> to vector<8x384xf32>
    %239 = vector.extract_strided_slice %233 {offsets = [0, 0], sizes = [8, 32], strides = [1, 1]} : vector<8x128xf32> to vector<8x32xf32>
    %cst_87 = arith.constant dense<0.000000e+00> : vector<8x384xf32>
    %240 = tpu.matmul %239, %59, %cst_87 {dimension_numbers = #tpu.dot_dimension_numbers<[1], [0], [0], [1], [0, 0, 1, 1], [], []>} : vector<8x32xf32>, vector<32x384xf32>, vector<8x384xf32> -> vector<8x384xf32>
    %241 = vector.broadcast %60 : vector<1x384xf32> to vector<8x384xf32>
    %242 = arith.addf %240, %241 : vector<8x384xf32>
    %243 = vector.extract_strided_slice %238 {offsets = [0, 0], sizes = [8, 128], strides = [1, 1]} : vector<8x384xf32> to vector<8x128xf32>
    %244 = vector.extract_strided_slice %242 {offsets = [0, 0], sizes = [8, 128], strides = [1, 1]} : vector<8x384xf32> to vector<8x128xf32>
    %245 = arith.addf %243, %244 : vector<8x128xf32>
    %246 = arith.negf %245 : vector<8x128xf32>
    %247 = math.exp %246 : vector<8x128xf32>
    %cst_88 = arith.constant 1.000000e+00 : f32
    %248 = vector.broadcast %cst_88 : f32 to vector<8x128xf32>
    %249 = arith.addf %248, %247 : vector<8x128xf32>
    %250 = arith.divf %248, %249 : vector<8x128xf32>
    %251 = vector.extract_strided_slice %238 {offsets = [0, 128], sizes = [8, 128], strides = [1, 1]} : vector<8x384xf32> to vector<8x128xf32>
    %252 = vector.extract_strided_slice %242 {offsets = [0, 128], sizes = [8, 128], strides = [1, 1]} : vector<8x384xf32> to vector<8x128xf32>
    %253 = arith.addf %251, %252 : vector<8x128xf32>
    %254 = arith.negf %253 : vector<8x128xf32>
    %255 = math.exp %254 : vector<8x128xf32>
    %cst_89 = arith.constant 1.000000e+00 : f32
    %256 = vector.broadcast %cst_89 : f32 to vector<8x128xf32>
    %257 = arith.addf %256, %255 : vector<8x128xf32>
    %258 = arith.divf %256, %257 : vector<8x128xf32>
    %259 = vector.extract_strided_slice %238 {offsets = [0, 256], sizes = [8, 128], strides = [1, 1]} : vector<8x384xf32> to vector<8x128xf32>
    %260 = vector.extract_strided_slice %242 {offsets = [0, 256], sizes = [8, 128], strides = [1, 1]} : vector<8x384xf32> to vector<8x128xf32>
    %261 = arith.mulf %250, %260 : vector<8x128xf32>
    %262 = arith.addf %259, %261 : vector<8x128xf32>
    %263 = math.tanh %262 : vector<8x128xf32>
    %cst_90 = arith.constant 1.000000e+00 : f32
    %264 = vector.broadcast %cst_90 : f32 to vector<8x128xf32>
    %265 = arith.subf %264, %258 : vector<8x128xf32>
    %266 = arith.mulf %265, %263 : vector<8x128xf32>
    %267 = arith.mulf %258, %233 : vector<8x128xf32>
    %268 = arith.addf %266, %267 : vector<8x128xf32>
    %c5_91 = arith.constant 5 : index
    %c0_92 = arith.constant 0 : index
    %c0_93 = arith.constant 0 : index
    %269 = vector.load %arg21[%c5_91, %c0_92, %c0_93] : memref<8x8x128xf32, #tpu.memory_space<vmem>>, vector<1x8x128xf32>
    %270 = vector.shape_cast %269 : vector<1x8x128xf32> to vector<8x128xf32>
    %271 = vector.shape_cast %268 : vector<8x128xf32> to vector<1x8x128xf32>
    tpu.vector_store %arg21[%c5_91, %c0_92, %c0_93], %271 {strides = array<i32>} : memref<8x8x128xf32, #tpu.memory_space<vmem>>, vector<1x8x128xf32>,
    %c6_94 = arith.constant 6 : index
    %c0_95 = arith.constant 0 : index
    %c0_96 = arith.constant 0 : index
    %272 = vector.load %arg20[%c6_94, %c0_95, %c0_96] : memref<8x8x384xf32, #tpu.memory_space<vmem>>, vector<1x8x384xf32>
    %273 = vector.shape_cast %272 : vector<1x8x384xf32> to vector<8x384xf32>
    %274 = vector.extract_strided_slice %268 {offsets = [0, 0], sizes = [8, 32], strides = [1, 1]} : vector<8x128xf32> to vector<8x32xf32>
    %cst_97 = arith.constant dense<0.000000e+00> : vector<8x384xf32>
    %275 = tpu.matmul %274, %59, %cst_97 {dimension_numbers = #tpu.dot_dimension_numbers<[1], [0], [0], [1], [0, 0, 1, 1], [], []>} : vector<8x32xf32>, vector<32x384xf32>, vector<8x384xf32> -> vector<8x384xf32>
    %276 = vector.broadcast %60 : vector<1x384xf32> to vector<8x384xf32>
    %277 = arith.addf %275, %276 : vector<8x384xf32>
    %278 = vector.extract_strided_slice %273 {offsets = [0, 0], sizes = [8, 128], strides = [1, 1]} : vector<8x384xf32> to vector<8x128xf32>
    %279 = vector.extract_strided_slice %277 {offsets = [0, 0], sizes = [8, 128], strides = [1, 1]} : vector<8x384xf32> to vector<8x128xf32>
    %280 = arith.addf %278, %279 : vector<8x128xf32>
    %281 = arith.negf %280 : vector<8x128xf32>
    %282 = math.exp %281 : vector<8x128xf32>
    %cst_98 = arith.constant 1.000000e+00 : f32
    %283 = vector.broadcast %cst_98 : f32 to vector<8x128xf32>
    %284 = arith.addf %283, %282 : vector<8x128xf32>
    %285 = arith.divf %283, %284 : vector<8x128xf32>
    %286 = vector.extract_strided_slice %273 {offsets = [0, 128], sizes = [8, 128], strides = [1, 1]} : vector<8x384xf32> to vector<8x128xf32>
    %287 = vector.extract_strided_slice %277 {offsets = [0, 128], sizes = [8, 128], strides = [1, 1]} : vector<8x384xf32> to vector<8x128xf32>
    %288 = arith.addf %286, %287 : vector<8x128xf32>
    %289 = arith.negf %288 : vector<8x128xf32>
    %290 = math.exp %289 : vector<8x128xf32>
    %cst_99 = arith.constant 1.000000e+00 : f32
    %291 = vector.broadcast %cst_99 : f32 to vector<8x128xf32>
    %292 = arith.addf %291, %290 : vector<8x128xf32>
    %293 = arith.divf %291, %292 : vector<8x128xf32>
    %294 = vector.extract_strided_slice %273 {offsets = [0, 256], sizes = [8, 128], strides = [1, 1]} : vector<8x384xf32> to vector<8x128xf32>
    %295 = vector.extract_strided_slice %277 {offsets = [0, 256], sizes = [8, 128], strides = [1, 1]} : vector<8x384xf32> to vector<8x128xf32>
    %296 = arith.mulf %285, %295 : vector<8x128xf32>
    %297 = arith.addf %294, %296 : vector<8x128xf32>
    %298 = math.tanh %297 : vector<8x128xf32>
    %cst_100 = arith.constant 1.000000e+00 : f32
    %299 = vector.broadcast %cst_100 : f32 to vector<8x128xf32>
    %300 = arith.subf %299, %293 : vector<8x128xf32>
    %301 = arith.mulf %300, %298 : vector<8x128xf32>
    %302 = arith.mulf %293, %268 : vector<8x128xf32>
    %303 = arith.addf %301, %302 : vector<8x128xf32>
    %c6_101 = arith.constant 6 : index
    %c0_102 = arith.constant 0 : index
    %c0_103 = arith.constant 0 : index
    %304 = vector.load %arg21[%c6_101, %c0_102, %c0_103] : memref<8x8x128xf32, #tpu.memory_space<vmem>>, vector<1x8x128xf32>
    %305 = vector.shape_cast %304 : vector<1x8x128xf32> to vector<8x128xf32>
    %306 = vector.shape_cast %303 : vector<8x128xf32> to vector<1x8x128xf32>
    tpu.vector_store %arg21[%c6_101, %c0_102, %c0_103], %306 {strides = array<i32>} : memref<8x8x128xf32, #tpu.memory_space<vmem>>, vector<1x8x128xf32>,
    %c7_104 = arith.constant 7 : index
    %c0_105 = arith.constant 0 : index
    %c0_106 = arith.constant 0 : index
    %307 = vector.load %arg20[%c7_104, %c0_105, %c0_106] : memref<8x8x384xf32, #tpu.memory_space<vmem>>, vector<1x8x384xf32>
    %308 = vector.shape_cast %307 : vector<1x8x384xf32> to vector<8x384xf32>
    %309 = vector.extract_strided_slice %303 {offsets = [0, 0], sizes = [8, 32], strides = [1, 1]} : vector<8x128xf32> to vector<8x32xf32>
    %cst_107 = arith.constant dense<0.000000e+00> : vector<8x384xf32>
    %310 = tpu.matmul %309, %59, %cst_107 {dimension_numbers = #tpu.dot_dimension_numbers<[1], [0], [0], [1], [0, 0, 1, 1], [], []>} : vector<8x32xf32>, vector<32x384xf32>, vector<8x384xf32> -> vector<8x384xf32>
    %311 = vector.broadcast %60 : vector<1x384xf32> to vector<8x384xf32>
    %312 = arith.addf %310, %311 : vector<8x384xf32>
    %313 = vector.extract_strided_slice %308 {offsets = [0, 0], sizes = [8, 128], strides = [1, 1]} : vector<8x384xf32> to vector<8x128xf32>
    %314 = vector.extract_strided_slice %312 {offsets = [0, 0], sizes = [8, 128], strides = [1, 1]} : vector<8x384xf32> to vector<8x128xf32>
    %315 = arith.addf %313, %314 : vector<8x128xf32>
    %316 = arith.negf %315 : vector<8x128xf32>
    %317 = math.exp %316 : vector<8x128xf32>
    %cst_108 = arith.constant 1.000000e+00 : f32
    %318 = vector.broadcast %cst_108 : f32 to vector<8x128xf32>
    %319 = arith.addf %318, %317 : vector<8x128xf32>
    %320 = arith.divf %318, %319 : vector<8x128xf32>
    %321 = vector.extract_strided_slice %308 {offsets = [0, 128], sizes = [8, 128], strides = [1, 1]} : vector<8x384xf32> to vector<8x128xf32>
    %322 = vector.extract_strided_slice %312 {offsets = [0, 128], sizes = [8, 128], strides = [1, 1]} : vector<8x384xf32> to vector<8x128xf32>
    %323 = arith.addf %321, %322 : vector<8x128xf32>
    %324 = arith.negf %323 : vector<8x128xf32>
    %325 = math.exp %324 : vector<8x128xf32>
    %cst_109 = arith.constant 1.000000e+00 : f32
    %326 = vector.broadcast %cst_109 : f32 to vector<8x128xf32>
    %327 = arith.addf %326, %325 : vector<8x128xf32>
    %328 = arith.divf %326, %327 : vector<8x128xf32>
    %329 = vector.extract_strided_slice %308 {offsets = [0, 256], sizes = [8, 128], strides = [1, 1]} : vector<8x384xf32> to vector<8x128xf32>
    %330 = vector.extract_strided_slice %312 {offsets = [0, 256], sizes = [8, 128], strides = [1, 1]} : vector<8x384xf32> to vector<8x128xf32>
    %331 = arith.mulf %320, %330 : vector<8x128xf32>
    %332 = arith.addf %329, %331 : vector<8x128xf32>
    %333 = math.tanh %332 : vector<8x128xf32>
    %cst_110 = arith.constant 1.000000e+00 : f32
    %334 = vector.broadcast %cst_110 : f32 to vector<8x128xf32>
    %335 = arith.subf %334, %328 : vector<8x128xf32>
    %336 = arith.mulf %335, %333 : vector<8x128xf32>
    %337 = arith.mulf %328, %303 : vector<8x128xf32>
    %338 = arith.addf %336, %337 : vector<8x128xf32>
    %c7_111 = arith.constant 7 : index
    %c0_112 = arith.constant 0 : index
    %c0_113 = arith.constant 0 : index
    %339 = vector.load %arg21[%c7_111, %c0_112, %c0_113] : memref<8x8x128xf32, #tpu.memory_space<vmem>>, vector<1x8x128xf32>
    %340 = vector.shape_cast %339 : vector<1x8x128xf32> to vector<8x128xf32>
    %341 = vector.shape_cast %338 : vector<8x128xf32> to vector<1x8x128xf32>
    tpu.vector_store %arg21[%c7_111, %c0_112, %c0_113], %341 {strides = array<i32>} : memref<8x8x128xf32, #tpu.memory_space<vmem>>, vector<1x8x128xf32>,
    %cst_114 = arith.constant 0.000000e+00 : f32
    %342 = vector.broadcast %cst_114 : f32 to vector<8x384xf32>
    %c0_115 = arith.constant 0 : index
    %c0_116 = arith.constant 0 : index
    %c0_117 = arith.constant 0 : index
    %343 = vector.load %arg21[%c0_115, %c0_116, %c0_117] : memref<8x8x128xf32, #tpu.memory_space<vmem>>, vector<1x8x128xf32>
    %344 = vector.shape_cast %343 : vector<1x8x128xf32> to vector<8x128xf32>
    %345 = vector.extract_strided_slice %344 {offsets = [0, 0], sizes = [8, 32], strides = [1, 1]} : vector<8x128xf32> to vector<8x32xf32>
    %346 = arith.truncf %345 : vector<8x32xf32> to vector<8x32xbf16>
    %c0_118 = arith.constant 0 : index
    %c0_119 = arith.constant 0 : index
    %347 = vector.load %arg5[%c0_118, %c0_119] : memref<256x384xbf16, #tpu.memory_space<vmem>>, vector<32x384xbf16>
    %cst_120 = arith.constant dense<0.000000e+00> : vector<8x384xf32>
    %348 = tpu.matmul %346, %347, %cst_120 {dimension_numbers = #tpu.dot_dimension_numbers<[1], [0], [0], [1], [0, 0, 1, 1], [], []>} : vector<8x32xbf16>, vector<32x384xbf16>, vector<8x384xf32> -> vector<8x384xf32>
    %349 = arith.addf %342, %348 : vector<8x384xf32>
    %c1_121 = arith.constant 1 : index
    %c0_122 = arith.constant 0 : index
    %c0_123 = arith.constant 0 : index
    %350 = vector.load %arg21[%c1_121, %c0_122, %c0_123] : memref<8x8x128xf32, #tpu.memory_space<vmem>>, vector<1x8x128xf32>
    %351 = vector.shape_cast %350 : vector<1x8x128xf32> to vector<8x128xf32>
    %352 = vector.extract_strided_slice %351 {offsets = [0, 0], sizes = [8, 32], strides = [1, 1]} : vector<8x128xf32> to vector<8x32xf32>
    %353 = arith.truncf %352 : vector<8x32xf32> to vector<8x32xbf16>
    %c32 = arith.constant 32 : index
    %c0_124 = arith.constant 0 : index
    %354 = vector.load %arg5[%c32, %c0_124] : memref<256x384xbf16, #tpu.memory_space<vmem>>, vector<32x384xbf16>
    %cst_125 = arith.constant dense<0.000000e+00> : vector<8x384xf32>
    %355 = tpu.matmul %353, %354, %cst_125 {dimension_numbers = #tpu.dot_dimension_numbers<[1], [0], [0], [1], [0, 0, 1, 1], [], []>} : vector<8x32xbf16>, vector<32x384xbf16>, vector<8x384xf32> -> vector<8x384xf32>
    %356 = arith.addf %349, %355 : vector<8x384xf32>
    %c2_126 = arith.constant 2 : index
    %c0_127 = arith.constant 0 : index
    %c0_128 = arith.constant 0 : index
    %357 = vector.load %arg21[%c2_126, %c0_127, %c0_128] : memref<8x8x128xf32, #tpu.memory_space<vmem>>, vector<1x8x128xf32>
    %358 = vector.shape_cast %357 : vector<1x8x128xf32> to vector<8x128xf32>
    %359 = vector.extract_strided_slice %358 {offsets = [0, 0], sizes = [8, 32], strides = [1, 1]} : vector<8x128xf32> to vector<8x32xf32>
    %360 = arith.truncf %359 : vector<8x32xf32> to vector<8x32xbf16>
    %c64 = arith.constant 64 : index
    %c0_129 = arith.constant 0 : index
    %361 = vector.load %arg5[%c64, %c0_129] : memref<256x384xbf16, #tpu.memory_space<vmem>>, vector<32x384xbf16>
    %cst_130 = arith.constant dense<0.000000e+00> : vector<8x384xf32>
    %362 = tpu.matmul %360, %361, %cst_130 {dimension_numbers = #tpu.dot_dimension_numbers<[1], [0], [0], [1], [0, 0, 1, 1], [], []>} : vector<8x32xbf16>, vector<32x384xbf16>, vector<8x384xf32> -> vector<8x384xf32>
    %363 = arith.addf %356, %362 : vector<8x384xf32>
    %c3_131 = arith.constant 3 : index
    %c0_132 = arith.constant 0 : index
    %c0_133 = arith.constant 0 : index
    %364 = vector.load %arg21[%c3_131, %c0_132, %c0_133] : memref<8x8x128xf32, #tpu.memory_space<vmem>>, vector<1x8x128xf32>
    %365 = vector.shape_cast %364 : vector<1x8x128xf32> to vector<8x128xf32>
    %366 = vector.extract_strided_slice %365 {offsets = [0, 0], sizes = [8, 32], strides = [1, 1]} : vector<8x128xf32> to vector<8x32xf32>
    %367 = arith.truncf %366 : vector<8x32xf32> to vector<8x32xbf16>
    %c96 = arith.constant 96 : index
    %c0_134 = arith.constant 0 : index
    %368 = vector.load %arg5[%c96, %c0_134] : memref<256x384xbf16, #tpu.memory_space<vmem>>, vector<32x384xbf16>
    %cst_135 = arith.constant dense<0.000000e+00> : vector<8x384xf32>
    %369 = tpu.matmul %367, %368, %cst_135 {dimension_numbers = #tpu.dot_dimension_numbers<[1], [0], [0], [1], [0, 0, 1, 1], [], []>} : vector<8x32xbf16>, vector<32x384xbf16>, vector<8x384xf32> -> vector<8x384xf32>
    %370 = arith.addf %363, %369 : vector<8x384xf32>
    %c4_136 = arith.constant 4 : index
    %c0_137 = arith.constant 0 : index
    %c0_138 = arith.constant 0 : index
    %371 = vector.load %arg21[%c4_136, %c0_137, %c0_138] : memref<8x8x128xf32, #tpu.memory_space<vmem>>, vector<1x8x128xf32>
    %372 = vector.shape_cast %371 : vector<1x8x128xf32> to vector<8x128xf32>
    %373 = vector.extract_strided_slice %372 {offsets = [0, 0], sizes = [8, 32], strides = [1, 1]} : vector<8x128xf32> to vector<8x32xf32>
    %374 = arith.truncf %373 : vector<8x32xf32> to vector<8x32xbf16>
    %c128 = arith.constant 128 : index
    %c0_139 = arith.constant 0 : index
    %375 = vector.load %arg5[%c128, %c0_139] : memref<256x384xbf16, #tpu.memory_space<vmem>>, vector<32x384xbf16>
    %cst_140 = arith.constant dense<0.000000e+00> : vector<8x384xf32>
    %376 = tpu.matmul %374, %375, %cst_140 {dimension_numbers = #tpu.dot_dimension_numbers<[1], [0], [0], [1], [0, 0, 1, 1], [], []>} : vector<8x32xbf16>, vector<32x384xbf16>, vector<8x384xf32> -> vector<8x384xf32>
    %377 = arith.addf %370, %376 : vector<8x384xf32>
    %c5_141 = arith.constant 5 : index
    %c0_142 = arith.constant 0 : index
    %c0_143 = arith.constant 0 : index
    %378 = vector.load %arg21[%c5_141, %c0_142, %c0_143] : memref<8x8x128xf32, #tpu.memory_space<vmem>>, vector<1x8x128xf32>
    %379 = vector.shape_cast %378 : vector<1x8x128xf32> to vector<8x128xf32>
    %380 = vector.extract_strided_slice %379 {offsets = [0, 0], sizes = [8, 32], strides = [1, 1]} : vector<8x128xf32> to vector<8x32xf32>
    %381 = arith.truncf %380 : vector<8x32xf32> to vector<8x32xbf16>
    %c160 = arith.constant 160 : index
    %c0_144 = arith.constant 0 : index
    %382 = vector.load %arg5[%c160, %c0_144] : memref<256x384xbf16, #tpu.memory_space<vmem>>, vector<32x384xbf16>
    %cst_145 = arith.constant dense<0.000000e+00> : vector<8x384xf32>
    %383 = tpu.matmul %381, %382, %cst_145 {dimension_numbers = #tpu.dot_dimension_numbers<[1], [0], [0], [1], [0, 0, 1, 1], [], []>} : vector<8x32xbf16>, vector<32x384xbf16>, vector<8x384xf32> -> vector<8x384xf32>
    %384 = arith.addf %377, %383 : vector<8x384xf32>
    %c6_146 = arith.constant 6 : index
    %c0_147 = arith.constant 0 : index
    %c0_148 = arith.constant 0 : index
    %385 = vector.load %arg21[%c6_146, %c0_147, %c0_148] : memref<8x8x128xf32, #tpu.memory_space<vmem>>, vector<1x8x128xf32>
    %386 = vector.shape_cast %385 : vector<1x8x128xf32> to vector<8x128xf32>
    %387 = vector.extract_strided_slice %386 {offsets = [0, 0], sizes = [8, 32], strides = [1, 1]} : vector<8x128xf32> to vector<8x32xf32>
    %388 = arith.truncf %387 : vector<8x32xf32> to vector<8x32xbf16>
    %c192 = arith.constant 192 : index
    %c0_149 = arith.constant 0 : index
    %389 = vector.load %arg5[%c192, %c0_149] : memref<256x384xbf16, #tpu.memory_space<vmem>>, vector<32x384xbf16>
    %cst_150 = arith.constant dense<0.000000e+00> : vector<8x384xf32>
    %390 = tpu.matmul %388, %389, %cst_150 {dimension_numbers = #tpu.dot_dimension_numbers<[1], [0], [0], [1], [0, 0, 1, 1], [], []>} : vector<8x32xbf16>, vector<32x384xbf16>, vector<8x384xf32> -> vector<8x384xf32>
    %391 = arith.addf %384, %390 : vector<8x384xf32>
    %c7_151 = arith.constant 7 : index
    %c0_152 = arith.constant 0 : index
    %c0_153 = arith.constant 0 : index
    %392 = vector.load %arg21[%c7_151, %c0_152, %c0_153] : memref<8x8x128xf32, #tpu.memory_space<vmem>>, vector<1x8x128xf32>
    %393 = vector.shape_cast %392 : vector<1x8x128xf32> to vector<8x128xf32>
    %394 = vector.extract_strided_slice %393 {offsets = [0, 0], sizes = [8, 32], strides = [1, 1]} : vector<8x128xf32> to vector<8x32xf32>
    %395 = arith.truncf %394 : vector<8x32xf32> to vector<8x32xbf16>
    %c224 = arith.constant 224 : index
    %c0_154 = arith.constant 0 : index
    %396 = vector.load %arg5[%c224, %c0_154] : memref<256x384xbf16, #tpu.memory_space<vmem>>, vector<32x384xbf16>
    %cst_155 = arith.constant dense<0.000000e+00> : vector<8x384xf32>
    %397 = tpu.matmul %395, %396, %cst_155 {dimension_numbers = #tpu.dot_dimension_numbers<[1], [0], [0], [1], [0, 0, 1, 1], [], []>} : vector<8x32xbf16>, vector<32x384xbf16>, vector<8x384xf32> -> vector<8x384xf32>
    %398 = arith.addf %391, %397 : vector<8x384xf32>
    %c0_156 = arith.constant 0 : index
    %c0_157 = arith.constant 0 : index
    %399 = vector.load %arg9[%c0_156, %c0_157] : memref<8x8xf32, #tpu.memory_space<vmem>>, vector<8x8xf32>
    %cst_158 = arith.constant 0.000000e+00 : f32
    %400 = vector.broadcast %cst_158 : f32 to vector<8x128xf32>
    %401 = vector.extract_strided_slice %398 {offsets = [0, 0], sizes = [8, 128], strides = [1, 1]} : vector<8x384xf32> to vector<8x128xf32>
    %c0_159 = arith.constant 0 : index
    %c0_160 = arith.constant 0 : index
    %402 = vector.load %arg6[%c0_159, %c0_160] : memref<3x128xf32, #tpu.memory_space<vmem>>, vector<1x128xf32>
    %403 = vector.broadcast %402 : vector<1x128xf32> to vector<8x128xf32>
    %404 = arith.mulf %401, %403 : vector<8x128xf32>
    %cst_161 = arith.constant dense<0.000000e+00> : vector<8xf32>
    %405 = vector.multi_reduction <add>, %404, %cst_161 [1] : vector<8x128xf32> to vector<8xf32>
    %406 = vector.shape_cast %405 : vector<8xf32> to vector<8x1xf32>
    %c0_162 = arith.constant 0 : index
    %c0_163 = arith.constant 0 : index
    %407 = vector.load %arg7[%c0_162, %c0_163] : memref<3x128xf32, #tpu.memory_space<vmem>>, vector<1x128xf32>
    %408 = vector.broadcast %407 : vector<1x128xf32> to vector<8x128xf32>
    %409 = arith.mulf %401, %408 : vector<8x128xf32>
    %cst_164 = arith.constant dense<0.000000e+00> : vector<8xf32>
    %410 = vector.multi_reduction <add>, %409, %cst_164 [1] : vector<8x128xf32> to vector<8xf32>
    %411 = vector.shape_cast %410 : vector<8xf32> to vector<8x1xf32>
    %412 = tpu.transpose %406, [1, 0] : vector<8x1xf32> -> vector<1x8xf32>
    %413 = vector.broadcast %411 : vector<8x1xf32> to vector<8x8xf32>
    %414 = vector.broadcast %412 : vector<1x8xf32> to vector<8x8xf32>
    %415 = arith.addf %413, %414 : vector<8x8xf32>
    %c0_165 = arith.constant 0 : index
    %c0_166 = arith.constant 0 : index
    %c0_167 = arith.constant 0 : index
    %416 = vector.load %arg8[%c0_165, %c0_166, %c0_167] : memref<3x8x8xf32, #tpu.memory_space<vmem>>, vector<1x8x8xf32>
    %417 = vector.shape_cast %416 : vector<1x8x8xf32> to vector<8x8xf32>
    %418 = arith.addf %415, %417 : vector<8x8xf32>
    %cst_168 = arith.constant 2.000000e-01 : f32
    %419 = vector.broadcast %cst_168 : f32 to vector<8x8xf32>
    %420 = arith.mulf %419, %418 : vector<8x8xf32>
    %421 = arith.maximumf %418, %420 : vector<8x8xf32>
    %cst_169 = arith.constant dense<0xFF800000> : vector<8xf32>
    %422 = vector.multi_reduction <maximumf>, %421, %cst_169 [1] : vector<8x8xf32> to vector<8xf32>
    %423 = vector.shape_cast %422 : vector<8xf32> to vector<8x1xf32>
    %424 = vector.broadcast %423 : vector<8x1xf32> to vector<8x8xf32>
    %425 = arith.subf %421, %424 : vector<8x8xf32>
    %426 = math.exp %425 : vector<8x8xf32>
    %427 = arith.mulf %426, %399 : vector<8x8xf32>
    %cst_170 = arith.constant dense<0.000000e+00> : vector<8xf32>
    %428 = vector.multi_reduction <add>, %427, %cst_170 [1] : vector<8x8xf32> to vector<8xf32>
    %429 = vector.shape_cast %428 : vector<8xf32> to vector<8x1xf32>
    %cst_171 = arith.constant 1.000000e-16 : f32
    %430 = vector.broadcast %cst_171 : f32 to vector<8x1xf32>
    %431 = arith.maximumf %429, %430 : vector<8x1xf32>
    %432 = vector.broadcast %431 : vector<8x1xf32> to vector<8x8xf32>
    %433 = arith.divf %427, %432 : vector<8x8xf32>
    %cst_172 = arith.constant dense<0.000000e+00> : vector<8x128xf32>
    %434 = tpu.matmul %433, %401, %cst_172 {dimension_numbers = #tpu.dot_dimension_numbers<[1], [0], [0], [1], [0, 0, 1, 1], [], []>} : vector<8x8xf32>, vector<8x128xf32>, vector<8x128xf32> -> vector<8x128xf32>
    %435 = arith.addf %400, %434 : vector<8x128xf32>
    %436 = vector.extract_strided_slice %398 {offsets = [0, 128], sizes = [8, 128], strides = [1, 1]} : vector<8x384xf32> to vector<8x128xf32>
    %c1_173 = arith.constant 1 : index
    %c0_174 = arith.constant 0 : index
    %437 = vector.load %arg6[%c1_173, %c0_174] : memref<3x128xf32, #tpu.memory_space<vmem>>, vector<1x128xf32>
    %438 = vector.broadcast %437 : vector<1x128xf32> to vector<8x128xf32>
    %439 = arith.mulf %436, %438 : vector<8x128xf32>
    %cst_175 = arith.constant dense<0.000000e+00> : vector<8xf32>
    %440 = vector.multi_reduction <add>, %439, %cst_175 [1] : vector<8x128xf32> to vector<8xf32>
    %441 = vector.shape_cast %440 : vector<8xf32> to vector<8x1xf32>
    %c1_176 = arith.constant 1 : index
    %c0_177 = arith.constant 0 : index
    %442 = vector.load %arg7[%c1_176, %c0_177] : memref<3x128xf32, #tpu.memory_space<vmem>>, vector<1x128xf32>
    %443 = vector.broadcast %442 : vector<1x128xf32> to vector<8x128xf32>
    %444 = arith.mulf %436, %443 : vector<8x128xf32>
    %cst_178 = arith.constant dense<0.000000e+00> : vector<8xf32>
    %445 = vector.multi_reduction <add>, %444, %cst_178 [1] : vector<8x128xf32> to vector<8xf32>
    %446 = vector.shape_cast %445 : vector<8xf32> to vector<8x1xf32>
    %447 = tpu.transpose %441, [1, 0] : vector<8x1xf32> -> vector<1x8xf32>
    %448 = vector.broadcast %446 : vector<8x1xf32> to vector<8x8xf32>
    %449 = vector.broadcast %447 : vector<1x8xf32> to vector<8x8xf32>
    %450 = arith.addf %448, %449 : vector<8x8xf32>
    %c1_179 = arith.constant 1 : index
    %c0_180 = arith.constant 0 : index
    %c0_181 = arith.constant 0 : index
    %451 = vector.load %arg8[%c1_179, %c0_180, %c0_181] : memref<3x8x8xf32, #tpu.memory_space<vmem>>, vector<1x8x8xf32>
    %452 = vector.shape_cast %451 : vector<1x8x8xf32> to vector<8x8xf32>
    %453 = arith.addf %450, %452 : vector<8x8xf32>
    %cst_182 = arith.constant 2.000000e-01 : f32
    %454 = vector.broadcast %cst_182 : f32 to vector<8x8xf32>
    %455 = arith.mulf %454, %453 : vector<8x8xf32>
    %456 = arith.maximumf %453, %455 : vector<8x8xf32>
    %cst_183 = arith.constant dense<0xFF800000> : vector<8xf32>
    %457 = vector.multi_reduction <maximumf>, %456, %cst_183 [1] : vector<8x8xf32> to vector<8xf32>
    %458 = vector.shape_cast %457 : vector<8xf32> to vector<8x1xf32>
    %459 = vector.broadcast %458 : vector<8x1xf32> to vector<8x8xf32>
    %460 = arith.subf %456, %459 : vector<8x8xf32>
    %461 = math.exp %460 : vector<8x8xf32>
    %462 = arith.mulf %461, %399 : vector<8x8xf32>
    %cst_184 = arith.constant dense<0.000000e+00> : vector<8xf32>
    %463 = vector.multi_reduction <add>, %462, %cst_184 [1] : vector<8x8xf32> to vector<8xf32>
    %464 = vector.shape_cast %463 : vector<8xf32> to vector<8x1xf32>
    %cst_185 = arith.constant 1.000000e-16 : f32
    %465 = vector.broadcast %cst_185 : f32 to vector<8x1xf32>
    %466 = arith.maximumf %464, %465 : vector<8x1xf32>
    %467 = vector.broadcast %466 : vector<8x1xf32> to vector<8x8xf32>
    %468 = arith.divf %462, %467 : vector<8x8xf32>
    %cst_186 = arith.constant dense<0.000000e+00> : vector<8x128xf32>
    %469 = tpu.matmul %468, %436, %cst_186 {dimension_numbers = #tpu.dot_dimension_numbers<[1], [0], [0], [1], [0, 0, 1, 1], [], []>} : vector<8x8xf32>, vector<8x128xf32>, vector<8x128xf32> -> vector<8x128xf32>
    %470 = arith.addf %435, %469 : vector<8x128xf32>
    %471 = vector.extract_strided_slice %398 {offsets = [0, 256], sizes = [8, 128], strides = [1, 1]} : vector<8x384xf32> to vector<8x128xf32>
    %c2_187 = arith.constant 2 : index
    %c0_188 = arith.constant 0 : index
    %472 = vector.load %arg6[%c2_187, %c0_188] : memref<3x128xf32, #tpu.memory_space<vmem>>, vector<1x128xf32>
    %473 = vector.broadcast %472 : vector<1x128xf32> to vector<8x128xf32>
    %474 = arith.mulf %471, %473 : vector<8x128xf32>
    %cst_189 = arith.constant dense<0.000000e+00> : vector<8xf32>
    %475 = vector.multi_reduction <add>, %474, %cst_189 [1] : vector<8x128xf32> to vector<8xf32>
    %476 = vector.shape_cast %475 : vector<8xf32> to vector<8x1xf32>
    %c2_190 = arith.constant 2 : index
    %c0_191 = arith.constant 0 : index
    %477 = vector.load %arg7[%c2_190, %c0_191] : memref<3x128xf32, #tpu.memory_space<vmem>>, vector<1x128xf32>
    %478 = vector.broadcast %477 : vector<1x128xf32> to vector<8x128xf32>
    %479 = arith.mulf %471, %478 : vector<8x128xf32>
    %cst_192 = arith.constant dense<0.000000e+00> : vector<8xf32>
    %480 = vector.multi_reduction <add>, %479, %cst_192 [1] : vector<8x128xf32> to vector<8xf32>
    %481 = vector.shape_cast %480 : vector<8xf32> to vector<8x1xf32>
    %482 = tpu.transpose %476, [1, 0] : vector<8x1xf32> -> vector<1x8xf32>
    %483 = vector.broadcast %481 : vector<8x1xf32> to vector<8x8xf32>
    %484 = vector.broadcast %482 : vector<1x8xf32> to vector<8x8xf32>
    %485 = arith.addf %483, %484 : vector<8x8xf32>
    %c2_193 = arith.constant 2 : index
    %c0_194 = arith.constant 0 : index
    %c0_195 = arith.constant 0 : index
    %486 = vector.load %arg8[%c2_193, %c0_194, %c0_195] : memref<3x8x8xf32, #tpu.memory_space<vmem>>, vector<1x8x8xf32>
    %487 = vector.shape_cast %486 : vector<1x8x8xf32> to vector<8x8xf32>
    %488 = arith.addf %485, %487 : vector<8x8xf32>
    %cst_196 = arith.constant 2.000000e-01 : f32
    %489 = vector.broadcast %cst_196 : f32 to vector<8x8xf32>
    %490 = arith.mulf %489, %488 : vector<8x8xf32>
    %491 = arith.maximumf %488, %490 : vector<8x8xf32>
    %cst_197 = arith.constant dense<0xFF800000> : vector<8xf32>
    %492 = vector.multi_reduction <maximumf>, %491, %cst_197 [1] : vector<8x8xf32> to vector<8xf32>
    %493 = vector.shape_cast %492 : vector<8xf32> to vector<8x1xf32>
    %494 = vector.broadcast %493 : vector<8x1xf32> to vector<8x8xf32>
    %495 = arith.subf %491, %494 : vector<8x8xf32>
    %496 = math.exp %495 : vector<8x8xf32>
    %497 = arith.mulf %496, %399 : vector<8x8xf32>
    %cst_198 = arith.constant dense<0.000000e+00> : vector<8xf32>
    %498 = vector.multi_reduction <add>, %497, %cst_198 [1] : vector<8x8xf32> to vector<8xf32>
    %499 = vector.shape_cast %498 : vector<8xf32> to vector<8x1xf32>
    %cst_199 = arith.constant 1.000000e-16 : f32
    %500 = vector.broadcast %cst_199 : f32 to vector<8x1xf32>
    %501 = arith.maximumf %499, %500 : vector<8x1xf32>
    %502 = vector.broadcast %501 : vector<8x1xf32> to vector<8x8xf32>
    %503 = arith.divf %497, %502 : vector<8x8xf32>
    %cst_200 = arith.constant dense<0.000000e+00> : vector<8x128xf32>
    %504 = tpu.matmul %503, %471, %cst_200 {dimension_numbers = #tpu.dot_dimension_numbers<[1], [0], [0], [1], [0, 0, 1, 1], [], []>} : vector<8x8xf32>, vector<8x128xf32>, vector<8x128xf32> -> vector<8x128xf32>
    %505 = arith.addf %470, %504 : vector<8x128xf32>
    %cst_201 = arith.constant 0.333333343 : f32
    %506 = vector.broadcast %cst_201 : f32 to vector<8x128xf32>
    %507 = arith.mulf %505, %506 : vector<8x128xf32>
    %c0_202 = arith.constant 0 : index
    %c0_203 = arith.constant 0 : index
    %508 = vector.load %arg10[%c0_202, %c0_203] : memref<1x128xf32, #tpu.memory_space<vmem>>, vector<1x128xf32>
    %509 = vector.broadcast %508 : vector<1x128xf32> to vector<8x128xf32>
    %510 = arith.addf %507, %509 : vector<8x128xf32>
    %c0_204 = arith.constant 0 : index
    %c0_205 = arith.constant 0 : index
    %511 = vector.load %arg11[%c0_204, %c0_205] : memref<128x8xf32, #tpu.memory_space<vmem>>, vector<128x8xf32>
    %cst_206 = arith.constant dense<0.000000e+00> : vector<8x8xf32>
    %512 = tpu.matmul %510, %511, %cst_206 {dimension_numbers = #tpu.dot_dimension_numbers<[1], [0], [0], [1], [0, 0, 1, 1], [], []>} : vector<8x128xf32>, vector<128x8xf32>, vector<8x8xf32> -> vector<8x8xf32>
    %c0_207 = arith.constant 0 : index
    %c0_208 = arith.constant 0 : index
    %513 = vector.load %arg12[%c0_207, %c0_208] : memref<1x1xf32, #tpu.memory_space<vmem>>, vector<1x1xf32>
    %514 = vector.broadcast %513 : vector<1x1xf32> to vector<8x8xf32>
    %515 = arith.addf %512, %514 : vector<8x8xf32>
    %cst_209 = arith.constant 0.000000e+00 : f32
    %516 = vector.broadcast %cst_209 : f32 to vector<8x8xf32>
    %517 = arith.maximumf %515, %516 : vector<8x8xf32>
    %c0_210 = arith.constant 0 : index
    %c0_211 = arith.constant 0 : index
    %518 = vector.load %arg13[%c0_210, %c0_211] : memref<8x128xf32, #tpu.memory_space<vmem>>, vector<8x128xf32>
    %cst_212 = arith.constant dense<0.000000e+00> : vector<8x128xf32>
    %519 = tpu.matmul %517, %518, %cst_212 {dimension_numbers = #tpu.dot_dimension_numbers<[1], [0], [0], [1], [0, 0, 1, 1], [], []>} : vector<8x8xf32>, vector<8x128xf32>, vector<8x128xf32> -> vector<8x128xf32>
    %c0_213 = arith.constant 0 : index
    %c0_214 = arith.constant 0 : index
    %520 = vector.load %arg14[%c0_213, %c0_214] : memref<1x128xf32, #tpu.memory_space<vmem>>, vector<1x128xf32>
    %521 = vector.broadcast %520 : vector<1x128xf32> to vector<8x128xf32>
    %522 = arith.addf %519, %521 : vector<8x128xf32>
    %cst_215 = arith.constant 0.000000e+00 : f32
    %523 = vector.broadcast %cst_215 : f32 to vector<8x128xf32>
    %524 = arith.maximumf %522, %523 : vector<8x128xf32>
    %525 = vector.extract_strided_slice %510 {offsets = [0, 0], sizes = [4, 128], strides = [1, 1]} : vector<8x128xf32> to vector<4x128xf32>
    %cst_216 = arith.constant dense<0xFF800000> : vector<128xf32>
    %526 = vector.multi_reduction <maximumf>, %525, %cst_216 [0] : vector<4x128xf32> to vector<128xf32>
    %527 = vector.shape_cast %526 : vector<128xf32> to vector<1x128xf32>
    %528 = vector.extract_strided_slice %510 {offsets = [4, 0], sizes = [4, 128], strides = [1, 1]} : vector<8x128xf32> to vector<4x128xf32>
    %cst_217 = arith.constant dense<0xFF800000> : vector<128xf32>
    %529 = vector.multi_reduction <maximumf>, %528, %cst_217 [0] : vector<4x128xf32> to vector<128xf32>
    %530 = vector.shape_cast %529 : vector<128xf32> to vector<1x128xf32>
    %531 = tpu.concatenate %527, %530 in 0 : vector<1x128xf32>, vector<1x128xf32> -> vector<2x128xf32>
    %c0_218 = arith.constant 0 : index
    %c0_219 = arith.constant 0 : index
    %532 = vector.load %arg15[%c0_218, %c0_219] : memref<128x16xf32, #tpu.memory_space<vmem>>, vector<128x16xf32>
    %cst_220 = arith.constant dense<0.000000e+00> : vector<2x16xf32>
    %533 = tpu.matmul %531, %532, %cst_220 {dimension_numbers = #tpu.dot_dimension_numbers<[1], [0], [0], [1], [0, 0, 1, 1], [], []>} : vector<2x128xf32>, vector<128x16xf32>, vector<2x16xf32> -> vector<2x16xf32>
    %c0_221 = arith.constant 0 : index
    %c0_222 = arith.constant 0 : index
    %534 = vector.load %arg16[%c0_221, %c0_222] : memref<1x16xf32, #tpu.memory_space<vmem>>, vector<1x16xf32>
    %535 = vector.broadcast %534 : vector<1x16xf32> to vector<2x16xf32>
    %536 = arith.addf %533, %535 : vector<2x16xf32>
    %c0_223 = arith.constant 0 : index
    %c0_224 = arith.constant 0 : index
    %537 = vector.load %arg17[%c0_223, %c0_224] : memref<16x128xf32, #tpu.memory_space<vmem>>, vector<16x128xf32>
    %cst_225 = arith.constant dense<0.000000e+00> : vector<2x128xf32>
    %538 = tpu.matmul %536, %537, %cst_225 {dimension_numbers = #tpu.dot_dimension_numbers<[1], [0], [0], [1], [0, 0, 1, 1], [], []>} : vector<2x16xf32>, vector<16x128xf32>, vector<2x128xf32> -> vector<2x128xf32>
    %c0_226 = arith.constant 0 : index
    %c0_227 = arith.constant 0 : index
    %539 = vector.load %arg18[%c0_226, %c0_227] : memref<1x128xf32, #tpu.memory_space<vmem>>, vector<1x128xf32>
    %540 = vector.broadcast %539 : vector<1x128xf32> to vector<2x128xf32>
    %541 = arith.addf %538, %540 : vector<2x128xf32>
    %cst_228 = arith.constant dense<0xFF800000> : vector<2xf32>
    %542 = vector.multi_reduction <maximumf>, %541, %cst_228 [1] : vector<2x128xf32> to vector<2xf32>
    %543 = vector.shape_cast %542 : vector<2xf32> to vector<2x1xf32>
    %544 = vector.broadcast %543 : vector<2x1xf32> to vector<2x128xf32>
    %545 = arith.subf %541, %544 : vector<2x128xf32>
    %546 = math.exp %545 : vector<2x128xf32>
    %cst_229 = arith.constant dense<0.000000e+00> : vector<2xf32>
    %547 = vector.multi_reduction <add>, %546, %cst_229 [1] : vector<2x128xf32> to vector<2xf32>
    %548 = vector.shape_cast %547 : vector<2xf32> to vector<2x1xf32>
    %549 = vector.broadcast %548 : vector<2x1xf32> to vector<2x128xf32>
    %550 = arith.divf %546, %549 : vector<2x128xf32>
    %cst_230 = arith.constant 0.000000e+00 : f32
    %551 = vector.broadcast %cst_230 : f32 to vector<6x128xf32>
    %552 = tpu.concatenate %550, %551 in 0 : vector<2x128xf32>, vector<6x128xf32> -> vector<8x128xf32>
    %553 = tpu.concatenate %524, %552 in 0 : vector<8x128xf32>, vector<8x128xf32> -> vector<16x128xf32>
    %c0_231 = arith.constant 0 : index
    %c0_232 = arith.constant 0 : index
    %554 = vector.load %arg19[%c0_231, %c0_232] : memref<16x128xf32, #tpu.memory_space<vmem>>, vector<16x128xf32>
    tpu.vector_store %arg19[%c0_231, %c0_232], %553 {strides = array<i32>} : memref<16x128xf32, #tpu.memory_space<vmem>>, vector<16x128xf32>,
    return
  }
}

</mosaic_0001>

<llo_original>
// kernel: grugat_forward.1
$region0: #{grugat_forward.1}
  #allocation0 [shape = 'u32[]', space=smem, size = 0x4, offset = 0x4, fixed_abs, tag = 'smem constant byte address 0x4 - core index']
  #allocation1 [shape = 'u32[144,128]{1,0:T(1,128)}', space=vmem, size = 0x12000, scoped, tag = 'internal scratch']
  #allocation2 [shape = 'f32[8,8,384]{2,1,0:T(8,128)}', space=vmem, size = 0x18000, scoped, tag = 'scratch operand']
  #allocation3 [shape = 'f32[8,8,128]{2,1,0:T(8,128)}', space=vmem, size = 0x8000, scoped, tag = 'scratch operand']
  #allocation4 [shape = 'f32[1,1]{1,0:T(1,128)S(1)}', space=vmem, size = 0x200, scoped, tag = 'scoped memory for grugat_forward.1']
  %s0 = inlined_call_operand.vmem [shape: f32[8,32], index: 0, kind: input, shape index: {}]
  %s1 = inlined_call_operand.hbm [shape: f32[4,384], index: 1, kind: input, shape index: {}]
  %s2 = inlined_call_operand.hbm [shape: f32[1,384], index: 2, kind: input, shape index: {}]
  %s3 = inlined_call_operand.vmem [shape: f32[32,384], index: 3, kind: input, shape index: {}]
  %s4 = inlined_call_operand.hbm [shape: f32[1,384], index: 4, kind: input, shape index: {}]
  %s5 = inlined_call_operand.vmem [shape: bf16[256,384], index: 5, kind: input, shape index: {}]
  %s6 = inlined_call_operand.hbm [shape: f32[3,128], index: 6, kind: input, shape index: {}]
  %s7 = inlined_call_operand.hbm [shape: f32[3,128], index: 7, kind: input, shape index: {}]
  %s8 = inlined_call_operand.hbm [shape: f32[3,8,8], index: 8, kind: input, shape index: {}]
  %s9 = inlined_call_operand.hbm [shape: f32[8,8], index: 9, kind: input, shape index: {}]
  %s10 = inlined_call_operand.vmem [shape: f32[1,128], index: 10, kind: input, shape index: {}]
  %s11 = inlined_call_operand.vmem [shape: f32[128,8], index: 11, kind: input, shape index: {}]
  %s12 = inlined_call_operand.<no memory space> [shape: f32[1,1], index: 12, kind: input, shape index: {}]
  %s13 = inlined_call_operand.hbm [shape: f32[8,128], index: 13, kind: input, shape index: {}]
  %s14 = inlined_call_operand.hbm [shape: f32[1,128], index: 14, kind: input, shape index: {}]
  %s15 = inlined_call_operand.vmem [shape: f32[128,16], index: 15, kind: input, shape index: {}]
  %s16 = inlined_call_operand.hbm [shape: f32[1,16], index: 16, kind: input, shape index: {}]
  %s17 = inlined_call_operand.hbm [shape: f32[16,128], index: 17, kind: input, shape index: {}]
  %s18 = inlined_call_operand.hbm [shape: f32[1,128], index: 18, kind: input, shape index: {}]
  %s19 = inlined_call_operand.vmem [shape: f32[16,128], index: 19, kind: output, shape index: {}]
  %s20 = sld [smem:[#allocation0]]
  $region134: #{grugat_forward.1} parent=0
    _
  %s22 = ssub.s32 1, %s20
  %s23 = scalar_select 0, %s22, %s20
  %v24 = vstv %s12
  %25 = vst [vmem:[#allocation4] sm:$0x1] %v24
  $region1: #{grugat_forward.1} parent=0
    #allocation5 [shape = 'u8[6144]{0}', space=vmem, size = 0x1800, scoped, tag = 'input window, operand 1, single buffered']
    #allocation6 [shape = 's32[1]{0}', space=sflag, size = 0x4, scoped, tag = 'scoped memory for grugat_forward.1']
    #allocation7 [shape = 'u8[1536]{0}', space=vmem, size = 0x800, scoped, tag = 'input window, operand 2, single buffered']
    #allocation8 [shape = 's32[1]{0}', space=sflag, size = 0x4, scoped, tag = 'scoped memory for grugat_forward.1']
    #allocation9 [shape = 'u8[1536]{0}', space=vmem, size = 0x800, scoped, tag = 'input window, operand 4, single buffered']
    #allocation10 [shape = 'u8[2048]{0}', space=vmem, size = 0x800, scoped, tag = 'input window, operand 6, single buffered']
    #allocation11 [shape = 's32[1]{0}', space=sflag, size = 0x4, scoped, tag = 'scoped memory for grugat_forward.1']
    #allocation12 [shape = 'u8[2048]{0}', space=vmem, size = 0x800, scoped, tag = 'input window, operand 7, single buffered']
    #allocation13 [shape = 'u8[12288]{0}', space=vmem, size = 0x3000, scoped, tag = 'input window, operand 8, single buffered']
    #allocation14 [shape = 's32[1]{0}', space=sflag, size = 0x4, scoped, tag = 'scoped memory for grugat_forward.1']
    #allocation15 [shape = 'u8[4096]{0}', space=vmem, size = 0x1000, scoped, tag = 'input window, operand 9, single buffered']
    #allocation16 [shape = 'u8[4096]{0}', space=vmem, size = 0x1000, scoped, tag = 'input window, operand 13, single buffered']
    #allocation17 [shape = 's32[1]{0}', space=sflag, size = 0x4, scoped, tag = 'scoped memory for grugat_forward.1']
    #allocation18 [shape = 'u8[512]{0}', space=vmem, size = 0x400, scoped, tag = 'input window, operand 14, single buffered']
    #allocation19 [shape = 'u8[512]{0}', space=vmem, size = 0x400, scoped, tag = 'input window, operand 16, single buffered']
    #allocation20 [shape = 's32[1]{0}', space=sflag, size = 0x4, scoped, tag = 'scoped memory for grugat_forward.1']
    #allocation21 [shape = 'u8[8192]{0}', space=vmem, size = 0x2000, scoped, tag = 'input window, operand 17, single buffered']
    #allocation22 [shape = 'u8[512]{0}', space=vmem, size = 0x400, scoped, tag = 'input window, operand 18, single buffered']
    #allocation23 [shape = 's32[1]{0}', space=sflag, size = 0x4, scoped, tag = 'scoped memory for grugat_forward.1']
    %26 = vsyncpa [#allocation6], 0
    %27 = vsyncpa [#allocation8], 0
    %28 = vsyncpa [#allocation11], 0
    %29 = vsyncpa [#allocation14], 0
    %30 = vsyncpa [#allocation17], 0
    %31 = vsyncpa [#allocation20], 0
    %32 = vsyncpa [#allocation23], 0
    // Predicated region
    $region2: #{grugat_forward.1} parent=1 // pred_check
      _
    $region3: #{grugat_forward.1} parent=1 // pred_check_branch
      %34 = sbr.rel (0) target = $region5
    $region4: #{grugat_forward.1} parent=1 // pred_region
      _
    $region5: #{grugat_forward.1} parent=1 // pred_fallthru
      _
    // Predicated region
    $region6: #{grugat_forward.1} parent=1 // pred_check
      _
    $region7: #{grugat_forward.1} parent=1 // pred_check_branch
      %36 = sbr.rel (0) target = $region9
    $region8: #{grugat_forward.1} parent=1 // pred_region
      %s38 = ssub.s32 192, 192
      %39 = vsyncadd [#allocation6], %s38
      %s41 = sshll.u32 [#allocation5], 4
      %s42 = int_to_ptr.vmem [resolvable:$true] %s41
      %44 = dma.hbm_to_vmem [thread:$0]  %s1, 192, %s42, [#allocation6]
    $region9: #{grugat_forward.1} parent=1 // pred_fallthru
      _
    // Predicated region
    $region10: #{grugat_forward.1} parent=1 // pred_check
      _
    $region11: #{grugat_forward.1} parent=1 // pred_check_branch
      %46 = sbr.rel (0) target = $region13
    $region12: #{grugat_forward.1} parent=1 // pred_region
      %s48 = ssub.s32 48, 48
      %49 = vsyncadd [#allocation8], %s48
      %s51 = sshll.u32 [#allocation7], 4
      %s52 = int_to_ptr.vmem [resolvable:$true] %s51
      %54 = dma.hbm_to_vmem [thread:$0]  %s2, 48, %s52, [#allocation8]
    $region13: #{grugat_forward.1} parent=1 // pred_fallthru
      _
    // Predicated region
    $region14: #{grugat_forward.1} parent=1 // pred_check
      _
    $region15: #{grugat_forward.1} parent=1 // pred_check_branch
      %56 = sbr.rel (0) target = $region17
    $region16: #{grugat_forward.1} parent=1 // pred_region
      _
    $region17: #{grugat_forward.1} parent=1 // pred_fallthru
      _
    // Predicated region
    $region18: #{grugat_forward.1} parent=1 // pred_check
      _
    $region19: #{grugat_forward.1} parent=1 // pred_check_branch
      %58 = sbr.rel (0) target = $region21
    $region20: #{grugat_forward.1} parent=1 // pred_region
      %s60 = ssub.s32 48, 48
      %61 = vsyncadd [#allocation8], %s60
      %s63 = sshll.u32 [#allocation9], 4
      %s64 = int_to_ptr.vmem [resolvable:$true] %s63
      %66 = dma.hbm_to_vmem [thread:$0]  %s4, 48, %s64, [#allocation8]
    $region21: #{grugat_forward.1} parent=1 // pred_fallthru
      _
    // Predicated region
    $region22: #{grugat_forward.1} parent=1 // pred_check
      _
    $region23: #{grugat_forward.1} parent=1 // pred_check_branch
      %68 = sbr.rel (0) target = $region25
    $region24: #{grugat_forward.1} parent=1 // pred_region
      _
    $region25: #{grugat_forward.1} parent=1 // pred_fallthru
      _
    // Predicated region
    $region26: #{grugat_forward.1} parent=1 // pred_check
      _
    $region27: #{grugat_forward.1} parent=1 // pred_check_branch
      %70 = sbr.rel (0) target = $region29
    $region28: #{grugat_forward.1} parent=1 // pred_region
      %s72 = ssub.s32 64, 64
      %73 = vsyncadd [#allocation11], %s72
      %s75 = sshll.u32 [#allocation10], 4
      %s76 = int_to_ptr.vmem [resolvable:$true] %s75
      %78 = dma.hbm_to_vmem [thread:$0]  %s6, 64, %s76, [#allocation11]
    $region29: #{grugat_forward.1} parent=1 // pred_fallthru
      _
    // Predicated region
    $region30: #{grugat_forward.1} parent=1 // pred_check
      _
    $region31: #{grugat_forward.1} parent=1 // pred_check_branch
      %80 = sbr.rel (0) target = $region33
    $region32: #{grugat_forward.1} parent=1 // pred_region
      %s82 = ssub.s32 64, 64
      %83 = vsyncadd [#allocation11], %s82
      %s85 = sshll.u32 [#allocation12], 4
      %s86 = int_to_ptr.vmem [resolvable:$true] %s85
      %88 = dma.hbm_to_vmem [thread:$0]  %s7, 64, %s86, [#allocation11]
    $region33: #{grugat_forward.1} parent=1 // pred_fallthru
      _
    // Predicated region
    $region34: #{grugat_forward.1} parent=1 // pred_check
      _
    $region35: #{grugat_forward.1} parent=1 // pred_check_branch
      %90 = sbr.rel (0) target = $region37
    $region36: #{grugat_forward.1} parent=1 // pred_region
      %s92 = ssub.s32 384, 384
      %93 = vsyncadd [#allocation14], %s92
      %s94 = sshll.u32 [#allocation13], 4
      %s95 = int_to_ptr.vmem [resolvable:$true] %s94
      %100 = dma.hbm_to_vmem [thread:$0]  %s8, 384, %s95, [#allocation14], 128, 128, 8
    $region37: #{grugat_forward.1} parent=1 // pred_fallthru
      _
    // Predicated region
    $region38: #{grugat_forward.1} parent=1 // pred_check
      _
    $region39: #{grugat_forward.1} parent=1 // pred_check_branch
      %102 = sbr.rel (0) target = $region41
    $region40: #{grugat_forward.1} parent=1 // pred_region
      %s104 = ssub.s32 128, 128
      %105 = vsyncadd [#allocation14], %s104
      %s107 = sshll.u32 [#allocation15], 4
      %s108 = int_to_ptr.vmem [resolvable:$true] %s107
      %110 = dma.hbm_to_vmem [thread:$0]  %s9, 128, %s108, [#allocation14]
    $region41: #{grugat_forward.1} parent=1 // pred_fallthru
      _
    // Predicated region
    $region42: #{grugat_forward.1} parent=1 // pred_check
      _
    $region43: #{grugat_forward.1} parent=1 // pred_check_branch
      %112 = sbr.rel (0) target = $region45
    $region44: #{grugat_forward.1} parent=1 // pred_region
      _
    $region45: #{grugat_forward.1} parent=1 // pred_fallthru
      _
    // Predicated region
    $region46: #{grugat_forward.1} parent=1 // pred_check
      _
    $region47: #{grugat_forward.1} parent=1 // pred_check_branch
      %114 = sbr.rel (0) target = $region49
    $region48: #{grugat_forward.1} parent=1 // pred_region
      _
    $region49: #{grugat_forward.1} parent=1 // pred_fallthru
      _
    // Predicated region
    $region50: #{grugat_forward.1} parent=1 // pred_check
      _
    $region51: #{grugat_forward.1} parent=1 // pred_check_branch
      %116 = sbr.rel (0) target = $region53
    $region52: #{grugat_forward.1} parent=1 // pred_region
      _
    $region53: #{grugat_forward.1} parent=1 // pred_fallthru
      _
    // Predicated region
    $region54: #{grugat_forward.1} parent=1 // pred_check
      _
    $region55: #{grugat_forward.1} parent=1 // pred_check_branch
      %118 = sbr.rel (0) target = $region57
    $region56: #{grugat_forward.1} parent=1 // pred_region
      %s120 = ssub.s32 128, 128
      %121 = vsyncadd [#allocation17], %s120
      %s123 = sshll.u32 [#allocation16], 4
      %s124 = int_to_ptr.vmem [resolvable:$true] %s123
      %126 = dma.hbm_to_vmem [thread:$0]  %s13, 128, %s124, [#allocation17]
    $region57: #{grugat_forward.1} parent=1 // pred_fallthru
      _
    // Predicated region
    $region58: #{grugat_forward.1} parent=1 // pred_check
      _
    $region59: #{grugat_forward.1} parent=1 // pred_check_branch
      %128 = sbr.rel (0) target = $region61
    $region60: #{grugat_forward.1} parent=1 // pred_region
      %s130 = ssub.s32 16, 16
      %131 = vsyncadd [#allocation17], %s130
      %s133 = sshll.u32 [#allocation18], 4
      %s134 = int_to_ptr.vmem [resolvable:$true] %s133
      %136 = dma.hbm_to_vmem [thread:$0]  %s14, 16, %s134, [#allocation17]
    $region61: #{grugat_forward.1} parent=1 // pred_fallthru
      _
    // Predicated region
    $region62: #{grugat_forward.1} parent=1 // pred_check
      _
    $region63: #{grugat_forward.1} parent=1 // pred_check_branch
      %138 = sbr.rel (0) target = $region65
    $region64: #{grugat_forward.1} parent=1 // pred_region
      _
    $region65: #{grugat_forward.1} parent=1 // pred_fallthru
      _
    // Predicated region
    $region66: #{grugat_forward.1} parent=1 // pred_check
      _
    $region67: #{grugat_forward.1} parent=1 // pred_check_branch
      %140 = sbr.rel (0) target = $region69
    $region68: #{grugat_forward.1} parent=1 // pred_region
      %s142 = ssub.s32 16, 16
      %143 = vsyncadd [#allocation20], %s142
      %s145 = sshll.u32 [#allocation19], 4
      %s146 = int_to_ptr.vmem [resolvable:$true] %s145
      %148 = dma.hbm_to_vmem [thread:$0]  %s16, 16, %s146, [#allocation20]
    $region69: #{grugat_forward.1} parent=1 // pred_fallthru
      _
    // Predicated region
    $region70: #{grugat_forward.1} parent=1 // pred_check
      _
    $region71: #{grugat_forward.1} parent=1 // pred_check_branch
      %150 = sbr.rel (0) target = $region73
    $region72: #{grugat_forward.1} parent=1 // pred_region
      %s152 = ssub.s32 256, 256
      %153 = vsyncadd [#allocation20], %s152
      %s154 = sshll.u32 [#allocation21], 4
      %s155 = int_to_ptr.vmem [resolvable:$true] %s154
      %160 = dma.hbm_to_vmem [thread:$0]  %s17, 256, %s155, [#allocation20], 128, 128, 8
    $region73: #{grugat_forward.1} parent=1 // pred_fallthru
      _
    // Predicated region
    $region74: #{grugat_forward.1} parent=1 // pred_check
      _
    $region75: #{grugat_forward.1} parent=1 // pred_check_branch
      %162 = sbr.rel (0) target = $region77
    $region76: #{grugat_forward.1} parent=1 // pred_region
      %s164 = ssub.s32 16, 16
      %165 = vsyncadd [#allocation23], %s164
      %s167 = sshll.u32 [#allocation22], 4
      %s168 = int_to_ptr.vmem [resolvable:$true] %s167
      %170 = dma.hbm_to_vmem [thread:$0]  %s18, 16, %s168, [#allocation23]
    $region77: #{grugat_forward.1} parent=1 // pred_fallthru
      _
    // Predicated region
    $region78: #{grugat_forward.1} parent=1 // pred_check
      _
    $region79: #{grugat_forward.1} parent=1 // pred_check_branch
      %172 = sbr.rel (0) target = $region81
    $region80: #{grugat_forward.1} parent=1 // pred_region
      %173 = dma.done [#allocation6], 192
    $region81: #{grugat_forward.1} parent=1 // pred_fallthru
      _
    // Predicated region
    $region82: #{grugat_forward.1} parent=1 // pred_check
      _
    $region83: #{grugat_forward.1} parent=1 // pred_check_branch
      %175 = sbr.rel (0) target = $region85
    $region84: #{grugat_forward.1} parent=1 // pred_region
      %176 = dma.done [#allocation8], 48
    $region85: #{grugat_forward.1} parent=1 // pred_fallthru
      _
    // Predicated region
    $region86: #{grugat_forward.1} parent=1 // pred_check
      _
    $region87: #{grugat_forward.1} parent=1 // pred_check_branch
      %178 = sbr.rel (0) target = $region89
    $region88: #{grugat_forward.1} parent=1 // pred_region
      %179 = dma.done [#allocation8], 48
    $region89: #{grugat_forward.1} parent=1 // pred_fallthru
      _
    // Predicated region
    $region90: #{grugat_forward.1} parent=1 // pred_check
      _
    $region91: #{grugat_forward.1} parent=1 // pred_check_branch
      %181 = sbr.rel (0) target = $region93
    $region92: #{grugat_forward.1} parent=1 // pred_region
      %182 = dma.done [#allocation11], 64
    $region93: #{grugat_forward.1} parent=1 // pred_fallthru
      _
    // Predicated region
    $region94: #{grugat_forward.1} parent=1 // pred_check
      _
    $region95: #{grugat_forward.1} parent=1 // pred_check_branch
      %184 = sbr.rel (0) target = $region97
    $region96: #{grugat_forward.1} parent=1 // pred_region
      %185 = dma.done [#allocation11], 64
    $region97: #{grugat_forward.1} parent=1 // pred_fallthru
      _
    // Predicated region
    $region98: #{grugat_forward.1} parent=1 // pred_check
      _
    $region99: #{grugat_forward.1} parent=1 // pred_check_branch
      %187 = sbr.rel (0) target = $region101
    $region100: #{grugat_forward.1} parent=1 // pred_region
      %188 = dma.done [#allocation14], 384
    $region101: #{grugat_forward.1} parent=1 // pred_fallthru
      _
    // Predicated region
    $region102: #{grugat_forward.1} parent=1 // pred_check
      _
    $region103: #{grugat_forward.1} parent=1 // pred_check_branch
      %190 = sbr.rel (0) target = $region105
    $region104: #{grugat_forward.1} parent=1 // pred_region
      %191 = dma.done [#allocation14], 128
    $region105: #{grugat_forward.1} parent=1 // pred_fallthru
      _
    // Predicated region
    $region106: #{grugat_forward.1} parent=1 // pred_check
      _
    $region107: #{grugat_forward.1} parent=1 // pred_check_branch
      %193 = sbr.rel (0) target = $region109
    $region108: #{grugat_forward.1} parent=1 // pred_region
      %194 = dma.done [#allocation17], 128
    $region109: #{grugat_forward.1} parent=1 // pred_fallthru
      _
    // Predicated region
    $region110: #{grugat_forward.1} parent=1 // pred_check
      _
    $region111: #{grugat_forward.1} parent=1 // pred_check_branch
      %196 = sbr.rel (0) target = $region113
    $region112: #{grugat_forward.1} parent=1 // pred_region
      %197 = dma.done [#allocation17], 16
    $region113: #{grugat_forward.1} parent=1 // pred_fallthru
      _
    // Predicated region
    $region114: #{grugat_forward.1} parent=1 // pred_check
      _
    $region115: #{grugat_forward.1} parent=1 // pred_check_branch
      %199 = sbr.rel (0) target = $region117
    $region116: #{grugat_forward.1} parent=1 // pred_region
      %200 = dma.done [#allocation20], 16
    $region117: #{grugat_forward.1} parent=1 // pred_fallthru
      _
    // Predicated region
    $region118: #{grugat_forward.1} parent=1 // pred_check
      _
    $region119: #{grugat_forward.1} parent=1 // pred_check_branch
      %202 = sbr.rel (0) target = $region121
    $region120: #{grugat_forward.1} parent=1 // pred_region
      %203 = dma.done [#allocation20], 256
    $region121: #{grugat_forward.1} parent=1 // pred_fallthru
      _
    // Predicated region
    $region122: #{grugat_forward.1} parent=1 // pred_check
      _
    $region123: #{grugat_forward.1} parent=1 // pred_check_branch
      %205 = sbr.rel (0) target = $region125
    $region124: #{grugat_forward.1} parent=1 // pred_region
      %206 = dma.done [#allocation23], 16
    $region125: #{grugat_forward.1} parent=1 // pred_fallthru
      _
    %v208 = vld [vmem:[%s0] sm:$0xff]
    %v209 = vld [vmem:[#allocation5] sm:$0xff]
    %v210 = vld [vmem:[#allocation5 + $0x8] sm:$0xf]
    %v211 = vld [vmem:[#allocation7] sm:$0x7]
    %v213 = vlaneseq
    %v214 = vshrl.u32 %v213, 7
    %v215 = vsub.s32 0, %v214
    %v216 = vrot.slane %v211, %v215
    %v217 = vlaneseq
    %v218 = vshrl.u32 %v217, 7
    %v219 = vsub.s32 1, %v218
    %v220 = vrot.slane %v211, %v219
    %v221 = vlaneseq
    %v222 = vshrl.u32 %v221, 7
    %v223 = vsub.s32 2, %v222
    %v224 = vrot.slane %v211, %v223
    %v230 = vcombine.high %v209, %v209
    %vm231 = vcmask 31744
    %v233 = vsel %vm231, %v208, 0
    %vm235 = vcmask 1043456
    %v236 = vsel %vm235, %v209, 0
    %v238 = vsel %vm235, %v230, 0
    %v240 = vsel %vm235, %v210, 0
    %242 = vmatprep.subr.mxu0 0.0
    %243 = vmatpush1.msra.mxu0 0.0
    %244 = vmatprep.subr.mxu0 0.0
    %245 = vmatpush1.msra.mxu0 0.0
    %246 = vmatprep.subr.mxu0 0.0
    %247 = vmatpush1.msra.mxu0 0.0
    %248 = vmatprep.subr.mxu0 0.0
    %249 = vmatpush1.msra.mxu0 0.0
    %250 = vmatprep.subr.mxu0 0.0
    %251 = vmatpush1.msra.mxu0 0.0
    %252 = vmatprep.subr.mxu0 0.0
    %253 = vmatpush1.msra.mxu0 0.0
    %254 = vmatprep.subr.mxu0 0.0
    %255 = vmatpush1.msra.mxu0 0.0
    %256 = vmatprep.subr.mxu0 0.0
    %257 = vmatpush1.msra.mxu0 0.0
    %258 = vmatprep.subr.mxu0 0.0
    %259 = vmatpush1.msra.mxu0 0.0
    %260 = vmatprep.subr.mxu0 0.0
    %261 = vmatpush1.msra.mxu0 0.0
    %262 = vmatprep.subr.mxu0 0.0
    %263 = vmatpush1.msra.mxu0 0.0
    %264 = vmatprep.subr.mxu0 0.0
    %265 = vmatpush1.msra.mxu0 0.0
    %266 = vmatprep.subr.mxu0 0.0
    %267 = vmatpush1.msra.mxu0 0.0
    %268 = vmatprep.subr.mxu0 0.0
    %269 = vmatpush1.msra.mxu0 0.0
    %270 = vmatprep.subr.mxu0 0.0
    %271 = vmatpush1.msra.mxu0 0.0
    %272 = vmatprep.subr.mxu0 %v238
    %273 = vmatpush1.msra.mxu0 %v236
    %274 = vmatprep.subr.mxu0 0.0
    %275 = vmatpush2.msra.mxu0 0.0
    %276 = vmatprep.subr.mxu0 0.0
    %277 = vmatpush2.msra.mxu0 0.0
    %278 = vmatprep.subr.mxu0 0.0
    %279 = vmatpush2.msra.mxu0 0.0
    %280 = vmatprep.subr.mxu0 0.0
    %281 = vmatpush2.msra.mxu0 0.0
    %282 = vmatprep.subr.mxu0 0.0
    %283 = vmatpush2.msra.mxu0 0.0
    %284 = vmatprep.subr.mxu0 0.0
    %285 = vmatpush2.msra.mxu0 0.0
    %286 = vmatprep.subr.mxu0 0.0
    %287 = vmatpush2.msra.mxu0 0.0
    %288 = vmatprep.subr.mxu0 0.0
    %289 = vmatpush2.msra.mxu0 0.0
    %290 = vmatprep.subr.mxu0 0.0
    %291 = vmatpush2.msra.mxu0 0.0
    %292 = vmatprep.subr.mxu0 0.0
    %293 = vmatpush2.msra.mxu0 0.0
    %294 = vmatprep.subr.mxu0 0.0
    %295 = vmatpush2.msra.mxu0 0.0
    %296 = vmatprep.subr.mxu0 0.0
    %297 = vmatpush2.msra.mxu0 0.0
    %298 = vmatprep.subr.mxu0 0.0
    %299 = vmatpush2.msra.mxu0 0.0
    %300 = vmatprep.subr.mxu0 0.0
    %301 = vmatpush2.msra.mxu0 0.0
    %302 = vmatprep.subr.mxu0 0.0
    %303 = vmatpush2.msra.mxu0 0.0
    %304 = vmatprep.subr.mxu0 0.0
    %305 = vmatpush2.msra.mxu0 0.0
    %306 = vmatprep.mubr.f32.mxu0 0.0
    %307 = vmatmul.mubr.f32.gmra.mxu0 %v233
    %v308 = vpop.f32.mrf.mxu0
    %v309 = vadd.f32 %v216, %v308
    %v310 = vpop.f32.mrf.mxu0
    %v311 = vadd.f32 %v220, %v310
    %312 = vdwg.mxu0
    %313 = vmatprep.subr.mxu0 0.0
    %314 = vmatpush1.msra.mxu0 0.0
    %315 = vmatprep.subr.mxu0 0.0
    %316 = vmatpush1.msra.mxu0 0.0
    %317 = vmatprep.subr.mxu0 0.0
    %318 = vmatpush1.msra.mxu0 0.0
    %319 = vmatprep.subr.mxu0 0.0
    %320 = vmatpush1.msra.mxu0 0.0
    %321 = vmatprep.subr.mxu0 0.0
    %322 = vmatpush1.msra.mxu0 0.0
    %323 = vmatprep.subr.mxu0 0.0
    %324 = vmatpush1.msra.mxu0 0.0
    %325 = vmatprep.subr.mxu0 0.0
    %326 = vmatpush1.msra.mxu0 0.0
    %327 = vmatprep.subr.mxu0 0.0
    %328 = vmatpush1.msra.mxu0 0.0
    %329 = vmatprep.subr.mxu0 0.0
    %330 = vmatpush1.msra.mxu0 0.0
    %331 = vmatprep.subr.mxu0 0.0
    %332 = vmatpush1.msra.mxu0 0.0
    %333 = vmatprep.subr.mxu0 0.0
    %334 = vmatpush1.msra.mxu0 0.0
    %335 = vmatprep.subr.mxu0 0.0
    %336 = vmatpush1.msra.mxu0 0.0
    %337 = vmatprep.subr.mxu0 0.0
    %338 = vmatpush1.msra.mxu0 0.0
    %339 = vmatprep.subr.mxu0 0.0
    %340 = vmatpush1.msra.mxu0 0.0
    %341 = vmatprep.subr.mxu0 0.0
    %342 = vmatpush1.msra.mxu0 0.0
    %343 = vmatprep.subr.mxu0 0.0
    %344 = vmatpush1.msra.mxu0 %v240
    %345 = vmatprep.subr.mxu0 0.0
    %346 = vmatpush2.msra.mxu0 0.0
    %347 = vmatprep.subr.mxu0 0.0
    %348 = vmatpush2.msra.mxu0 0.0
    %349 = vmatprep.subr.mxu0 0.0
    %350 = vmatpush2.msra.mxu0 0.0
    %351 = vmatprep.subr.mxu0 0.0
    %352 = vmatpush2.msra.mxu0 0.0
    %353 = vmatprep.subr.mxu0 0.0
    %354 = vmatpush2.msra.mxu0 0.0
    %355 = vmatprep.subr.mxu0 0.0
    %356 = vmatpush2.msra.mxu0 0.0
    %357 = vmatprep.subr.mxu0 0.0
    %358 = vmatpush2.msra.mxu0 0.0
    %359 = vmatprep.subr.mxu0 0.0
    %360 = vmatpush2.msra.mxu0 0.0
    %361 = vmatprep.subr.mxu0 0.0
    %362 = vmatpush2.msra.mxu0 0.0
    %363 = vmatprep.subr.mxu0 0.0
    %364 = vmatpush2.msra.mxu0 0.0
    %365 = vmatprep.subr.mxu0 0.0
    %366 = vmatpush2.msra.mxu0 0.0
    %367 = vmatprep.subr.mxu0 0.0
    %368 = vmatpush2.msra.mxu0 0.0
    %369 = vmatprep.subr.mxu0 0.0
    %370 = vmatpush2.msra.mxu0 0.0
    %371 = vmatprep.subr.mxu0 0.0
    %372 = vmatpush2.msra.mxu0 0.0
    %373 = vmatprep.subr.mxu0 0.0
    %374 = vmatpush2.msra.mxu0 0.0
    %375 = vmatprep.subr.mxu0 0.0
    %376 = vmatpush2.msra.mxu0 0.0
    %377 = vmatprep.mubr.f32.mxu0 0.0
    %378 = vmatmul.mubr.f32.gmra.mxu0 %v233
    %v379 = vpop.f32.mrf.mxu0
    %v380 = vadd.f32 %v224, %v379
    %v381 = vpop.f32.mrf.mxu0
    %382 = vdwg.mxu0
    %383 = vst [vmem:[#allocation2] sm:$0xff] %v309
    %384 = vst [vmem:[#allocation2 + $0x8] sm:$0xff] %v311
    %385 = vst [vmem:[#allocation2 + $0x10] sm:$0xff] %v380
    %386 = vrot.lane.b32.xlu0 %v208, 124
    %v387 = vpop.permute.xlu0 %386
    %v388 = vsel %vm231, %v387, 0
    %390 = vmatprep.subr.mxu0 0.0
    %391 = vmatpush1.msra.mxu0 0.0
    %392 = vmatprep.subr.mxu0 0.0
    %393 = vmatpush1.msra.mxu0 0.0
    %394 = vmatprep.subr.mxu0 0.0
    %395 = vmatpush1.msra.mxu0 0.0
    %396 = vmatprep.subr.mxu0 0.0
    %397 = vmatpush1.msra.mxu0 0.0
    %398 = vmatprep.subr.mxu0 0.0
    %399 = vmatpush1.msra.mxu0 0.0
    %400 = vmatprep.subr.mxu0 0.0
    %401 = vmatpush1.msra.mxu0 0.0
    %402 = vmatprep.subr.mxu0 0.0
    %403 = vmatpush1.msra.mxu0 0.0
    %404 = vmatprep.subr.mxu0 0.0
    %405 = vmatpush1.msra.mxu0 0.0
    %406 = vmatprep.subr.mxu0 0.0
    %407 = vmatpush1.msra.mxu0 0.0
    %408 = vmatprep.subr.mxu0 0.0
    %409 = vmatpush1.msra.mxu0 0.0
    %410 = vmatprep.subr.mxu0 0.0
    %411 = vmatpush1.msra.mxu0 0.0
    %412 = vmatprep.subr.mxu0 0.0
    %413 = vmatpush1.msra.mxu0 0.0
    %414 = vmatprep.subr.mxu0 0.0
    %415 = vmatpush1.msra.mxu0 0.0
    %416 = vmatprep.subr.mxu0 0.0
    %417 = vmatpush1.msra.mxu0 0.0
    %418 = vmatprep.subr.mxu0 0.0
    %419 = vmatpush1.msra.mxu0 0.0
    %420 = vmatprep.subr.mxu0 %v238
    %421 = vmatpush1.msra.mxu0 %v236
    %422 = vmatprep.subr.mxu0 0.0
    %423 = vmatpush2.msra.mxu0 0.0
    %424 = vmatprep.subr.mxu0 0.0
    %425 = vmatpush2.msra.mxu0 0.0
    %426 = vmatprep.subr.mxu0 0.0
    %427 = vmatpush2.msra.mxu0 0.0
    %428 = vmatprep.subr.mxu0 0.0
    %429 = vmatpush2.msra.mxu0 0.0
    %430 = vmatprep.subr.mxu0 0.0
    %431 = vmatpush2.msra.mxu0 0.0
    %432 = vmatprep.subr.mxu0 0.0
    %433 = vmatpush2.msra.mxu0 0.0
    %434 = vmatprep.subr.mxu0 0.0
    %435 = vmatpush2.msra.mxu0 0.0
    %436 = vmatprep.subr.mxu0 0.0
    %437 = vmatpush2.msra.mxu0 0.0
    %438 = vmatprep.subr.mxu0 0.0
    %439 = vmatpush2.msra.mxu0 0.0
    %440 = vmatprep.subr.mxu0 0.0
    %441 = vmatpush2.msra.mxu0 0.0
    %442 = vmatprep.subr.mxu0 0.0
    %443 = vmatpush2.msra.mxu0 0.0
    %444 = vmatprep.subr.mxu0 0.0
    %445 = vmatpush2.msra.mxu0 0.0
    %446 = vmatprep.subr.mxu0 0.0
    %447 = vmatpush2.msra.mxu0 0.0
    %448 = vmatprep.subr.mxu0 0.0
    %449 = vmatpush2.msra.mxu0 0.0
    %450 = vmatprep.subr.mxu0 0.0
    %451 = vmatpush2.msra.mxu0 0.0
    %452 = vmatprep.subr.mxu0 0.0
    %453 = vmatpush2.msra.mxu0 0.0
    %454 = vmatprep.mubr.f32.mxu0 0.0
    %455 = vmatmul.mubr.f32.gmra.mxu0 %v388
    %v456 = vpop.f32.mrf.mxu0
    %v457 = vadd.f32 %v216, %v456
    %v458 = vpop.f32.mrf.mxu0
    %v459 = vadd.f32 %v220, %v458
    %460 = vdwg.mxu0
    %461 = vmatprep.subr.mxu0 0.0
    %462 = vmatpush1.msra.mxu0 0.0
    %463 = vmatprep.subr.mxu0 0.0
    %464 = vmatpush1.msra.mxu0 0.0
    %465 = vmatprep.subr.mxu0 0.0
    %466 = vmatpush1.msra.mxu0 0.0
    %467 = vmatprep.subr.mxu0 0.0
    %468 = vmatpush1.msra.mxu0 0.0
    %469 = vmatprep.subr.mxu0 0.0
    %470 = vmatpush1.msra.mxu0 0.0
    %471 = vmatprep.subr.mxu0 0.0
    %472 = vmatpush1.msra.mxu0 0.0
    %473 = vmatprep.subr.mxu0 0.0
    %474 = vmatpush1.msra.mxu0 0.0
    %475 = vmatprep.subr.mxu0 0.0
    %476 = vmatpush1.msra.mxu0 0.0
    %477 = vmatprep.subr.mxu0 0.0
    %478 = vmatpush1.msra.mxu0 0.0
    %479 = vmatprep.subr.mxu0 0.0
    %480 = vmatpush1.msra.mxu0 0.0
    %481 = vmatprep.subr.mxu0 0.0
    %482 = vmatpush1.msra.mxu0 0.0
    %483 = vmatprep.subr.mxu0 0.0
    %484 = vmatpush1.msra.mxu0 0.0
    %485 = vmatprep.subr.mxu0 0.0
    %486 = vmatpush1.msra.mxu0 0.0
    %487 = vmatprep.subr.mxu0 0.0
    %488 = vmatpush1.msra.mxu0 0.0
    %489 = vmatprep.subr.mxu0 0.0
    %490 = vmatpush1.msra.mxu0 0.0
    %491 = vmatprep.subr.mxu0 0.0
    %492 = vmatpush1.msra.mxu0 %v240
    %493 = vmatprep.subr.mxu0 0.0
    %494 = vmatpush2.msra.mxu0 0.0
    %495 = vmatprep.subr.mxu0 0.0
    %496 = vmatpush2.msra.mxu0 0.0
    %497 = vmatprep.subr.mxu0 0.0
    %498 = vmatpush2.msra.mxu0 0.0
    %499 = vmatprep.subr.mxu0 0.0
    %500 = vmatpush2.msra.mxu0 0.0
    %501 = vmatprep.subr.mxu0 0.0
    %502 = vmatpush2.msra.mxu0 0.0
    %503 = vmatprep.subr.mxu0 0.0
    %504 = vmatpush2.msra.mxu0 0.0
    %505 = vmatprep.subr.mxu0 0.0
    %506 = vmatpush2.msra.mxu0 0.0
    %507 = vmatprep.subr.mxu0 0.0
    %508 = vmatpush2.msra.mxu0 0.0
    %509 = vmatprep.subr.mxu0 0.0
    %510 = vmatpush2.msra.mxu0 0.0
    %511 = vmatprep.subr.mxu0 0.0
    %512 = vmatpush2.msra.mxu0 0.0
    %513 = vmatprep.subr.mxu0 0.0
    %514 = vmatpush2.msra.mxu0 0.0
    %515 = vmatprep.subr.mxu0 0.0
    %516 = vmatpush2.msra.mxu0 0.0
    %517 = vmatprep.subr.mxu0 0.0
    %518 = vmatpush2.msra.mxu0 0.0
    %519 = vmatprep.subr.mxu0 0.0
    %520 = vmatpush2.msra.mxu0 0.0
    %521 = vmatprep.subr.mxu0 0.0
    %522 = vmatpush2.msra.mxu0 0.0
    %523 = vmatprep.subr.mxu0 0.0
    %524 = vmatpush2.msra.mxu0 0.0
    %525 = vmatprep.mubr.f32.mxu0 0.0
    %526 = vmatmul.mubr.f32.gmra.mxu0 %v388
    %v527 = vpop.f32.mrf.mxu0
    %v528 = vadd.f32 %v224, %v527
    %v529 = vpop.f32.mrf.mxu0
    %530 = vdwg.mxu0
    %s531 = scalar_lea.vmem [#allocation2], 24
    %532 = vst [vmem:[%s531] sm:$0xff] %v457
    %533 = vst [vmem:[%s531 + $0x8] sm:$0xff] %v459
    %534 = vst [vmem:[%s531 + $0x10] sm:$0xff] %v528
    %535 = vrot.lane.b32.xlu0 %v208, 120
    %v536 = vpop.permute.xlu0 %535
    %v537 = vsel %vm231, %v536, 0
    %539 = vmatprep.subr.mxu0 0.0
    %540 = vmatpush1.msra.mxu0 0.0
    %541 = vmatprep.subr.mxu0 0.0
    %542 = vmatpush1.msra.mxu0 0.0
    %543 = vmatprep.subr.mxu0 0.0
    %544 = vmatpush1.msra.mxu0 0.0
    %545 = vmatprep.subr.mxu0 0.0
    %546 = vmatpush1.msra.mxu0 0.0
    %547 = vmatprep.subr.mxu0 0.0
    %548 = vmatpush1.msra.mxu0 0.0
    %549 = vmatprep.subr.mxu0 0.0
    %550 = vmatpush1.msra.mxu0 0.0
    %551 = vmatprep.subr.mxu0 0.0
    %552 = vmatpush1.msra.mxu0 0.0
    %553 = vmatprep.subr.mxu0 0.0
    %554 = vmatpush1.msra.mxu0 0.0
    %555 = vmatprep.subr.mxu0 0.0
    %556 = vmatpush1.msra.mxu0 0.0
    %557 = vmatprep.subr.mxu0 0.0
    %558 = vmatpush1.msra.mxu0 0.0
    %559 = vmatprep.subr.mxu0 0.0
    %560 = vmatpush1.msra.mxu0 0.0
    %561 = vmatprep.subr.mxu0 0.0
    %562 = vmatpush1.msra.mxu0 0.0
    %563 = vmatprep.subr.mxu0 0.0
    %564 = vmatpush1.msra.mxu0 0.0
    %565 = vmatprep.subr.mxu0 0.0
    %566 = vmatpush1.msra.mxu0 0.0
    %567 = vmatprep.subr.mxu0 0.0
    %568 = vmatpush1.msra.mxu0 0.0
    %569 = vmatprep.subr.mxu0 %v238
    %570 = vmatpush1.msra.mxu0 %v236
    %571 = vmatprep.subr.mxu0 0.0
    %572 = vmatpush2.msra.mxu0 0.0
    %573 = vmatprep.subr.mxu0 0.0
    %574 = vmatpush2.msra.mxu0 0.0
    %575 = vmatprep.subr.mxu0 0.0
    %576 = vmatpush2.msra.mxu0 0.0
    %577 = vmatprep.subr.mxu0 0.0
    %578 = vmatpush2.msra.mxu0 0.0
    %579 = vmatprep.subr.mxu0 0.0
    %580 = vmatpush2.msra.mxu0 0.0
    %581 = vmatprep.subr.mxu0 0.0
    %582 = vmatpush2.msra.mxu0 0.0
    %583 = vmatprep.subr.mxu0 0.0
    %584 = vmatpush2.msra.mxu0 0.0
    %585 = vmatprep.subr.mxu0 0.0
    %586 = vmatpush2.msra.mxu0 0.0
    %587 = vmatprep.subr.mxu0 0.0
    %588 = vmatpush2.msra.mxu0 0.0
    %589 = vmatprep.subr.mxu0 0.0
    %590 = vmatpush2.msra.mxu0 0.0
    %591 = vmatprep.subr.mxu0 0.0
    %592 = vmatpush2.msra.mxu0 0.0
    %593 = vmatprep.subr.mxu0 0.0
    %594 = vmatpush2.msra.mxu0 0.0
    %595 = vmatprep.subr.mxu0 0.0
    %596 = vmatpush2.msra.mxu0 0.0
    %597 = vmatprep.subr.mxu0 0.0
    %598 = vmatpush2.msra.mxu0 0.0
    %599 = vmatprep.subr.mxu0 0.0
    %600 = vmatpush2.msra.mxu0 0.0
    %601 = vmatprep.subr.mxu0 0.0
    %602 = vmatpush2.msra.mxu0 0.0
    %603 = vmatprep.mubr.f32.mxu0 0.0
    %604 = vmatmul.mubr.f32.gmra.mxu0 %v537
    %v605 = vpop.f32.mrf.mxu0
    %v606 = vadd.f32 %v216, %v605
    %v607 = vpop.f32.mrf.mxu0
    %v608 = vadd.f32 %v220, %v607
    %609 = vdwg.mxu0
    %610 = vmatprep.subr.mxu0 0.0
    %611 = vmatpush1.msra.mxu0 0.0
    %612 = vmatprep.subr.mxu0 0.0
    %613 = vmatpush1.msra.mxu0 0.0
    %614 = vmatprep.subr.mxu0 0.0
    %615 = vmatpush1.msra.mxu0 0.0
    %616 = vmatprep.subr.mxu0 0.0
    %617 = vmatpush1.msra.mxu0 0.0
    %618 = vmatprep.subr.mxu0 0.0
    %619 = vmatpush1.msra.mxu0 0.0
    %620 = vmatprep.subr.mxu0 0.0
    %621 = vmatpush1.msra.mxu0 0.0
    %622 = vmatprep.subr.mxu0 0.0
    %623 = vmatpush1.msra.mxu0 0.0
    %624 = vmatprep.subr.mxu0 0.0
    %625 = vmatpush1.msra.mxu0 0.0
    %626 = vmatprep.subr.mxu0 0.0
    %627 = vmatpush1.msra.mxu0 0.0
    %628 = vmatprep.subr.mxu0 0.0
    %629 = vmatpush1.msra.mxu0 0.0
    %630 = vmatprep.subr.mxu0 0.0
    %631 = vmatpush1.msra.mxu0 0.0
    %632 = vmatprep.subr.mxu0 0.0
    %633 = vmatpush1.msra.mxu0 0.0
    %634 = vmatprep.subr.mxu0 0.0
    %635 = vmatpush1.msra.mxu0 0.0
    %636 = vmatprep.subr.mxu0 0.0
    %637 = vmatpush1.msra.mxu0 0.0
    %638 = vmatprep.subr.mxu0 0.0
    %639 = vmatpush1.msra.mxu0 0.0
    %640 = vmatprep.subr.mxu0 0.0
    %641 = vmatpush1.msra.mxu0 %v240
    %642 = vmatprep.subr.mxu0 0.0
    %643 = vmatpush2.msra.mxu0 0.0
    %644 = vmatprep.subr.mxu0 0.0
    %645 = vmatpush2.msra.mxu0 0.0
    %646 = vmatprep.subr.mxu0 0.0
    %647 = vmatpush2.msra.mxu0 0.0
    %648 = vmatprep.subr.mxu0 0.0
    %649 = vmatpush2.msra.mxu0 0.0
    %650 = vmatprep.subr.mxu0 0.0
    %651 = vmatpush2.msra.mxu0 0.0
    %652 = vmatprep.subr.mxu0 0.0
    %653 = vmatpush2.msra.mxu0 0.0
    %654 = vmatprep.subr.mxu0 0.0
    %655 = vmatpush2.msra.mxu0 0.0
    %656 = vmatprep.subr.mxu0 0.0
    %657 = vmatpush2.msra.mxu0 0.0
    %658 = vmatprep.subr.mxu0 0.0
    %659 = vmatpush2.msra.mxu0 0.0
    %660 = vmatprep.subr.mxu0 0.0
    %661 = vmatpush2.msra.mxu0 0.0
    %662 = vmatprep.subr.mxu0 0.0
    %663 = vmatpush2.msra.mxu0 0.0
    %664 = vmatprep.subr.mxu0 0.0
    %665 = vmatpush2.msra.mxu0 0.0
    %666 = vmatprep.subr.mxu0 0.0
    %667 = vmatpush2.msra.mxu0 0.0
    %668 = vmatprep.subr.mxu0 0.0
    %669 = vmatpush2.msra.mxu0 0.0
    %670 = vmatprep.subr.mxu0 0.0
    %671 = vmatpush2.msra.mxu0 0.0
    %672 = vmatprep.subr.mxu0 0.0
    %673 = vmatpush2.msra.mxu0 0.0
    %674 = vmatprep.mubr.f32.mxu0 0.0
    %675 = vmatmul.mubr.f32.gmra.mxu0 %v537
    %v676 = vpop.f32.mrf.mxu0
    %v677 = vadd.f32 %v224, %v676
    %v678 = vpop.f32.mrf.mxu0
    %679 = vdwg.mxu0
    %s680 = scalar_lea.vmem [#allocation2], 48
    %681 = vst [vmem:[%s680] sm:$0xff] %v606
    %682 = vst [vmem:[%s680 + $0x8] sm:$0xff] %v608
    %683 = vst [vmem:[%s680 + $0x10] sm:$0xff] %v677
    %684 = vrot.lane.b32.xlu0 %v208, 116
    %v685 = vpop.permute.xlu0 %684
    %v686 = vsel %vm231, %v685, 0
    %688 = vmatprep.subr.mxu0 0.0
    %689 = vmatpush1.msra.mxu0 0.0
    %690 = vmatprep.subr.mxu0 0.0
    %691 = vmatpush1.msra.mxu0 0.0
    %692 = vmatprep.subr.mxu0 0.0
    %693 = vmatpush1.msra.mxu0 0.0
    %694 = vmatprep.subr.mxu0 0.0
    %695 = vmatpush1.msra.mxu0 0.0
    %696 = vmatprep.subr.mxu0 0.0
    %697 = vmatpush1.msra.mxu0 0.0
    %698 = vmatprep.subr.mxu0 0.0
    %699 = vmatpush1.msra.mxu0 0.0
    %700 = vmatprep.subr.mxu0 0.0
    %701 = vmatpush1.msra.mxu0 0.0
    %702 = vmatprep.subr.mxu0 0.0
    %703 = vmatpush1.msra.mxu0 0.0
    %704 = vmatprep.subr.mxu0 0.0
    %705 = vmatpush1.msra.mxu0 0.0
    %706 = vmatprep.subr.mxu0 0.0
    %707 = vmatpush1.msra.mxu0 0.0
    %708 = vmatprep.subr.mxu0 0.0
    %709 = vmatpush1.msra.mxu0 0.0
    %710 = vmatprep.subr.mxu0 0.0
    %711 = vmatpush1.msra.mxu0 0.0
    %712 = vmatprep.subr.mxu0 0.0
    %713 = vmatpush1.msra.mxu0 0.0
    %714 = vmatprep.subr.mxu0 0.0
    %715 = vmatpush1.msra.mxu0 0.0
    %716 = vmatprep.subr.mxu0 0.0
    %717 = vmatpush1.msra.mxu0 0.0
    %718 = vmatprep.subr.mxu0 %v238
    %719 = vmatpush1.msra.mxu0 %v236
    %720 = vmatprep.subr.mxu0 0.0
    %721 = vmatpush2.msra.mxu0 0.0
    %722 = vmatprep.subr.mxu0 0.0
    %723 = vmatpush2.msra.mxu0 0.0
    %724 = vmatprep.subr.mxu0 0.0
    %725 = vmatpush2.msra.mxu0 0.0
    %726 = vmatprep.subr.mxu0 0.0
    %727 = vmatpush2.msra.mxu0 0.0
    %728 = vmatprep.subr.mxu0 0.0
    %729 = vmatpush2.msra.mxu0 0.0
    %730 = vmatprep.subr.mxu0 0.0
    %731 = vmatpush2.msra.mxu0 0.0
    %732 = vmatprep.subr.mxu0 0.0
    %733 = vmatpush2.msra.mxu0 0.0
    %734 = vmatprep.subr.mxu0 0.0
    %735 = vmatpush2.msra.mxu0 0.0
    %736 = vmatprep.subr.mxu0 0.0
    %737 = vmatpush2.msra.mxu0 0.0
    %738 = vmatprep.subr.mxu0 0.0
    %739 = vmatpush2.msra.mxu0 0.0
    %740 = vmatprep.subr.mxu0 0.0
    %741 = vmatpush2.msra.mxu0 0.0
    %742 = vmatprep.subr.mxu0 0.0
    %743 = vmatpush2.msra.mxu0 0.0
    %744 = vmatprep.subr.mxu0 0.0
    %745 = vmatpush2.msra.mxu0 0.0
    %746 = vmatprep.subr.mxu0 0.0
    %747 = vmatpush2.msra.mxu0 0.0
    %748 = vmatprep.subr.mxu0 0.0
    %749 = vmatpush2.msra.mxu0 0.0
    %750 = vmatprep.subr.mxu0 0.0
    %751 = vmatpush2.msra.mxu0 0.0
    %752 = vmatprep.mubr.f32.mxu0 0.0
    %753 = vmatmul.mubr.f32.gmra.mxu0 %v686
    %v754 = vpop.f32.mrf.mxu0
    %v755 = vadd.f32 %v216, %v754
    %v756 = vpop.f32.mrf.mxu0
    %v757 = vadd.f32 %v220, %v756
    %758 = vdwg.mxu0
    %759 = vmatprep.subr.mxu0 0.0
    %760 = vmatpush1.msra.mxu0 0.0
    %761 = vmatprep.subr.mxu0 0.0
    %762 = vmatpush1.msra.mxu0 0.0
    %763 = vmatprep.subr.mxu0 0.0
    %764 = vmatpush1.msra.mxu0 0.0
    %765 = vmatprep.subr.mxu0 0.0
    %766 = vmatpush1.msra.mxu0 0.0
    %767 = vmatprep.subr.mxu0 0.0
    %768 = vmatpush1.msra.mxu0 0.0
    %769 = vmatprep.subr.mxu0 0.0
    %770 = vmatpush1.msra.mxu0 0.0
    %771 = vmatprep.subr.mxu0 0.0
    %772 = vmatpush1.msra.mxu0 0.0
    %773 = vmatprep.subr.mxu0 0.0
    %774 = vmatpush1.msra.mxu0 0.0
    %775 = vmatprep.subr.mxu0 0.0
    %776 = vmatpush1.msra.mxu0 0.0
    %777 = vmatprep.subr.mxu0 0.0
    %778 = vmatpush1.msra.mxu0 0.0
    %779 = vmatprep.subr.mxu0 0.0
    %780 = vmatpush1.msra.mxu0 0.0
    %781 = vmatprep.subr.mxu0 0.0
    %782 = vmatpush1.msra.mxu0 0.0
    %783 = vmatprep.subr.mxu0 0.0
    %784 = vmatpush1.msra.mxu0 0.0
    %785 = vmatprep.subr.mxu0 0.0
    %786 = vmatpush1.msra.mxu0 0.0
    %787 = vmatprep.subr.mxu0 0.0
    %788 = vmatpush1.msra.mxu0 0.0
    %789 = vmatprep.subr.mxu0 0.0
    %790 = vmatpush1.msra.mxu0 %v240
    %791 = vmatprep.subr.mxu0 0.0
    %792 = vmatpush2.msra.mxu0 0.0
    %793 = vmatprep.subr.mxu0 0.0
    %794 = vmatpush2.msra.mxu0 0.0
    %795 = vmatprep.subr.mxu0 0.0
    %796 = vmatpush2.msra.mxu0 0.0
    %797 = vmatprep.subr.mxu0 0.0
    %798 = vmatpush2.msra.mxu0 0.0
    %799 = vmatprep.subr.mxu0 0.0
    %800 = vmatpush2.msra.mxu0 0.0
    %801 = vmatprep.subr.mxu0 0.0
    %802 = vmatpush2.msra.mxu0 0.0
    %803 = vmatprep.subr.mxu0 0.0
    %804 = vmatpush2.msra.mxu0 0.0
    %805 = vmatprep.subr.mxu0 0.0
    %806 = vmatpush2.msra.mxu0 0.0
    %807 = vmatprep.subr.mxu0 0.0
    %808 = vmatpush2.msra.mxu0 0.0
    %809 = vmatprep.subr.mxu0 0.0
    %810 = vmatpush2.msra.mxu0 0.0
    %811 = vmatprep.subr.mxu0 0.0
    %812 = vmatpush2.msra.mxu0 0.0
    %813 = vmatprep.subr.mxu0 0.0
    %814 = vmatpush2.msra.mxu0 0.0
    %815 = vmatprep.subr.mxu0 0.0
    %816 = vmatpush2.msra.mxu0 0.0
    %817 = vmatprep.subr.mxu0 0.0
    %818 = vmatpush2.msra.mxu0 0.0
    %819 = vmatprep.subr.mxu0 0.0
    %820 = vmatpush2.msra.mxu0 0.0
    %821 = vmatprep.subr.mxu0 0.0
    %822 = vmatpush2.msra.mxu0 0.0
    %823 = vmatprep.mubr.f32.mxu0 0.0
    %824 = vmatmul.mubr.f32.gmra.mxu0 %v686
    %v825 = vpop.f32.mrf.mxu0
    %v826 = vadd.f32 %v224, %v825
    %v827 = vpop.f32.mrf.mxu0
    %828 = vdwg.mxu0
    %s829 = scalar_lea.vmem [#allocation2], 72
    %830 = vst [vmem:[%s829] sm:$0xff] %v755
    %831 = vst [vmem:[%s829 + $0x8] sm:$0xff] %v757
    %832 = vst [vmem:[%s829 + $0x10] sm:$0xff] %v826
    %833 = vrot.lane.b32.xlu0 %v208, 112
    %v834 = vpop.permute.xlu0 %833
    %v835 = vsel %vm231, %v834, 0
    %837 = vmatprep.subr.mxu0 0.0
    %838 = vmatpush1.msra.mxu0 0.0
    %839 = vmatprep.subr.mxu0 0.0
    %840 = vmatpush1.msra.mxu0 0.0
    %841 = vmatprep.subr.mxu0 0.0
    %842 = vmatpush1.msra.mxu0 0.0
    %843 = vmatprep.subr.mxu0 0.0
    %844 = vmatpush1.msra.mxu0 0.0
    %845 = vmatprep.subr.mxu0 0.0
    %846 = vmatpush1.msra.mxu0 0.0
    %847 = vmatprep.subr.mxu0 0.0
    %848 = vmatpush1.msra.mxu0 0.0
    %849 = vmatprep.subr.mxu0 0.0
    %850 = vmatpush1.msra.mxu0 0.0
    %851 = vmatprep.subr.mxu0 0.0
    %852 = vmatpush1.msra.mxu0 0.0
    %853 = vmatprep.subr.mxu0 0.0
    %854 = vmatpush1.msra.mxu0 0.0
    %855 = vmatprep.subr.mxu0 0.0
    %856 = vmatpush1.msra.mxu0 0.0
    %857 = vmatprep.subr.mxu0 0.0
    %858 = vmatpush1.msra.mxu0 0.0
    %859 = vmatprep.subr.mxu0 0.0
    %860 = vmatpush1.msra.mxu0 0.0
    %861 = vmatprep.subr.mxu0 0.0
    %862 = vmatpush1.msra.mxu0 0.0
    %863 = vmatprep.subr.mxu0 0.0
    %864 = vmatpush1.msra.mxu0 0.0
    %865 = vmatprep.subr.mxu0 0.0
    %866 = vmatpush1.msra.mxu0 0.0
    %867 = vmatprep.subr.mxu0 %v238
    %868 = vmatpush1.msra.mxu0 %v236
    %869 = vmatprep.subr.mxu0 0.0
    %870 = vmatpush2.msra.mxu0 0.0
    %871 = vmatprep.subr.mxu0 0.0
    %872 = vmatpush2.msra.mxu0 0.0
    %873 = vmatprep.subr.mxu0 0.0
    %874 = vmatpush2.msra.mxu0 0.0
    %875 = vmatprep.subr.mxu0 0.0
    %876 = vmatpush2.msra.mxu0 0.0
    %877 = vmatprep.subr.mxu0 0.0
    %878 = vmatpush2.msra.mxu0 0.0
    %879 = vmatprep.subr.mxu0 0.0
    %880 = vmatpush2.msra.mxu0 0.0
    %881 = vmatprep.subr.mxu0 0.0
    %882 = vmatpush2.msra.mxu0 0.0
    %883 = vmatprep.subr.mxu0 0.0
    %884 = vmatpush2.msra.mxu0 0.0
    %885 = vmatprep.subr.mxu0 0.0
    %886 = vmatpush2.msra.mxu0 0.0
    %887 = vmatprep.subr.mxu0 0.0
    %888 = vmatpush2.msra.mxu0 0.0
    %889 = vmatprep.subr.mxu0 0.0
    %890 = vmatpush2.msra.mxu0 0.0
    %891 = vmatprep.subr.mxu0 0.0
    %892 = vmatpush2.msra.mxu0 0.0
    %893 = vmatprep.subr.mxu0 0.0
    %894 = vmatpush2.msra.mxu0 0.0
    %895 = vmatprep.subr.mxu0 0.0
    %896 = vmatpush2.msra.mxu0 0.0
    %897 = vmatprep.subr.mxu0 0.0
    %898 = vmatpush2.msra.mxu0 0.0
    %899 = vmatprep.subr.mxu0 0.0
    %900 = vmatpush2.msra.mxu0 0.0
    %901 = vmatprep.mubr.f32.mxu0 0.0
    %902 = vmatmul.mubr.f32.gmra.mxu0 %v835
    %v903 = vpop.f32.mrf.mxu0
    %v904 = vadd.f32 %v216, %v903
    %v905 = vpop.f32.mrf.mxu0
    %v906 = vadd.f32 %v220, %v905
    %907 = vdwg.mxu0
    %908 = vmatprep.subr.mxu0 0.0
    %909 = vmatpush1.msra.mxu0 0.0
    %910 = vmatprep.subr.mxu0 0.0
    %911 = vmatpush1.msra.mxu0 0.0
    %912 = vmatprep.subr.mxu0 0.0
    %913 = vmatpush1.msra.mxu0 0.0
    %914 = vmatprep.subr.mxu0 0.0
    %915 = vmatpush1.msra.mxu0 0.0
    %916 = vmatprep.subr.mxu0 0.0
    %917 = vmatpush1.msra.mxu0 0.0
    %918 = vmatprep.subr.mxu0 0.0
    %919 = vmatpush1.msra.mxu0 0.0
    %920 = vmatprep.subr.mxu0 0.0
    %921 = vmatpush1.msra.mxu0 0.0
    %922 = vmatprep.subr.mxu0 0.0
    %923 = vmatpush1.msra.mxu0 0.0
    %924 = vmatprep.subr.mxu0 0.0
    %925 = vmatpush1.msra.mxu0 0.0
    %926 = vmatprep.subr.mxu0 0.0
    %927 = vmatpush1.msra.mxu0 0.0
    %928 = vmatprep.subr.mxu0 0.0
    %929 = vmatpush1.msra.mxu0 0.0
    %930 = vmatprep.subr.mxu0 0.0
    %931 = vmatpush1.msra.mxu0 0.0
    %932 = vmatprep.subr.mxu0 0.0
    %933 = vmatpush1.msra.mxu0 0.0
    %934 = vmatprep.subr.mxu0 0.0
    %935 = vmatpush1.msra.mxu0 0.0
    %936 = vmatprep.subr.mxu0 0.0
    %937 = vmatpush1.msra.mxu0 0.0
    %938 = vmatprep.subr.mxu0 0.0
    %939 = vmatpush1.msra.mxu0 %v240
    %940 = vmatprep.subr.mxu0 0.0
    %941 = vmatpush2.msra.mxu0 0.0
    %942 = vmatprep.subr.mxu0 0.0
    %943 = vmatpush2.msra.mxu0 0.0
    %944 = vmatprep.subr.mxu0 0.0
    %945 = vmatpush2.msra.mxu0 0.0
    %946 = vmatprep.subr.mxu0 0.0
    %947 = vmatpush2.msra.mxu0 0.0
    %948 = vmatprep.subr.mxu0 0.0
    %949 = vmatpush2.msra.mxu0 0.0
    %950 = vmatprep.subr.mxu0 0.0
    %951 = vmatpush2.msra.mxu0 0.0
    %952 = vmatprep.subr.mxu0 0.0
    %953 = vmatpush2.msra.mxu0 0.0
    %954 = vmatprep.subr.mxu0 0.0
    %955 = vmatpush2.msra.mxu0 0.0
    %956 = vmatprep.subr.mxu0 0.0
    %957 = vmatpush2.msra.mxu0 0.0
    %958 = vmatprep.subr.mxu0 0.0
    %959 = vmatpush2.msra.mxu0 0.0
    %960 = vmatprep.subr.mxu0 0.0
    %961 = vmatpush2.msra.mxu0 0.0
    %962 = vmatprep.subr.mxu0 0.0
    %963 = vmatpush2.msra.mxu0 0.0
    %964 = vmatprep.subr.mxu0 0.0
    %965 = vmatpush2.msra.mxu0 0.0
    %966 = vmatprep.subr.mxu0 0.0
    %967 = vmatpush2.msra.mxu0 0.0
    %968 = vmatprep.subr.mxu0 0.0
    %969 = vmatpush2.msra.mxu0 0.0
    %970 = vmatprep.subr.mxu0 0.0
    %971 = vmatpush2.msra.mxu0 0.0
    %972 = vmatprep.mubr.f32.mxu0 0.0
    %973 = vmatmul.mubr.f32.gmra.mxu0 %v835
    %v974 = vpop.f32.mrf.mxu0
    %v975 = vadd.f32 %v224, %v974
    %v976 = vpop.f32.mrf.mxu0
    %977 = vdwg.mxu0
    %s978 = scalar_lea.vmem [#allocation2], 96
    %979 = vst [vmem:[%s978] sm:$0xff] %v904
    %980 = vst [vmem:[%s978 + $0x8] sm:$0xff] %v906
    %981 = vst [vmem:[%s978 + $0x10] sm:$0xff] %v975
    %982 = vrot.lane.b32.xlu0 %v208, 108
    %v983 = vpop.permute.xlu0 %982
    %v984 = vsel %vm231, %v983, 0
    %986 = vmatprep.subr.mxu0 0.0
    %987 = vmatpush1.msra.mxu0 0.0
    %988 = vmatprep.subr.mxu0 0.0
    %989 = vmatpush1.msra.mxu0 0.0
    %990 = vmatprep.subr.mxu0 0.0
    %991 = vmatpush1.msra.mxu0 0.0
    %992 = vmatprep.subr.mxu0 0.0
    %993 = vmatpush1.msra.mxu0 0.0
    %994 = vmatprep.subr.mxu0 0.0
    %995 = vmatpush1.msra.mxu0 0.0
    %996 = vmatprep.subr.mxu0 0.0
    %997 = vmatpush1.msra.mxu0 0.0
    %998 = vmatprep.subr.mxu0 0.0
    %999 = vmatpush1.msra.mxu0 0.0
    %1000 = vmatprep.subr.mxu0 0.0
    %1001 = vmatpush1.msra.mxu0 0.0
    %1002 = vmatprep.subr.mxu0 0.0
    %1003 = vmatpush1.msra.mxu0 0.0
    %1004 = vmatprep.subr.mxu0 0.0
    %1005 = vmatpush1.msra.mxu0 0.0
    %1006 = vmatprep.subr.mxu0 0.0
    %1007 = vmatpush1.msra.mxu0 0.0
    %1008 = vmatprep.subr.mxu0 0.0
    %1009 = vmatpush1.msra.mxu0 0.0
    %1010 = vmatprep.subr.mxu0 0.0
    %1011 = vmatpush1.msra.mxu0 0.0
    %1012 = vmatprep.subr.mxu0 0.0
    %1013 = vmatpush1.msra.mxu0 0.0
    %1014 = vmatprep.subr.mxu0 0.0
    %1015 = vmatpush1.msra.mxu0 0.0
    %1016 = vmatprep.subr.mxu0 %v238
    %1017 = vmatpush1.msra.mxu0 %v236
    %1018 = vmatprep.subr.mxu0 0.0
    %1019 = vmatpush2.msra.mxu0 0.0
    %1020 = vmatprep.subr.mxu0 0.0
    %1021 = vmatpush2.msra.mxu0 0.0
    %1022 = vmatprep.subr.mxu0 0.0
    %1023 = vmatpush2.msra.mxu0 0.0
    %1024 = vmatprep.subr.mxu0 0.0
    %1025 = vmatpush2.msra.mxu0 0.0
    %1026 = vmatprep.subr.mxu0 0.0
    %1027 = vmatpush2.msra.mxu0 0.0
    %1028 = vmatprep.subr.mxu0 0.0
    %1029 = vmatpush2.msra.mxu0 0.0
    %1030 = vmatprep.subr.mxu0 0.0
    %1031 = vmatpush2.msra.mxu0 0.0
    %1032 = vmatprep.subr.mxu0 0.0
    %1033 = vmatpush2.msra.mxu0 0.0
    %1034 = vmatprep.subr.mxu0 0.0
    %1035 = vmatpush2.msra.mxu0 0.0
    %1036 = vmatprep.subr.mxu0 0.0
    %1037 = vmatpush2.msra.mxu0 0.0
    %1038 = vmatprep.subr.mxu0 0.0
    %1039 = vmatpush2.msra.mxu0 0.0
    %1040 = vmatprep.subr.mxu0 0.0
    %1041 = vmatpush2.msra.mxu0 0.0
    %1042 = vmatprep.subr.mxu0 0.0
    %1043 = vmatpush2.msra.mxu0 0.0
    %1044 = vmatprep.subr.mxu0 0.0
    %1045 = vmatpush2.msra.mxu0 0.0
    %1046 = vmatprep.subr.mxu0 0.0
    %1047 = vmatpush2.msra.mxu0 0.0
    %1048 = vmatprep.subr.mxu0 0.0
    %1049 = vmatpush2.msra.mxu0 0.0
    %1050 = vmatprep.mubr.f32.mxu0 0.0
    %1051 = vmatmul.mubr.f32.gmra.mxu0 %v984
    %v1052 = vpop.f32.mrf.mxu0
    %v1053 = vadd.f32 %v216, %v1052
    %v1054 = vpop.f32.mrf.mxu0
    %v1055 = vadd.f32 %v220, %v1054
    %1056 = vdwg.mxu0
    %1057 = vmatprep.subr.mxu0 0.0
    %1058 = vmatpush1.msra.mxu0 0.0
    %1059 = vmatprep.subr.mxu0 0.0
    %1060 = vmatpush1.msra.mxu0 0.0
    %1061 = vmatprep.subr.mxu0 0.0
    %1062 = vmatpush1.msra.mxu0 0.0
    %1063 = vmatprep.subr.mxu0 0.0
    %1064 = vmatpush1.msra.mxu0 0.0
    %1065 = vmatprep.subr.mxu0 0.0
    %1066 = vmatpush1.msra.mxu0 0.0
    %1067 = vmatprep.subr.mxu0 0.0
    %1068 = vmatpush1.msra.mxu0 0.0
    %1069 = vmatprep.subr.mxu0 0.0
    %1070 = vmatpush1.msra.mxu0 0.0
    %1071 = vmatprep.subr.mxu0 0.0
    %1072 = vmatpush1.msra.mxu0 0.0
    %1073 = vmatprep.subr.mxu0 0.0
    %1074 = vmatpush1.msra.mxu0 0.0
    %1075 = vmatprep.subr.mxu0 0.0
    %1076 = vmatpush1.msra.mxu0 0.0
    %1077 = vmatprep.subr.mxu0 0.0
    %1078 = vmatpush1.msra.mxu0 0.0
    %1079 = vmatprep.subr.mxu0 0.0
    %1080 = vmatpush1.msra.mxu0 0.0
    %1081 = vmatprep.subr.mxu0 0.0
    %1082 = vmatpush1.msra.mxu0 0.0
    %1083 = vmatprep.subr.mxu0 0.0
    %1084 = vmatpush1.msra.mxu0 0.0
    %1085 = vmatprep.subr.mxu0 0.0
    %1086 = vmatpush1.msra.mxu0 0.0
    %1087 = vmatprep.subr.mxu0 0.0
    %1088 = vmatpush1.msra.mxu0 %v240
    %1089 = vmatprep.subr.mxu0 0.0
    %1090 = vmatpush2.msra.mxu0 0.0
    %1091 = vmatprep.subr.mxu0 0.0
    %1092 = vmatpush2.msra.mxu0 0.0
    %1093 = vmatprep.subr.mxu0 0.0
    %1094 = vmatpush2.msra.mxu0 0.0
    %1095 = vmatprep.subr.mxu0 0.0
    %1096 = vmatpush2.msra.mxu0 0.0
    %1097 = vmatprep.subr.mxu0 0.0
    %1098 = vmatpush2.msra.mxu0 0.0
    %1099 = vmatprep.subr.mxu0 0.0
    %1100 = vmatpush2.msra.mxu0 0.0
    %1101 = vmatprep.subr.mxu0 0.0
    %1102 = vmatpush2.msra.mxu0 0.0
    %1103 = vmatprep.subr.mxu0 0.0
    %1104 = vmatpush2.msra.mxu0 0.0
    %1105 = vmatprep.subr.mxu0 0.0
    %1106 = vmatpush2.msra.mxu0 0.0
    %1107 = vmatprep.subr.mxu0 0.0
    %1108 = vmatpush2.msra.mxu0 0.0
    %1109 = vmatprep.subr.mxu0 0.0
    %1110 = vmatpush2.msra.mxu0 0.0
    %1111 = vmatprep.subr.mxu0 0.0
    %1112 = vmatpush2.msra.mxu0 0.0
    %1113 = vmatprep.subr.mxu0 0.0
    %1114 = vmatpush2.msra.mxu0 0.0
    %1115 = vmatprep.subr.mxu0 0.0
    %1116 = vmatpush2.msra.mxu0 0.0
    %1117 = vmatprep.subr.mxu0 0.0
    %1118 = vmatpush2.msra.mxu0 0.0
    %1119 = vmatprep.subr.mxu0 0.0
    %1120 = vmatpush2.msra.mxu0 0.0
    %1121 = vmatprep.mubr.f32.mxu0 0.0
    %1122 = vmatmul.mubr.f32.gmra.mxu0 %v984
    %v1123 = vpop.f32.mrf.mxu0
    %v1124 = vadd.f32 %v224, %v1123
    %v1125 = vpop.f32.mrf.mxu0
    %1126 = vdwg.mxu0
    %s1127 = scalar_lea.vmem [#allocation2], 120
    %1128 = vst [vmem:[%s1127] sm:$0xff] %v1053
    %1129 = vst [vmem:[%s1127 + $0x8] sm:$0xff] %v1055
    %1130 = vst [vmem:[%s1127 + $0x10] sm:$0xff] %v1124
    %1131 = vrot.lane.b32.xlu0 %v208, 104
    %v1132 = vpop.permute.xlu0 %1131
    %v1133 = vsel %vm231, %v1132, 0
    %1135 = vmatprep.subr.mxu0 0.0
    %1136 = vmatpush1.msra.mxu0 0.0
    %1137 = vmatprep.subr.mxu0 0.0
    %1138 = vmatpush1.msra.mxu0 0.0
    %1139 = vmatprep.subr.mxu0 0.0
    %1140 = vmatpush1.msra.mxu0 0.0
    %1141 = vmatprep.subr.mxu0 0.0
    %1142 = vmatpush1.msra.mxu0 0.0
    %1143 = vmatprep.subr.mxu0 0.0
    %1144 = vmatpush1.msra.mxu0 0.0
    %1145 = vmatprep.subr.mxu0 0.0
    %1146 = vmatpush1.msra.mxu0 0.0
    %1147 = vmatprep.subr.mxu0 0.0
    %1148 = vmatpush1.msra.mxu0 0.0
    %1149 = vmatprep.subr.mxu0 0.0
    %1150 = vmatpush1.msra.mxu0 0.0
    %1151 = vmatprep.subr.mxu0 0.0
    %1152 = vmatpush1.msra.mxu0 0.0
    %1153 = vmatprep.subr.mxu0 0.0
    %1154 = vmatpush1.msra.mxu0 0.0
    %1155 = vmatprep.subr.mxu0 0.0
    %1156 = vmatpush1.msra.mxu0 0.0
    %1157 = vmatprep.subr.mxu0 0.0
    %1158 = vmatpush1.msra.mxu0 0.0
    %1159 = vmatprep.subr.mxu0 0.0
    %1160 = vmatpush1.msra.mxu0 0.0
    %1161 = vmatprep.subr.mxu0 0.0
    %1162 = vmatpush1.msra.mxu0 0.0
    %1163 = vmatprep.subr.mxu0 0.0
    %1164 = vmatpush1.msra.mxu0 0.0
    %1165 = vmatprep.subr.mxu0 %v238
    %1166 = vmatpush1.msra.mxu0 %v236
    %1167 = vmatprep.subr.mxu0 0.0
    %1168 = vmatpush2.msra.mxu0 0.0
    %1169 = vmatprep.subr.mxu0 0.0
    %1170 = vmatpush2.msra.mxu0 0.0
    %1171 = vmatprep.subr.mxu0 0.0
    %1172 = vmatpush2.msra.mxu0 0.0
    %1173 = vmatprep.subr.mxu0 0.0
    %1174 = vmatpush2.msra.mxu0 0.0
    %1175 = vmatprep.subr.mxu0 0.0
    %1176 = vmatpush2.msra.mxu0 0.0
    %1177 = vmatprep.subr.mxu0 0.0
    %1178 = vmatpush2.msra.mxu0 0.0
    %1179 = vmatprep.subr.mxu0 0.0
    %1180 = vmatpush2.msra.mxu0 0.0
    %1181 = vmatprep.subr.mxu0 0.0
    %1182 = vmatpush2.msra.mxu0 0.0
    %1183 = vmatprep.subr.mxu0 0.0
    %1184 = vmatpush2.msra.mxu0 0.0
    %1185 = vmatprep.subr.mxu0 0.0
    %1186 = vmatpush2.msra.mxu0 0.0
    %1187 = vmatprep.subr.mxu0 0.0
    %1188 = vmatpush2.msra.mxu0 0.0
    %1189 = vmatprep.subr.mxu0 0.0
    %1190 = vmatpush2.msra.mxu0 0.0
    %1191 = vmatprep.subr.mxu0 0.0
    %1192 = vmatpush2.msra.mxu0 0.0
    %1193 = vmatprep.subr.mxu0 0.0
    %1194 = vmatpush2.msra.mxu0 0.0
    %1195 = vmatprep.subr.mxu0 0.0
    %1196 = vmatpush2.msra.mxu0 0.0
    %1197 = vmatprep.subr.mxu0 0.0
    %1198 = vmatpush2.msra.mxu0 0.0
    %1199 = vmatprep.mubr.f32.mxu0 0.0
    %1200 = vmatmul.mubr.f32.gmra.mxu0 %v1133
    %v1201 = vpop.f32.mrf.mxu0
    %v1202 = vadd.f32 %v216, %v1201
    %v1203 = vpop.f32.mrf.mxu0
    %v1204 = vadd.f32 %v220, %v1203
    %1205 = vdwg.mxu0
    %1206 = vmatprep.subr.mxu0 0.0
    %1207 = vmatpush1.msra.mxu0 0.0
    %1208 = vmatprep.subr.mxu0 0.0
    %1209 = vmatpush1.msra.mxu0 0.0
    %1210 = vmatprep.subr.mxu0 0.0
    %1211 = vmatpush1.msra.mxu0 0.0
    %1212 = vmatprep.subr.mxu0 0.0
    %1213 = vmatpush1.msra.mxu0 0.0
    %1214 = vmatprep.subr.mxu0 0.0
    %1215 = vmatpush1.msra.mxu0 0.0
    %1216 = vmatprep.subr.mxu0 0.0
    %1217 = vmatpush1.msra.mxu0 0.0
    %1218 = vmatprep.subr.mxu0 0.0
    %1219 = vmatpush1.msra.mxu0 0.0
    %1220 = vmatprep.subr.mxu0 0.0
    %1221 = vmatpush1.msra.mxu0 0.0
    %1222 = vmatprep.subr.mxu0 0.0
    %1223 = vmatpush1.msra.mxu0 0.0
    %1224 = vmatprep.subr.mxu0 0.0
    %1225 = vmatpush1.msra.mxu0 0.0
    %1226 = vmatprep.subr.mxu0 0.0
    %1227 = vmatpush1.msra.mxu0 0.0
    %1228 = vmatprep.subr.mxu0 0.0
    %1229 = vmatpush1.msra.mxu0 0.0
    %1230 = vmatprep.subr.mxu0 0.0
    %1231 = vmatpush1.msra.mxu0 0.0
    %1232 = vmatprep.subr.mxu0 0.0
    %1233 = vmatpush1.msra.mxu0 0.0
    %1234 = vmatprep.subr.mxu0 0.0
    %1235 = vmatpush1.msra.mxu0 0.0
    %1236 = vmatprep.subr.mxu0 0.0
    %1237 = vmatpush1.msra.mxu0 %v240
    %1238 = vmatprep.subr.mxu0 0.0
    %1239 = vmatpush2.msra.mxu0 0.0
    %1240 = vmatprep.subr.mxu0 0.0
    %1241 = vmatpush2.msra.mxu0 0.0
    %1242 = vmatprep.subr.mxu0 0.0
    %1243 = vmatpush2.msra.mxu0 0.0
    %1244 = vmatprep.subr.mxu0 0.0
    %1245 = vmatpush2.msra.mxu0 0.0
    %1246 = vmatprep.subr.mxu0 0.0
    %1247 = vmatpush2.msra.mxu0 0.0
    %1248 = vmatprep.subr.mxu0 0.0
    %1249 = vmatpush2.msra.mxu0 0.0
    %1250 = vmatprep.subr.mxu0 0.0
    %1251 = vmatpush2.msra.mxu0 0.0
    %1252 = vmatprep.subr.mxu0 0.0
    %1253 = vmatpush2.msra.mxu0 0.0
    %1254 = vmatprep.subr.mxu0 0.0
    %1255 = vmatpush2.msra.mxu0 0.0
    %1256 = vmatprep.subr.mxu0 0.0
    %1257 = vmatpush2.msra.mxu0 0.0
    %1258 = vmatprep.subr.mxu0 0.0
    %1259 = vmatpush2.msra.mxu0 0.0
    %1260 = vmatprep.subr.mxu0 0.0
    %1261 = vmatpush2.msra.mxu0 0.0
    %1262 = vmatprep.subr.mxu0 0.0
    %1263 = vmatpush2.msra.mxu0 0.0
    %1264 = vmatprep.subr.mxu0 0.0
    %1265 = vmatpush2.msra.mxu0 0.0
    %1266 = vmatprep.subr.mxu0 0.0
    %1267 = vmatpush2.msra.mxu0 0.0
    %1268 = vmatprep.subr.mxu0 0.0
    %1269 = vmatpush2.msra.mxu0 0.0
    %1270 = vmatprep.mubr.f32.mxu0 0.0
    %1271 = vmatmul.mubr.f32.gmra.mxu0 %v1133
    %v1272 = vpop.f32.mrf.mxu0
    %v1273 = vadd.f32 %v224, %v1272
    %v1274 = vpop.f32.mrf.mxu0
    %1275 = vdwg.mxu0
    %s1276 = scalar_lea.vmem [#allocation2], 144
    %1277 = vst [vmem:[%s1276] sm:$0xff] %v1202
    %1278 = vst [vmem:[%s1276 + $0x8] sm:$0xff] %v1204
    %1279 = vst [vmem:[%s1276 + $0x10] sm:$0xff] %v1273
    %1280 = vrot.lane.b32.xlu0 %v208, 100
    %v1281 = vpop.permute.xlu0 %1280
    %v1282 = vsel %vm231, %v1281, 0
    %1284 = vmatprep.subr.mxu0 0.0
    %1285 = vmatpush1.msra.mxu0 0.0
    %1286 = vmatprep.subr.mxu0 0.0
    %1287 = vmatpush1.msra.mxu0 0.0
    %1288 = vmatprep.subr.mxu0 0.0
    %1289 = vmatpush1.msra.mxu0 0.0
    %1290 = vmatprep.subr.mxu0 0.0
    %1291 = vmatpush1.msra.mxu0 0.0
    %1292 = vmatprep.subr.mxu0 0.0
    %1293 = vmatpush1.msra.mxu0 0.0
    %1294 = vmatprep.subr.mxu0 0.0
    %1295 = vmatpush1.msra.mxu0 0.0
    %1296 = vmatprep.subr.mxu0 0.0
    %1297 = vmatpush1.msra.mxu0 0.0
    %1298 = vmatprep.subr.mxu0 0.0
    %1299 = vmatpush1.msra.mxu0 0.0
    %1300 = vmatprep.subr.mxu0 0.0
    %1301 = vmatpush1.msra.mxu0 0.0
    %1302 = vmatprep.subr.mxu0 0.0
    %1303 = vmatpush1.msra.mxu0 0.0
    %1304 = vmatprep.subr.mxu0 0.0
    %1305 = vmatpush1.msra.mxu0 0.0
    %1306 = vmatprep.subr.mxu0 0.0
    %1307 = vmatpush1.msra.mxu0 0.0
    %1308 = vmatprep.subr.mxu0 0.0
    %1309 = vmatpush1.msra.mxu0 0.0
    %1310 = vmatprep.subr.mxu0 0.0
    %1311 = vmatpush1.msra.mxu0 0.0
    %1312 = vmatprep.subr.mxu0 0.0
    %1313 = vmatpush1.msra.mxu0 0.0
    %1314 = vmatprep.subr.mxu0 %v238
    %1315 = vmatpush1.msra.mxu0 %v236
    %1316 = vmatprep.subr.mxu0 0.0
    %1317 = vmatpush2.msra.mxu0 0.0
    %1318 = vmatprep.subr.mxu0 0.0
    %1319 = vmatpush2.msra.mxu0 0.0
    %1320 = vmatprep.subr.mxu0 0.0
    %1321 = vmatpush2.msra.mxu0 0.0
    %1322 = vmatprep.subr.mxu0 0.0
    %1323 = vmatpush2.msra.mxu0 0.0
    %1324 = vmatprep.subr.mxu0 0.0
    %1325 = vmatpush2.msra.mxu0 0.0
    %1326 = vmatprep.subr.mxu0 0.0
    %1327 = vmatpush2.msra.mxu0 0.0
    %1328 = vmatprep.subr.mxu0 0.0
    %1329 = vmatpush2.msra.mxu0 0.0
    %1330 = vmatprep.subr.mxu0 0.0
    %1331 = vmatpush2.msra.mxu0 0.0
    %1332 = vmatprep.subr.mxu0 0.0
    %1333 = vmatpush2.msra.mxu0 0.0
    %1334 = vmatprep.subr.mxu0 0.0
    %1335 = vmatpush2.msra.mxu0 0.0
    %1336 = vmatprep.subr.mxu0 0.0
    %1337 = vmatpush2.msra.mxu0 0.0
    %1338 = vmatprep.subr.mxu0 0.0
    %1339 = vmatpush2.msra.mxu0 0.0
    %1340 = vmatprep.subr.mxu0 0.0
    %1341 = vmatpush2.msra.mxu0 0.0
    %1342 = vmatprep.subr.mxu0 0.0
    %1343 = vmatpush2.msra.mxu0 0.0
    %1344 = vmatprep.subr.mxu0 0.0
    %1345 = vmatpush2.msra.mxu0 0.0
    %1346 = vmatprep.subr.mxu0 0.0
    %1347 = vmatpush2.msra.mxu0 0.0
    %1348 = vmatprep.mubr.f32.mxu0 0.0
    %1349 = vmatmul.mubr.f32.gmra.mxu0 %v1282
    %v1350 = vpop.f32.mrf.mxu0
    %v1351 = vadd.f32 %v216, %v1350
    %v1352 = vpop.f32.mrf.mxu0
    %v1353 = vadd.f32 %v220, %v1352
    %1354 = vdwg.mxu0
    %1355 = vmatprep.subr.mxu0 0.0
    %1356 = vmatpush1.msra.mxu0 0.0
    %1357 = vmatprep.subr.mxu0 0.0
    %1358 = vmatpush1.msra.mxu0 0.0
    %1359 = vmatprep.subr.mxu0 0.0
    %1360 = vmatpush1.msra.mxu0 0.0
    %1361 = vmatprep.subr.mxu0 0.0
    %1362 = vmatpush1.msra.mxu0 0.0
    %1363 = vmatprep.subr.mxu0 0.0
    %1364 = vmatpush1.msra.mxu0 0.0
    %1365 = vmatprep.subr.mxu0 0.0
    %1366 = vmatpush1.msra.mxu0 0.0
    %1367 = vmatprep.subr.mxu0 0.0
    %1368 = vmatpush1.msra.mxu0 0.0
    %1369 = vmatprep.subr.mxu0 0.0
    %1370 = vmatpush1.msra.mxu0 0.0
    %1371 = vmatprep.subr.mxu0 0.0
    %1372 = vmatpush1.msra.mxu0 0.0
    %1373 = vmatprep.subr.mxu0 0.0
    %1374 = vmatpush1.msra.mxu0 0.0
    %1375 = vmatprep.subr.mxu0 0.0
    %1376 = vmatpush1.msra.mxu0 0.0
    %1377 = vmatprep.subr.mxu0 0.0
    %1378 = vmatpush1.msra.mxu0 0.0
    %1379 = vmatprep.subr.mxu0 0.0
    %1380 = vmatpush1.msra.mxu0 0.0
    %1381 = vmatprep.subr.mxu0 0.0
    %1382 = vmatpush1.msra.mxu0 0.0
    %1383 = vmatprep.subr.mxu0 0.0
    %1384 = vmatpush1.msra.mxu0 0.0
    %1385 = vmatprep.subr.mxu0 0.0
    %1386 = vmatpush1.msra.mxu0 %v240
    %1387 = vmatprep.subr.mxu0 0.0
    %1388 = vmatpush2.msra.mxu0 0.0
    %1389 = vmatprep.subr.mxu0 0.0
    %1390 = vmatpush2.msra.mxu0 0.0
    %1391 = vmatprep.subr.mxu0 0.0
    %1392 = vmatpush2.msra.mxu0 0.0
    %1393 = vmatprep.subr.mxu0 0.0
    %1394 = vmatpush2.msra.mxu0 0.0
    %1395 = vmatprep.subr.mxu0 0.0
    %1396 = vmatpush2.msra.mxu0 0.0
    %1397 = vmatprep.subr.mxu0 0.0
    %1398 = vmatpush2.msra.mxu0 0.0
    %1399 = vmatprep.subr.mxu0 0.0
    %1400 = vmatpush2.msra.mxu0 0.0
    %1401 = vmatprep.subr.mxu0 0.0
    %1402 = vmatpush2.msra.mxu0 0.0
    %1403 = vmatprep.subr.mxu0 0.0
    %1404 = vmatpush2.msra.mxu0 0.0
    %1405 = vmatprep.subr.mxu0 0.0
    %1406 = vmatpush2.msra.mxu0 0.0
    %1407 = vmatprep.subr.mxu0 0.0
    %1408 = vmatpush2.msra.mxu0 0.0
    %1409 = vmatprep.subr.mxu0 0.0
    %1410 = vmatpush2.msra.mxu0 0.0
    %1411 = vmatprep.subr.mxu0 0.0
    %1412 = vmatpush2.msra.mxu0 0.0
    %1413 = vmatprep.subr.mxu0 0.0
    %1414 = vmatpush2.msra.mxu0 0.0
    %1415 = vmatprep.subr.mxu0 0.0
    %1416 = vmatpush2.msra.mxu0 0.0
    %1417 = vmatprep.subr.mxu0 0.0
    %1418 = vmatpush2.msra.mxu0 0.0
    %1419 = vmatprep.mubr.f32.mxu0 0.0
    %1420 = vmatmul.mubr.f32.gmra.mxu0 %v1282
    %v1421 = vpop.f32.mrf.mxu0
    %v1422 = vadd.f32 %v224, %v1421
    %v1423 = vpop.f32.mrf.mxu0
    %1424 = vdwg.mxu0
    %s1425 = scalar_lea.vmem [#allocation2], 168
    %1426 = vst [vmem:[%s1425] sm:$0xff] %v1351
    %1427 = vst [vmem:[%s1425 + $0x8] sm:$0xff] %v1353
    %1428 = vst [vmem:[%s1425 + $0x10] sm:$0xff] %v1422
    %v1429 = vld [vmem:[%s3] sm:$0xff]
    %v1430 = vld [vmem:[%s3 + $0x8] sm:$0xff]
    %v1431 = vld [vmem:[%s3 + $0x10] sm:$0xff]
    %v1432 = vld [vmem:[%s3 + $0x18] sm:$0xff]
    %v1433 = vld [vmem:[%s3 + $0x20] sm:$0xff]
    %v1434 = vld [vmem:[%s3 + $0x28] sm:$0xff]
    %v1435 = vld [vmem:[%s3 + $0x30] sm:$0xff]
    %v1436 = vld [vmem:[%s3 + $0x38] sm:$0xff]
    %v1437 = vld [vmem:[%s3 + $0x40] sm:$0xff]
    %v1438 = vld [vmem:[%s3 + $0x48] sm:$0xff]
    %v1439 = vld [vmem:[%s3 + $0x50] sm:$0xff]
    %v1440 = vld [vmem:[%s3 + $0x58] sm:$0xff]
    %v1441 = vld [vmem:[#allocation9] sm:$0x7]
    %v1442 = vld [vmem:[#allocation2] sm:$0xff]
    %v1443 = vld [vmem:[#allocation2 + $0x8] sm:$0xff]
    %v1444 = vld [vmem:[#allocation2 + $0x10] sm:$0xff]
    %v1446 = vlaneseq
    %v1447 = vshrl.u32 %v1446, 7
    %v1448 = vsub.s32 0, %v1447
    %v1449 = vrot.slane %v1441, %v1448
    %v1450 = vlaneseq
    %v1451 = vshrl.u32 %v1450, 7
    %v1452 = vsub.s32 1, %v1451
    %v1453 = vrot.slane %v1441, %v1452
    %v1454 = vlaneseq
    %v1455 = vshrl.u32 %v1454, 7
    %v1456 = vsub.s32 2, %v1455
    %v1457 = vrot.slane %v1441, %v1456
    %vm1461 = vcmask 261120
    %v1463 = vsel %vm1461, 0.0, 0
    %1465 = vmatprep.subr.mxu0 0.0
    %1466 = vmatpush1.msra.mxu0 0.0
    %1467 = vmatprep.subr.mxu0 0.0
    %1468 = vmatpush1.msra.mxu0 0.0
    %1469 = vmatprep.subr.mxu0 0.0
    %1470 = vmatpush1.msra.mxu0 0.0
    %1471 = vmatprep.subr.mxu0 0.0
    %1472 = vmatpush1.msra.mxu0 0.0
    %1473 = vmatprep.subr.mxu0 0.0
    %1474 = vmatpush1.msra.mxu0 0.0
    %1475 = vmatprep.subr.mxu0 0.0
    %1476 = vmatpush1.msra.mxu0 0.0
    %1477 = vmatprep.subr.mxu0 0.0
    %1478 = vmatpush1.msra.mxu0 0.0
    %1479 = vmatprep.subr.mxu0 0.0
    %1480 = vmatpush1.msra.mxu0 0.0
    %1481 = vmatprep.subr.mxu0 0.0
    %1482 = vmatpush1.msra.mxu0 0.0
    %1483 = vmatprep.subr.mxu0 0.0
    %1484 = vmatpush1.msra.mxu0 0.0
    %1485 = vmatprep.subr.mxu0 0.0
    %1486 = vmatpush1.msra.mxu0 0.0
    %1487 = vmatprep.subr.mxu0 0.0
    %1488 = vmatpush1.msra.mxu0 0.0
    %1489 = vmatprep.subr.mxu0 %v1439
    %1490 = vmatpush1.msra.mxu0 %v1438
    %1491 = vmatprep.subr.mxu0 %v1436
    %1492 = vmatpush1.msra.mxu0 %v1435
    %1493 = vmatprep.subr.mxu0 %v1433
    %1494 = vmatpush1.msra.mxu0 %v1432
    %1495 = vmatprep.subr.mxu0 %v1430
    %1496 = vmatpush1.msra.mxu0 %v1429
    %1497 = vmatprep.subr.mxu0 0.0
    %1498 = vmatpush2.msra.mxu0 0.0
    %1499 = vmatprep.subr.mxu0 0.0
    %1500 = vmatpush2.msra.mxu0 0.0
    %1501 = vmatprep.subr.mxu0 0.0
    %1502 = vmatpush2.msra.mxu0 0.0
    %1503 = vmatprep.subr.mxu0 0.0
    %1504 = vmatpush2.msra.mxu0 0.0
    %1505 = vmatprep.subr.mxu0 0.0
    %1506 = vmatpush2.msra.mxu0 0.0
    %1507 = vmatprep.subr.mxu0 0.0
    %1508 = vmatpush2.msra.mxu0 0.0
    %1509 = vmatprep.subr.mxu0 0.0
    %1510 = vmatpush2.msra.mxu0 0.0
    %1511 = vmatprep.subr.mxu0 0.0
    %1512 = vmatpush2.msra.mxu0 0.0
    %1513 = vmatprep.subr.mxu0 0.0
    %1514 = vmatpush2.msra.mxu0 0.0
    %1515 = vmatprep.subr.mxu0 0.0
    %1516 = vmatpush2.msra.mxu0 0.0
    %1517 = vmatprep.subr.mxu0 0.0
    %1518 = vmatpush2.msra.mxu0 0.0
    %1519 = vmatprep.subr.mxu0 0.0
    %1520 = vmatpush2.msra.mxu0 0.0
    %1521 = vmatprep.subr.mxu0 0.0
    %1522 = vmatpush2.msra.mxu0 0.0
    %1523 = vmatprep.subr.mxu0 0.0
    %1524 = vmatpush2.msra.mxu0 0.0
    %1525 = vmatprep.subr.mxu0 0.0
    %1526 = vmatpush2.msra.mxu0 0.0
    %1527 = vmatprep.subr.mxu0 0.0
    %1528 = vmatpush2.msra.mxu0 0.0
    %1529 = vmatprep.mubr.f32.mxu0 0.0
    %1530 = vmatmul.mubr.f32.gmra.mxu0 %v1463
    %v1531 = vpop.f32.mrf.mxu0
    %v1532 = vadd.f32 %v1449, %v1531
    %v1533 = vpop.f32.mrf.mxu0
    %v1534 = vadd.f32 %v1453, %v1533
    %1535 = vdwg.mxu0
    %1536 = vmatprep.subr.mxu0 0.0
    %1537 = vmatpush1.msra.mxu0 0.0
    %1538 = vmatprep.subr.mxu0 0.0
    %1539 = vmatpush1.msra.mxu0 0.0
    %1540 = vmatprep.subr.mxu0 0.0
    %1541 = vmatpush1.msra.mxu0 0.0
    %1542 = vmatprep.subr.mxu0 0.0
    %1543 = vmatpush1.msra.mxu0 0.0
    %1544 = vmatprep.subr.mxu0 0.0
    %1545 = vmatpush1.msra.mxu0 0.0
    %1546 = vmatprep.subr.mxu0 0.0
    %1547 = vmatpush1.msra.mxu0 0.0
    %1548 = vmatprep.subr.mxu0 0.0
    %1549 = vmatpush1.msra.mxu0 0.0
    %1550 = vmatprep.subr.mxu0 0.0
    %1551 = vmatpush1.msra.mxu0 0.0
    %1552 = vmatprep.subr.mxu0 0.0
    %1553 = vmatpush1.msra.mxu0 0.0
    %1554 = vmatprep.subr.mxu0 0.0
    %1555 = vmatpush1.msra.mxu0 0.0
    %1556 = vmatprep.subr.mxu0 0.0
    %1557 = vmatpush1.msra.mxu0 0.0
    %1558 = vmatprep.subr.mxu0 0.0
    %1559 = vmatpush1.msra.mxu0 0.0
    %1560 = vmatprep.subr.mxu0 0.0
    %1561 = vmatpush1.msra.mxu0 %v1440
    %1562 = vmatprep.subr.mxu0 0.0
    %1563 = vmatpush1.msra.mxu0 %v1437
    %1564 = vmatprep.subr.mxu0 0.0
    %1565 = vmatpush1.msra.mxu0 %v1434
    %1566 = vmatprep.subr.mxu0 0.0
    %1567 = vmatpush1.msra.mxu0 %v1431
    %1568 = vmatprep.subr.mxu0 0.0
    %1569 = vmatpush2.msra.mxu0 0.0
    %1570 = vmatprep.subr.mxu0 0.0
    %1571 = vmatpush2.msra.mxu0 0.0
    %1572 = vmatprep.subr.mxu0 0.0
    %1573 = vmatpush2.msra.mxu0 0.0
    %1574 = vmatprep.subr.mxu0 0.0
    %1575 = vmatpush2.msra.mxu0 0.0
    %1576 = vmatprep.subr.mxu0 0.0
    %1577 = vmatpush2.msra.mxu0 0.0
    %1578 = vmatprep.subr.mxu0 0.0
    %1579 = vmatpush2.msra.mxu0 0.0
    %1580 = vmatprep.subr.mxu0 0.0
    %1581 = vmatpush2.msra.mxu0 0.0
    %1582 = vmatprep.subr.mxu0 0.0
    %1583 = vmatpush2.msra.mxu0 0.0
    %1584 = vmatprep.subr.mxu0 0.0
    %1585 = vmatpush2.msra.mxu0 0.0
    %1586 = vmatprep.subr.mxu0 0.0
    %1587 = vmatpush2.msra.mxu0 0.0
    %1588 = vmatprep.subr.mxu0 0.0
    %1589 = vmatpush2.msra.mxu0 0.0
    %1590 = vmatprep.subr.mxu0 0.0
    %1591 = vmatpush2.msra.mxu0 0.0
    %1592 = vmatprep.subr.mxu0 0.0
    %1593 = vmatpush2.msra.mxu0 0.0
    %1594 = vmatprep.subr.mxu0 0.0
    %1595 = vmatpush2.msra.mxu0 0.0
    %1596 = vmatprep.subr.mxu0 0.0
    %1597 = vmatpush2.msra.mxu0 0.0
    %1598 = vmatprep.subr.mxu0 0.0
    %1599 = vmatpush2.msra.mxu0 0.0
    %1600 = vmatprep.mubr.f32.mxu0 0.0
    %1601 = vmatmul.mubr.f32.gmra.mxu0 %v1463
    %v1602 = vpop.f32.mrf.mxu0
    %v1603 = vadd.f32 %v1457, %v1602
    %v1604 = vpop.f32.mrf.mxu0
    %1605 = vdwg.mxu0
    %v1606 = vadd.f32 %v1442, %v1532
    %v1607 = vxor.u32 %v1606, 2147483648
    %v1608 = vmul.f32 %v1607, 1.442695
    %v1609 = vpow.pop %v1608
    %v1610 = vadd.f32 %v1609, 1.0
    %v1611 = vrcp.pop %v1610
    %v1612 = vmul.f32 1.0, %v1611
    %v1613 = vadd.f32 %v1443, %v1534
    %v1614 = vxor.u32 %v1613, 2147483648
    %v1615 = vmul.f32 %v1614, 1.442695
    %v1616 = vpow.pop %v1615
    %v1617 = vadd.f32 %v1616, 1.0
    %v1618 = vrcp.pop %v1617
    %v1619 = vmul.f32 1.0, %v1618
    %v1620 = vmul.f32 %v1612, %v1603
    %v1621 = vadd.f32 %v1444, %v1620
    %v1622 = vtanh.pop %v1621
    %v1623 = vsub.f32 1.0, %v1619
    %v1624 = vmul.f32 %v1623, %v1622
    %v1625 = vmul.f32 %v1619, 0.0
    %v1626 = vadd.f32 %v1624, %v1625
    %1627 = vst [vmem:[#allocation3] sm:$0xff] %v1626
    %v1628 = vld [vmem:[%s531] sm:$0xff]
    %v1629 = vld [vmem:[%s531 + $0x8] sm:$0xff]
    %v1630 = vld [vmem:[%s531 + $0x10] sm:$0xff]
    %v1632 = vsel %vm1461, %v1626, 0
    %1634 = vmatprep.subr.mxu0 0.0
    %1635 = vmatpush1.msra.mxu0 0.0
    %1636 = vmatprep.subr.mxu0 0.0
    %1637 = vmatpush1.msra.mxu0 0.0
    %1638 = vmatprep.subr.mxu0 0.0
    %1639 = vmatpush1.msra.mxu0 0.0
    %1640 = vmatprep.subr.mxu0 0.0
    %1641 = vmatpush1.msra.mxu0 0.0
    %1642 = vmatprep.subr.mxu0 0.0
    %1643 = vmatpush1.msra.mxu0 0.0
    %1644 = vmatprep.subr.mxu0 0.0
    %1645 = vmatpush1.msra.mxu0 0.0
    %1646 = vmatprep.subr.mxu0 0.0
    %1647 = vmatpush1.msra.mxu0 0.0
    %1648 = vmatprep.subr.mxu0 0.0
    %1649 = vmatpush1.msra.mxu0 0.0
    %1650 = vmatprep.subr.mxu0 0.0
    %1651 = vmatpush1.msra.mxu0 0.0
    %1652 = vmatprep.subr.mxu0 0.0
    %1653 = vmatpush1.msra.mxu0 0.0
    %1654 = vmatprep.subr.mxu0 0.0
    %1655 = vmatpush1.msra.mxu0 0.0
    %1656 = vmatprep.subr.mxu0 0.0
    %1657 = vmatpush1.msra.mxu0 0.0
    %1658 = vmatprep.subr.mxu0 %v1439
    %1659 = vmatpush1.msra.mxu0 %v1438
    %1660 = vmatprep.subr.mxu0 %v1436
    %1661 = vmatpush1.msra.mxu0 %v1435
    %1662 = vmatprep.subr.mxu0 %v1433
    %1663 = vmatpush1.msra.mxu0 %v1432
    %1664 = vmatprep.subr.mxu0 %v1430
    %1665 = vmatpush1.msra.mxu0 %v1429
    %1666 = vmatprep.subr.mxu0 0.0
    %1667 = vmatpush2.msra.mxu0 0.0
    %1668 = vmatprep.subr.mxu0 0.0
    %1669 = vmatpush2.msra.mxu0 0.0
    %1670 = vmatprep.subr.mxu0 0.0
    %1671 = vmatpush2.msra.mxu0 0.0
    %1672 = vmatprep.subr.mxu0 0.0
    %1673 = vmatpush2.msra.mxu0 0.0
    %1674 = vmatprep.subr.mxu0 0.0
    %1675 = vmatpush2.msra.mxu0 0.0
    %1676 = vmatprep.subr.mxu0 0.0
    %1677 = vmatpush2.msra.mxu0 0.0
    %1678 = vmatprep.subr.mxu0 0.0
    %1679 = vmatpush2.msra.mxu0 0.0
    %1680 = vmatprep.subr.mxu0 0.0
    %1681 = vmatpush2.msra.mxu0 0.0
    %1682 = vmatprep.subr.mxu0 0.0
    %1683 = vmatpush2.msra.mxu0 0.0
    %1684 = vmatprep.subr.mxu0 0.0
    %1685 = vmatpush2.msra.mxu0 0.0
    %1686 = vmatprep.subr.mxu0 0.0
    %1687 = vmatpush2.msra.mxu0 0.0
    %1688 = vmatprep.subr.mxu0 0.0
    %1689 = vmatpush2.msra.mxu0 0.0
    %1690 = vmatprep.subr.mxu0 0.0
    %1691 = vmatpush2.msra.mxu0 0.0
    %1692 = vmatprep.subr.mxu0 0.0
    %1693 = vmatpush2.msra.mxu0 0.0
    %1694 = vmatprep.subr.mxu0 0.0
    %1695 = vmatpush2.msra.mxu0 0.0
    %1696 = vmatprep.subr.mxu0 0.0
    %1697 = vmatpush2.msra.mxu0 0.0
    %1698 = vmatprep.mubr.f32.mxu0 0.0
    %1699 = vmatmul.mubr.f32.gmra.mxu0 %v1632
    %v1700 = vpop.f32.mrf.mxu0
    %v1701 = vadd.f32 %v1449, %v1700
    %v1702 = vpop.f32.mrf.mxu0
    %v1703 = vadd.f32 %v1453, %v1702
    %1704 = vdwg.mxu0
    %1705 = vmatprep.subr.mxu0 0.0
    %1706 = vmatpush1.msra.mxu0 0.0
    %1707 = vmatprep.subr.mxu0 0.0
    %1708 = vmatpush1.msra.mxu0 0.0
    %1709 = vmatprep.subr.mxu0 0.0
    %1710 = vmatpush1.msra.mxu0 0.0
    %1711 = vmatprep.subr.mxu0 0.0
    %1712 = vmatpush1.msra.mxu0 0.0
    %1713 = vmatprep.subr.mxu0 0.0
    %1714 = vmatpush1.msra.mxu0 0.0
    %1715 = vmatprep.subr.mxu0 0.0
    %1716 = vmatpush1.msra.mxu0 0.0
    %1717 = vmatprep.subr.mxu0 0.0
    %1718 = vmatpush1.msra.mxu0 0.0
    %1719 = vmatprep.subr.mxu0 0.0
    %1720 = vmatpush1.msra.mxu0 0.0
    %1721 = vmatprep.subr.mxu0 0.0
    %1722 = vmatpush1.msra.mxu0 0.0
    %1723 = vmatprep.subr.mxu0 0.0
    %1724 = vmatpush1.msra.mxu0 0.0
    %1725 = vmatprep.subr.mxu0 0.0
    %1726 = vmatpush1.msra.mxu0 0.0
    %1727 = vmatprep.subr.mxu0 0.0
    %1728 = vmatpush1.msra.mxu0 0.0
    %1729 = vmatprep.subr.mxu0 0.0
    %1730 = vmatpush1.msra.mxu0 %v1440
    %1731 = vmatprep.subr.mxu0 0.0
    %1732 = vmatpush1.msra.mxu0 %v1437
    %1733 = vmatprep.subr.mxu0 0.0
    %1734 = vmatpush1.msra.mxu0 %v1434
    %1735 = vmatprep.subr.mxu0 0.0
    %1736 = vmatpush1.msra.mxu0 %v1431
    %1737 = vmatprep.subr.mxu0 0.0
    %1738 = vmatpush2.msra.mxu0 0.0
    %1739 = vmatprep.subr.mxu0 0.0
    %1740 = vmatpush2.msra.mxu0 0.0
    %1741 = vmatprep.subr.mxu0 0.0
    %1742 = vmatpush2.msra.mxu0 0.0
    %1743 = vmatprep.subr.mxu0 0.0
    %1744 = vmatpush2.msra.mxu0 0.0
    %1745 = vmatprep.subr.mxu0 0.0
    %1746 = vmatpush2.msra.mxu0 0.0
    %1747 = vmatprep.subr.mxu0 0.0
    %1748 = vmatpush2.msra.mxu0 0.0
    %1749 = vmatprep.subr.mxu0 0.0
    %1750 = vmatpush2.msra.mxu0 0.0
    %1751 = vmatprep.subr.mxu0 0.0
    %1752 = vmatpush2.msra.mxu0 0.0
    %1753 = vmatprep.subr.mxu0 0.0
    %1754 = vmatpush2.msra.mxu0 0.0
    %1755 = vmatprep.subr.mxu0 0.0
    %1756 = vmatpush2.msra.mxu0 0.0
    %1757 = vmatprep.subr.mxu0 0.0
    %1758 = vmatpush2.msra.mxu0 0.0
    %1759 = vmatprep.subr.mxu0 0.0
    %1760 = vmatpush2.msra.mxu0 0.0
    %1761 = vmatprep.subr.mxu0 0.0
    %1762 = vmatpush2.msra.mxu0 0.0
    %1763 = vmatprep.subr.mxu0 0.0
    %1764 = vmatpush2.msra.mxu0 0.0
    %1765 = vmatprep.subr.mxu0 0.0
    %1766 = vmatpush2.msra.mxu0 0.0
    %1767 = vmatprep.subr.mxu0 0.0
    %1768 = vmatpush2.msra.mxu0 0.0
    %1769 = vmatprep.mubr.f32.mxu0 0.0
    %1770 = vmatmul.mubr.f32.gmra.mxu0 %v1632
    %v1771 = vpop.f32.mrf.mxu0
    %v1772 = vadd.f32 %v1457, %v1771
    %v1773 = vpop.f32.mrf.mxu0
    %1774 = vdwg.mxu0
    %v1775 = vadd.f32 %v1628, %v1701
    %v1776 = vxor.u32 %v1775, 2147483648
    %v1777 = vmul.f32 %v1776, 1.442695
    %v1778 = vpow.pop %v1777
    %v1779 = vadd.f32 %v1778, 1.0
    %v1780 = vrcp.pop %v1779
    %v1781 = vmul.f32 1.0, %v1780
    %v1782 = vadd.f32 %v1629, %v1703
    %v1783 = vxor.u32 %v1782, 2147483648
    %v1784 = vmul.f32 %v1783, 1.442695
    %v1785 = vpow.pop %v1784
    %v1786 = vadd.f32 %v1785, 1.0
    %v1787 = vrcp.pop %v1786
    %v1788 = vmul.f32 1.0, %v1787
    %v1789 = vmul.f32 %v1781, %v1772
    %v1790 = vadd.f32 %v1630, %v1789
    %v1791 = vtanh.pop %v1790
    %v1792 = vsub.f32 1.0, %v1788
    %v1793 = vmul.f32 %v1792, %v1791
    %v1794 = vmul.f32 %v1788, %v1626
    %v1795 = vadd.f32 %v1793, %v1794
    %s1796 = scalar_lea.vmem [#allocation3], 8
    %1797 = vst [vmem:[%s1796] sm:$0xff] %v1795
    %v1798 = vld [vmem:[%s680] sm:$0xff]
    %v1799 = vld [vmem:[%s680 + $0x8] sm:$0xff]
    %v1800 = vld [vmem:[%s680 + $0x10] sm:$0xff]
    %v1802 = vsel %vm1461, %v1795, 0
    %1804 = vmatprep.subr.mxu0 0.0
    %1805 = vmatpush1.msra.mxu0 0.0
    %1806 = vmatprep.subr.mxu0 0.0
    %1807 = vmatpush1.msra.mxu0 0.0
    %1808 = vmatprep.subr.mxu0 0.0
    %1809 = vmatpush1.msra.mxu0 0.0
    %1810 = vmatprep.subr.mxu0 0.0
    %1811 = vmatpush1.msra.mxu0 0.0
    %1812 = vmatprep.subr.mxu0 0.0
    %1813 = vmatpush1.msra.mxu0 0.0
    %1814 = vmatprep.subr.mxu0 0.0
    %1815 = vmatpush1.msra.mxu0 0.0
    %1816 = vmatprep.subr.mxu0 0.0
    %1817 = vmatpush1.msra.mxu0 0.0
    %1818 = vmatprep.subr.mxu0 0.0
    %1819 = vmatpush1.msra.mxu0 0.0
    %1820 = vmatprep.subr.mxu0 0.0
    %1821 = vmatpush1.msra.mxu0 0.0
    %1822 = vmatprep.subr.mxu0 0.0
    %1823 = vmatpush1.msra.mxu0 0.0
    %1824 = vmatprep.subr.mxu0 0.0
    %1825 = vmatpush1.msra.mxu0 0.0
    %1826 = vmatprep.subr.mxu0 0.0
    %1827 = vmatpush1.msra.mxu0 0.0
    %1828 = vmatprep.subr.mxu0 %v1439
    %1829 = vmatpush1.msra.mxu0 %v1438
    %1830 = vmatprep.subr.mxu0 %v1436
    %1831 = vmatpush1.msra.mxu0 %v1435
    %1832 = vmatprep.subr.mxu0 %v1433
    %1833 = vmatpush1.msra.mxu0 %v1432
    %1834 = vmatprep.subr.mxu0 %v1430
    %1835 = vmatpush1.msra.mxu0 %v1429
    %1836 = vmatprep.subr.mxu0 0.0
    %1837 = vmatpush2.msra.mxu0 0.0
    %1838 = vmatprep.subr.mxu0 0.0
    %1839 = vmatpush2.msra.mxu0 0.0
    %1840 = vmatprep.subr.mxu0 0.0
    %1841 = vmatpush2.msra.mxu0 0.0
    %1842 = vmatprep.subr.mxu0 0.0
    %1843 = vmatpush2.msra.mxu0 0.0
    %1844 = vmatprep.subr.mxu0 0.0
    %1845 = vmatpush2.msra.mxu0 0.0
    %1846 = vmatprep.subr.mxu0 0.0
    %1847 = vmatpush2.msra.mxu0 0.0
    %1848 = vmatprep.subr.mxu0 0.0
    %1849 = vmatpush2.msra.mxu0 0.0
    %1850 = vmatprep.subr.mxu0 0.0
    %1851 = vmatpush2.msra.mxu0 0.0
    %1852 = vmatprep.subr.mxu0 0.0
    %1853 = vmatpush2.msra.mxu0 0.0
    %1854 = vmatprep.subr.mxu0 0.0
    %1855 = vmatpush2.msra.mxu0 0.0
    %1856 = vmatprep.subr.mxu0 0.0
    %1857 = vmatpush2.msra.mxu0 0.0
    %1858 = vmatprep.subr.mxu0 0.0
    %1859 = vmatpush2.msra.mxu0 0.0
    %1860 = vmatprep.subr.mxu0 0.0
    %1861 = vmatpush2.msra.mxu0 0.0
    %1862 = vmatprep.subr.mxu0 0.0
    %1863 = vmatpush2.msra.mxu0 0.0
    %1864 = vmatprep.subr.mxu0 0.0
    %1865 = vmatpush2.msra.mxu0 0.0
    %1866 = vmatprep.subr.mxu0 0.0
    %1867 = vmatpush2.msra.mxu0 0.0
    %1868 = vmatprep.mubr.f32.mxu0 0.0
    %1869 = vmatmul.mubr.f32.gmra.mxu0 %v1802
    %v1870 = vpop.f32.mrf.mxu0
    %v1871 = vadd.f32 %v1449, %v1870
    %v1872 = vpop.f32.mrf.mxu0
    %v1873 = vadd.f32 %v1453, %v1872
    %1874 = vdwg.mxu0
    %1875 = vmatprep.subr.mxu0 0.0
    %1876 = vmatpush1.msra.mxu0 0.0
    %1877 = vmatprep.subr.mxu0 0.0
    %1878 = vmatpush1.msra.mxu0 0.0
    %1879 = vmatprep.subr.mxu0 0.0
    %1880 = vmatpush1.msra.mxu0 0.0
    %1881 = vmatprep.subr.mxu0 0.0
    %1882 = vmatpush1.msra.mxu0 0.0
    %1883 = vmatprep.subr.mxu0 0.0
    %1884 = vmatpush1.msra.mxu0 0.0
    %1885 = vmatprep.subr.mxu0 0.0
    %1886 = vmatpush1.msra.mxu0 0.0
    %1887 = vmatprep.subr.mxu0 0.0
    %1888 = vmatpush1.msra.mxu0 0.0
    %1889 = vmatprep.subr.mxu0 0.0
    %1890 = vmatpush1.msra.mxu0 0.0
    %1891 = vmatprep.subr.mxu0 0.0
    %1892 = vmatpush1.msra.mxu0 0.0
    %1893 = vmatprep.subr.mxu0 0.0
    %1894 = vmatpush1.msra.mxu0 0.0
    %1895 = vmatprep.subr.mxu0 0.0
    %1896 = vmatpush1.msra.mxu0 0.0
    %1897 = vmatprep.subr.mxu0 0.0
    %1898 = vmatpush1.msra.mxu0 0.0
    %1899 = vmatprep.subr.mxu0 0.0
    %1900 = vmatpush1.msra.mxu0 %v1440
    %1901 = vmatprep.subr.mxu0 0.0
    %1902 = vmatpush1.msra.mxu0 %v1437
    %1903 = vmatprep.subr.mxu0 0.0
    %1904 = vmatpush1.msra.mxu0 %v1434
    %1905 = vmatprep.subr.mxu0 0.0
    %1906 = vmatpush1.msra.mxu0 %v1431
    %1907 = vmatprep.subr.mxu0 0.0
    %1908 = vmatpush2.msra.mxu0 0.0
    %1909 = vmatprep.subr.mxu0 0.0
    %1910 = vmatpush2.msra.mxu0 0.0
    %1911 = vmatprep.subr.mxu0 0.0
    %1912 = vmatpush2.msra.mxu0 0.0
    %1913 = vmatprep.subr.mxu0 0.0
    %1914 = vmatpush2.msra.mxu0 0.0
    %1915 = vmatprep.subr.mxu0 0.0
    %1916 = vmatpush2.msra.mxu0 0.0
    %1917 = vmatprep.subr.mxu0 0.0
    %1918 = vmatpush2.msra.mxu0 0.0
    %1919 = vmatprep.subr.mxu0 0.0
    %1920 = vmatpush2.msra.mxu0 0.0
    %1921 = vmatprep.subr.mxu0 0.0
    %1922 = vmatpush2.msra.mxu0 0.0
    %1923 = vmatprep.subr.mxu0 0.0
    %1924 = vmatpush2.msra.mxu0 0.0
    %1925 = vmatprep.subr.mxu0 0.0
    %1926 = vmatpush2.msra.mxu0 0.0
    %1927 = vmatprep.subr.mxu0 0.0
    %1928 = vmatpush2.msra.mxu0 0.0
    %1929 = vmatprep.subr.mxu0 0.0
    %1930 = vmatpush2.msra.mxu0 0.0
    %1931 = vmatprep.subr.mxu0 0.0
    %1932 = vmatpush2.msra.mxu0 0.0
    %1933 = vmatprep.subr.mxu0 0.0
    %1934 = vmatpush2.msra.mxu0 0.0
    %1935 = vmatprep.subr.mxu0 0.0
    %1936 = vmatpush2.msra.mxu0 0.0
    %1937 = vmatprep.subr.mxu0 0.0
    %1938 = vmatpush2.msra.mxu0 0.0
    %1939 = vmatprep.mubr.f32.mxu0 0.0
    %1940 = vmatmul.mubr.f32.gmra.mxu0 %v1802
    %v1941 = vpop.f32.mrf.mxu0
    %v1942 = vadd.f32 %v1457, %v1941
    %v1943 = vpop.f32.mrf.mxu0
    %1944 = vdwg.mxu0
    %v1945 = vadd.f32 %v1798, %v1871
    %v1946 = vxor.u32 %v1945, 2147483648
    %v1947 = vmul.f32 %v1946, 1.442695
    %v1948 = vpow.pop %v1947
    %v1949 = vadd.f32 %v1948, 1.0
    %v1950 = vrcp.pop %v1949
    %v1951 = vmul.f32 1.0, %v1950
    %v1952 = vadd.f32 %v1799, %v1873
    %v1953 = vxor.u32 %v1952, 2147483648
    %v1954 = vmul.f32 %v1953, 1.442695
    %v1955 = vpow.pop %v1954
    %v1956 = vadd.f32 %v1955, 1.0
    %v1957 = vrcp.pop %v1956
    %v1958 = vmul.f32 1.0, %v1957
    %v1959 = vmul.f32 %v1951, %v1942
    %v1960 = vadd.f32 %v1800, %v1959
    %v1961 = vtanh.pop %v1960
    %v1962 = vsub.f32 1.0, %v1958
    %v1963 = vmul.f32 %v1962, %v1961
    %v1964 = vmul.f32 %v1958, %v1795
    %v1965 = vadd.f32 %v1963, %v1964
    %s1966 = scalar_lea.vmem [#allocation3], 16
    %1967 = vst [vmem:[%s1966] sm:$0xff] %v1965
    %v1968 = vld [vmem:[%s829] sm:$0xff]
    %v1969 = vld [vmem:[%s829 + $0x8] sm:$0xff]
    %v1970 = vld [vmem:[%s829 + $0x10] sm:$0xff]
    %v1972 = vsel %vm1461, %v1965, 0
    %1974 = vmatprep.subr.mxu0 0.0
    %1975 = vmatpush1.msra.mxu0 0.0
    %1976 = vmatprep.subr.mxu0 0.0
    %1977 = vmatpush1.msra.mxu0 0.0
    %1978 = vmatprep.subr.mxu0 0.0
    %1979 = vmatpush1.msra.mxu0 0.0
    %1980 = vmatprep.subr.mxu0 0.0
    %1981 = vmatpush1.msra.mxu0 0.0
    %1982 = vmatprep.subr.mxu0 0.0
    %1983 = vmatpush1.msra.mxu0 0.0
    %1984 = vmatprep.subr.mxu0 0.0
    %1985 = vmatpush1.msra.mxu0 0.0
    %1986 = vmatprep.subr.mxu0 0.0
    %1987 = vmatpush1.msra.mxu0 0.0
    %1988 = vmatprep.subr.mxu0 0.0
    %1989 = vmatpush1.msra.mxu0 0.0
    %1990 = vmatprep.subr.mxu0 0.0
    %1991 = vmatpush1.msra.mxu0 0.0
    %1992 = vmatprep.subr.mxu0 0.0
    %1993 = vmatpush1.msra.mxu0 0.0
    %1994 = vmatprep.subr.mxu0 0.0
    %1995 = vmatpush1.msra.mxu0 0.0
    %1996 = vmatprep.subr.mxu0 0.0
    %1997 = vmatpush1.msra.mxu0 0.0
    %1998 = vmatprep.subr.mxu0 %v1439
    %1999 = vmatpush1.msra.mxu0 %v1438
    %2000 = vmatprep.subr.mxu0 %v1436
    %2001 = vmatpush1.msra.mxu0 %v1435
    %2002 = vmatprep.subr.mxu0 %v1433
    %2003 = vmatpush1.msra.mxu0 %v1432
    %2004 = vmatprep.subr.mxu0 %v1430
    %2005 = vmatpush1.msra.mxu0 %v1429
    %2006 = vmatprep.subr.mxu0 0.0
    %2007 = vmatpush2.msra.mxu0 0.0
    %2008 = vmatprep.subr.mxu0 0.0
    %2009 = vmatpush2.msra.mxu0 0.0
    %2010 = vmatprep.subr.mxu0 0.0
    %2011 = vmatpush2.msra.mxu0 0.0
    %2012 = vmatprep.subr.mxu0 0.0
    %2013 = vmatpush2.msra.mxu0 0.0
    %2014 = vmatprep.subr.mxu0 0.0
    %2015 = vmatpush2.msra.mxu0 0.0
    %2016 = vmatprep.subr.mxu0 0.0
    %2017 = vmatpush2.msra.mxu0 0.0
    %2018 = vmatprep.subr.mxu0 0.0
    %2019 = vmatpush2.msra.mxu0 0.0
    %2020 = vmatprep.subr.mxu0 0.0
    %2021 = vmatpush2.msra.mxu0 0.0
    %2022 = vmatprep.subr.mxu0 0.0
    %2023 = vmatpush2.msra.mxu0 0.0
    %2024 = vmatprep.subr.mxu0 0.0
    %2025 = vmatpush2.msra.mxu0 0.0
    %2026 = vmatprep.subr.mxu0 0.0
    %2027 = vmatpush2.msra.mxu0 0.0
    %2028 = vmatprep.subr.mxu0 0.0
    %2029 = vmatpush2.msra.mxu0 0.0
    %2030 = vmatprep.subr.mxu0 0.0
    %2031 = vmatpush2.msra.mxu0 0.0
    %2032 = vmatprep.subr.mxu0 0.0
    %2033 = vmatpush2.msra.mxu0 0.0
    %2034 = vmatprep.subr.mxu0 0.0
    %2035 = vmatpush2.msra.mxu0 0.0
    %2036 = vmatprep.subr.mxu0 0.0
    %2037 = vmatpush2.msra.mxu0 0.0
    %2038 = vmatprep.mubr.f32.mxu0 0.0
    %2039 = vmatmul.mubr.f32.gmra.mxu0 %v1972
    %v2040 = vpop.f32.mrf.mxu0
    %v2041 = vadd.f32 %v1449, %v2040
    %v2042 = vpop.f32.mrf.mxu0
    %v2043 = vadd.f32 %v1453, %v2042
    %2044 = vdwg.mxu0
    %2045 = vmatprep.subr.mxu0 0.0
    %2046 = vmatpush1.msra.mxu0 0.0
    %2047 = vmatprep.subr.mxu0 0.0
    %2048 = vmatpush1.msra.mxu0 0.0
    %2049 = vmatprep.subr.mxu0 0.0
    %2050 = vmatpush1.msra.mxu0 0.0
    %2051 = vmatprep.subr.mxu0 0.0
    %2052 = vmatpush1.msra.mxu0 0.0
    %2053 = vmatprep.subr.mxu0 0.0
    %2054 = vmatpush1.msra.mxu0 0.0
    %2055 = vmatprep.subr.mxu0 0.0
    %2056 = vmatpush1.msra.mxu0 0.0
    %2057 = vmatprep.subr.mxu0 0.0
    %2058 = vmatpush1.msra.mxu0 0.0
    %2059 = vmatprep.subr.mxu0 0.0
    %2060 = vmatpush1.msra.mxu0 0.0
    %2061 = vmatprep.subr.mxu0 0.0
    %2062 = vmatpush1.msra.mxu0 0.0
    %2063 = vmatprep.subr.mxu0 0.0
    %2064 = vmatpush1.msra.mxu0 0.0
    %2065 = vmatprep.subr.mxu0 0.0
    %2066 = vmatpush1.msra.mxu0 0.0
    %2067 = vmatprep.subr.mxu0 0.0
    %2068 = vmatpush1.msra.mxu0 0.0
    %2069 = vmatprep.subr.mxu0 0.0
    %2070 = vmatpush1.msra.mxu0 %v1440
    %2071 = vmatprep.subr.mxu0 0.0
    %2072 = vmatpush1.msra.mxu0 %v1437
    %2073 = vmatprep.subr.mxu0 0.0
    %2074 = vmatpush1.msra.mxu0 %v1434
    %2075 = vmatprep.subr.mxu0 0.0
    %2076 = vmatpush1.msra.mxu0 %v1431
    %2077 = vmatprep.subr.mxu0 0.0
    %2078 = vmatpush2.msra.mxu0 0.0
    %2079 = vmatprep.subr.mxu0 0.0
    %2080 = vmatpush2.msra.mxu0 0.0
    %2081 = vmatprep.subr.mxu0 0.0
    %2082 = vmatpush2.msra.mxu0 0.0
    %2083 = vmatprep.subr.mxu0 0.0
    %2084 = vmatpush2.msra.mxu0 0.0
    %2085 = vmatprep.subr.mxu0 0.0
    %2086 = vmatpush2.msra.mxu0 0.0
    %2087 = vmatprep.subr.mxu0 0.0
    %2088 = vmatpush2.msra.mxu0 0.0
    %2089 = vmatprep.subr.mxu0 0.0
    %2090 = vmatpush2.msra.mxu0 0.0
    %2091 = vmatprep.subr.mxu0 0.0
    %2092 = vmatpush2.msra.mxu0 0.0
    %2093 = vmatprep.subr.mxu0 0.0
    %2094 = vmatpush2.msra.mxu0 0.0
    %2095 = vmatprep.subr.mxu0 0.0
    %2096 = vmatpush2.msra.mxu0 0.0
    %2097 = vmatprep.subr.mxu0 0.0
    %2098 = vmatpush2.msra.mxu0 0.0
    %2099 = vmatprep.subr.mxu0 0.0
    %2100 = vmatpush2.msra.mxu0 0.0
    %2101 = vmatprep.subr.mxu0 0.0
    %2102 = vmatpush2.msra.mxu0 0.0
    %2103 = vmatprep.subr.mxu0 0.0
    %2104 = vmatpush2.msra.mxu0 0.0
    %2105 = vmatprep.subr.mxu0 0.0
    %2106 = vmatpush2.msra.mxu0 0.0
    %2107 = vmatprep.subr.mxu0 0.0
    %2108 = vmatpush2.msra.mxu0 0.0
    %2109 = vmatprep.mubr.f32.mxu0 0.0
    %2110 = vmatmul.mubr.f32.gmra.mxu0 %v1972
    %v2111 = vpop.f32.mrf.mxu0
    %v2112 = vadd.f32 %v1457, %v2111
    %v2113 = vpop.f32.mrf.mxu0
    %2114 = vdwg.mxu0
    %v2115 = vadd.f32 %v1968, %v2041
    %v2116 = vxor.u32 %v2115, 2147483648
    %v2117 = vmul.f32 %v2116, 1.442695
    %v2118 = vpow.pop %v2117
    %v2119 = vadd.f32 %v2118, 1.0
    %v2120 = vrcp.pop %v2119
    %v2121 = vmul.f32 1.0, %v2120
    %v2122 = vadd.f32 %v1969, %v2043
    %v2123 = vxor.u32 %v2122, 2147483648
    %v2124 = vmul.f32 %v2123, 1.442695
    %v2125 = vpow.pop %v2124
    %v2126 = vadd.f32 %v2125, 1.0
    %v2127 = vrcp.pop %v2126
    %v2128 = vmul.f32 1.0, %v2127
    %v2129 = vmul.f32 %v2121, %v2112
    %v2130 = vadd.f32 %v1970, %v2129
    %v2131 = vtanh.pop %v2130
    %v2132 = vsub.f32 1.0, %v2128
    %v2133 = vmul.f32 %v2132, %v2131
    %v2134 = vmul.f32 %v2128, %v1965
    %v2135 = vadd.f32 %v2133, %v2134
    %s2136 = scalar_lea.vmem [#allocation3], 24
    %2137 = vst [vmem:[%s2136] sm:$0xff] %v2135
    %v2138 = vld [vmem:[%s978] sm:$0xff]
    %v2139 = vld [vmem:[%s978 + $0x8] sm:$0xff]
    %v2140 = vld [vmem:[%s978 + $0x10] sm:$0xff]
    %v2142 = vsel %vm1461, %v2135, 0
    %2144 = vmatprep.subr.mxu0 0.0
    %2145 = vmatpush1.msra.mxu0 0.0
    %2146 = vmatprep.subr.mxu0 0.0
    %2147 = vmatpush1.msra.mxu0 0.0
    %2148 = vmatprep.subr.mxu0 0.0
    %2149 = vmatpush1.msra.mxu0 0.0
    %2150 = vmatprep.subr.mxu0 0.0
    %2151 = vmatpush1.msra.mxu0 0.0
    %2152 = vmatprep.subr.mxu0 0.0
    %2153 = vmatpush1.msra.mxu0 0.0
    %2154 = vmatprep.subr.mxu0 0.0
    %2155 = vmatpush1.msra.mxu0 0.0
    %2156 = vmatprep.subr.mxu0 0.0
    %2157 = vmatpush1.msra.mxu0 0.0
    %2158 = vmatprep.subr.mxu0 0.0
    %2159 = vmatpush1.msra.mxu0 0.0
    %2160 = vmatprep.subr.mxu0 0.0
    %2161 = vmatpush1.msra.mxu0 0.0
    %2162 = vmatprep.subr.mxu0 0.0
    %2163 = vmatpush1.msra.mxu0 0.0
    %2164 = vmatprep.subr.mxu0 0.0
    %2165 = vmatpush1.msra.mxu0 0.0
    %2166 = vmatprep.subr.mxu0 0.0
    %2167 = vmatpush1.msra.mxu0 0.0
    %2168 = vmatprep.subr.mxu0 %v1439
    %2169 = vmatpush1.msra.mxu0 %v1438
    %2170 = vmatprep.subr.mxu0 %v1436
    %2171 = vmatpush1.msra.mxu0 %v1435
    %2172 = vmatprep.subr.mxu0 %v1433
    %2173 = vmatpush1.msra.mxu0 %v1432
    %2174 = vmatprep.subr.mxu0 %v1430
    %2175 = vmatpush1.msra.mxu0 %v1429
    %2176 = vmatprep.subr.mxu0 0.0
    %2177 = vmatpush2.msra.mxu0 0.0
    %2178 = vmatprep.subr.mxu0 0.0
    %2179 = vmatpush2.msra.mxu0 0.0
    %2180 = vmatprep.subr.mxu0 0.0
    %2181 = vmatpush2.msra.mxu0 0.0
    %2182 = vmatprep.subr.mxu0 0.0
    %2183 = vmatpush2.msra.mxu0 0.0
    %2184 = vmatprep.subr.mxu0 0.0
    %2185 = vmatpush2.msra.mxu0 0.0
    %2186 = vmatprep.subr.mxu0 0.0
    %2187 = vmatpush2.msra.mxu0 0.0
    %2188 = vmatprep.subr.mxu0 0.0
    %2189 = vmatpush2.msra.mxu0 0.0
    %2190 = vmatprep.subr.mxu0 0.0
    %2191 = vmatpush2.msra.mxu0 0.0
    %2192 = vmatprep.subr.mxu0 0.0
    %2193 = vmatpush2.msra.mxu0 0.0
    %2194 = vmatprep.subr.mxu0 0.0
    %2195 = vmatpush2.msra.mxu0 0.0
    %2196 = vmatprep.subr.mxu0 0.0
    %2197 = vmatpush2.msra.mxu0 0.0
    %2198 = vmatprep.subr.mxu0 0.0
    %2199 = vmatpush2.msra.mxu0 0.0
    %2200 = vmatprep.subr.mxu0 0.0
    %2201 = vmatpush2.msra.mxu0 0.0
    %2202 = vmatprep.subr.mxu0 0.0
    %2203 = vmatpush2.msra.mxu0 0.0
    %2204 = vmatprep.subr.mxu0 0.0
    %2205 = vmatpush2.msra.mxu0 0.0
    %2206 = vmatprep.subr.mxu0 0.0
    %2207 = vmatpush2.msra.mxu0 0.0
    %2208 = vmatprep.mubr.f32.mxu0 0.0
    %2209 = vmatmul.mubr.f32.gmra.mxu0 %v2142
    %v2210 = vpop.f32.mrf.mxu0
    %v2211 = vadd.f32 %v1449, %v2210
    %v2212 = vpop.f32.mrf.mxu0
    %v2213 = vadd.f32 %v1453, %v2212
    %2214 = vdwg.mxu0
    %2215 = vmatprep.subr.mxu0 0.0
    %2216 = vmatpush1.msra.mxu0 0.0
    %2217 = vmatprep.subr.mxu0 0.0
    %2218 = vmatpush1.msra.mxu0 0.0
    %2219 = vmatprep.subr.mxu0 0.0
    %2220 = vmatpush1.msra.mxu0 0.0
    %2221 = vmatprep.subr.mxu0 0.0
    %2222 = vmatpush1.msra.mxu0 0.0
    %2223 = vmatprep.subr.mxu0 0.0
    %2224 = vmatpush1.msra.mxu0 0.0
    %2225 = vmatprep.subr.mxu0 0.0
    %2226 = vmatpush1.msra.mxu0 0.0
    %2227 = vmatprep.subr.mxu0 0.0
    %2228 = vmatpush1.msra.mxu0 0.0
    %2229 = vmatprep.subr.mxu0 0.0
    %2230 = vmatpush1.msra.mxu0 0.0
    %2231 = vmatprep.subr.mxu0 0.0
    %2232 = vmatpush1.msra.mxu0 0.0
    %2233 = vmatprep.subr.mxu0 0.0
    %2234 = vmatpush1.msra.mxu0 0.0
    %2235 = vmatprep.subr.mxu0 0.0
    %2236 = vmatpush1.msra.mxu0 0.0
    %2237 = vmatprep.subr.mxu0 0.0
    %2238 = vmatpush1.msra.mxu0 0.0
    %2239 = vmatprep.subr.mxu0 0.0
    %2240 = vmatpush1.msra.mxu0 %v1440
    %2241 = vmatprep.subr.mxu0 0.0
    %2242 = vmatpush1.msra.mxu0 %v1437
    %2243 = vmatprep.subr.mxu0 0.0
    %2244 = vmatpush1.msra.mxu0 %v1434
    %2245 = vmatprep.subr.mxu0 0.0
    %2246 = vmatpush1.msra.mxu0 %v1431
    %2247 = vmatprep.subr.mxu0 0.0
    %2248 = vmatpush2.msra.mxu0 0.0
    %2249 = vmatprep.subr.mxu0 0.0
    %2250 = vmatpush2.msra.mxu0 0.0
    %2251 = vmatprep.subr.mxu0 0.0
    %2252 = vmatpush2.msra.mxu0 0.0
    %2253 = vmatprep.subr.mxu0 0.0
    %2254 = vmatpush2.msra.mxu0 0.0
    %2255 = vmatprep.subr.mxu0 0.0
    %2256 = vmatpush2.msra.mxu0 0.0
    %2257 = vmatprep.subr.mxu0 0.0
    %2258 = vmatpush2.msra.mxu0 0.0
    %2259 = vmatprep.subr.mxu0 0.0
    %2260 = vmatpush2.msra.mxu0 0.0
    %2261 = vmatprep.subr.mxu0 0.0
    %2262 = vmatpush2.msra.mxu0 0.0
    %2263 = vmatprep.subr.mxu0 0.0
    %2264 = vmatpush2.msra.mxu0 0.0
    %2265 = vmatprep.subr.mxu0 0.0
    %2266 = vmatpush2.msra.mxu0 0.0
    %2267 = vmatprep.subr.mxu0 0.0
    %2268 = vmatpush2.msra.mxu0 0.0
    %2269 = vmatprep.subr.mxu0 0.0
    %2270 = vmatpush2.msra.mxu0 0.0
    %2271 = vmatprep.subr.mxu0 0.0
    %2272 = vmatpush2.msra.mxu0 0.0
    %2273 = vmatprep.subr.mxu0 0.0
    %2274 = vmatpush2.msra.mxu0 0.0
    %2275 = vmatprep.subr.mxu0 0.0
    %2276 = vmatpush2.msra.mxu0 0.0
    %2277 = vmatprep.subr.mxu0 0.0
    %2278 = vmatpush2.msra.mxu0 0.0
    %2279 = vmatprep.mubr.f32.mxu0 0.0
    %2280 = vmatmul.mubr.f32.gmra.mxu0 %v2142
    %v2281 = vpop.f32.mrf.mxu0
    %v2282 = vadd.f32 %v1457, %v2281
    %v2283 = vpop.f32.mrf.mxu0
    %2284 = vdwg.mxu0
    %v2285 = vadd.f32 %v2138, %v2211
    %v2286 = vxor.u32 %v2285, 2147483648
    %v2287 = vmul.f32 %v2286, 1.442695
    %v2288 = vpow.pop %v2287
    %v2289 = vadd.f32 %v2288, 1.0
    %v2290 = vrcp.pop %v2289
    %v2291 = vmul.f32 1.0, %v2290
    %v2292 = vadd.f32 %v2139, %v2213
    %v2293 = vxor.u32 %v2292, 2147483648
    %v2294 = vmul.f32 %v2293, 1.442695
    %v2295 = vpow.pop %v2294
    %v2296 = vadd.f32 %v2295, 1.0
    %v2297 = vrcp.pop %v2296
    %v2298 = vmul.f32 1.0, %v2297
    %v2299 = vmul.f32 %v2291, %v2282
    %v2300 = vadd.f32 %v2140, %v2299
    %v2301 = vtanh.pop %v2300
    %v2302 = vsub.f32 1.0, %v2298
    %v2303 = vmul.f32 %v2302, %v2301
    %v2304 = vmul.f32 %v2298, %v2135
    %v2305 = vadd.f32 %v2303, %v2304
    %s2306 = scalar_lea.vmem [#allocation3], 32
    %2307 = vst [vmem:[%s2306] sm:$0xff] %v2305
    %v2308 = vld [vmem:[%s1127] sm:$0xff]
    %v2309 = vld [vmem:[%s1127 + $0x8] sm:$0xff]
    %v2310 = vld [vmem:[%s1127 + $0x10] sm:$0xff]
    %v2312 = vsel %vm1461, %v2305, 0
    %2314 = vmatprep.subr.mxu0 0.0
    %2315 = vmatpush1.msra.mxu0 0.0
    %2316 = vmatprep.subr.mxu0 0.0
    %2317 = vmatpush1.msra.mxu0 0.0
    %2318 = vmatprep.subr.mxu0 0.0
    %2319 = vmatpush1.msra.mxu0 0.0
    %2320 = vmatprep.subr.mxu0 0.0
    %2321 = vmatpush1.msra.mxu0 0.0
    %2322 = vmatprep.subr.mxu0 0.0
    %2323 = vmatpush1.msra.mxu0 0.0
    %2324 = vmatprep.subr.mxu0 0.0
    %2325 = vmatpush1.msra.mxu0 0.0
    %2326 = vmatprep.subr.mxu0 0.0
    %2327 = vmatpush1.msra.mxu0 0.0
    %2328 = vmatprep.subr.mxu0 0.0
    %2329 = vmatpush1.msra.mxu0 0.0
    %2330 = vmatprep.subr.mxu0 0.0
    %2331 = vmatpush1.msra.mxu0 0.0
    %2332 = vmatprep.subr.mxu0 0.0
    %2333 = vmatpush1.msra.mxu0 0.0
    %2334 = vmatprep.subr.mxu0 0.0
    %2335 = vmatpush1.msra.mxu0 0.0
    %2336 = vmatprep.subr.mxu0 0.0
    %2337 = vmatpush1.msra.mxu0 0.0
    %2338 = vmatprep.subr.mxu0 %v1439
    %2339 = vmatpush1.msra.mxu0 %v1438
    %2340 = vmatprep.subr.mxu0 %v1436
    %2341 = vmatpush1.msra.mxu0 %v1435
    %2342 = vmatprep.subr.mxu0 %v1433
    %2343 = vmatpush1.msra.mxu0 %v1432
    %2344 = vmatprep.subr.mxu0 %v1430
    %2345 = vmatpush1.msra.mxu0 %v1429
    %2346 = vmatprep.subr.mxu0 0.0
    %2347 = vmatpush2.msra.mxu0 0.0
    %2348 = vmatprep.subr.mxu0 0.0
    %2349 = vmatpush2.msra.mxu0 0.0
    %2350 = vmatprep.subr.mxu0 0.0
    %2351 = vmatpush2.msra.mxu0 0.0
    %2352 = vmatprep.subr.mxu0 0.0
    %2353 = vmatpush2.msra.mxu0 0.0
    %2354 = vmatprep.subr.mxu0 0.0
    %2355 = vmatpush2.msra.mxu0 0.0
    %2356 = vmatprep.subr.mxu0 0.0
    %2357 = vmatpush2.msra.mxu0 0.0
    %2358 = vmatprep.subr.mxu0 0.0
    %2359 = vmatpush2.msra.mxu0 0.0
    %2360 = vmatprep.subr.mxu0 0.0
    %2361 = vmatpush2.msra.mxu0 0.0
    %2362 = vmatprep.subr.mxu0 0.0
    %2363 = vmatpush2.msra.mxu0 0.0
    %2364 = vmatprep.subr.mxu0 0.0
    %2365 = vmatpush2.msra.mxu0 0.0
    %2366 = vmatprep.subr.mxu0 0.0
    %2367 = vmatpush2.msra.mxu0 0.0
    %2368 = vmatprep.subr.mxu0 0.0
    %2369 = vmatpush2.msra.mxu0 0.0
    %2370 = vmatprep.subr.mxu0 0.0
    %2371 = vmatpush2.msra.mxu0 0.0
    %2372 = vmatprep.subr.mxu0 0.0
    %2373 = vmatpush2.msra.mxu0 0.0
    %2374 = vmatprep.subr.mxu0 0.0
    %2375 = vmatpush2.msra.mxu0 0.0
    %2376 = vmatprep.subr.mxu0 0.0
    %2377 = vmatpush2.msra.mxu0 0.0
    %2378 = vmatprep.mubr.f32.mxu0 0.0
    %2379 = vmatmul.mubr.f32.gmra.mxu0 %v2312
    %v2380 = vpop.f32.mrf.mxu0
    %v2381 = vadd.f32 %v1449, %v2380
    %v2382 = vpop.f32.mrf.mxu0
    %v2383 = vadd.f32 %v1453, %v2382
    %2384 = vdwg.mxu0
    %2385 = vmatprep.subr.mxu0 0.0
    %2386 = vmatpush1.msra.mxu0 0.0
    %2387 = vmatprep.subr.mxu0 0.0
    %2388 = vmatpush1.msra.mxu0 0.0
    %2389 = vmatprep.subr.mxu0 0.0
    %2390 = vmatpush1.msra.mxu0 0.0
    %2391 = vmatprep.subr.mxu0 0.0
    %2392 = vmatpush1.msra.mxu0 0.0
    %2393 = vmatprep.subr.mxu0 0.0
    %2394 = vmatpush1.msra.mxu0 0.0
    %2395 = vmatprep.subr.mxu0 0.0
    %2396 = vmatpush1.msra.mxu0 0.0
    %2397 = vmatprep.subr.mxu0 0.0
    %2398 = vmatpush1.msra.mxu0 0.0
    %2399 = vmatprep.subr.mxu0 0.0
    %2400 = vmatpush1.msra.mxu0 0.0
    %2401 = vmatprep.subr.mxu0 0.0
    %2402 = vmatpush1.msra.mxu0 0.0
    %2403 = vmatprep.subr.mxu0 0.0
    %2404 = vmatpush1.msra.mxu0 0.0
    %2405 = vmatprep.subr.mxu0 0.0
    %2406 = vmatpush1.msra.mxu0 0.0
    %2407 = vmatprep.subr.mxu0 0.0
    %2408 = vmatpush1.msra.mxu0 0.0
    %2409 = vmatprep.subr.mxu0 0.0
    %2410 = vmatpush1.msra.mxu0 %v1440
    %2411 = vmatprep.subr.mxu0 0.0
    %2412 = vmatpush1.msra.mxu0 %v1437
    %2413 = vmatprep.subr.mxu0 0.0
    %2414 = vmatpush1.msra.mxu0 %v1434
    %2415 = vmatprep.subr.mxu0 0.0
    %2416 = vmatpush1.msra.mxu0 %v1431
    %2417 = vmatprep.subr.mxu0 0.0
    %2418 = vmatpush2.msra.mxu0 0.0
    %2419 = vmatprep.subr.mxu0 0.0
    %2420 = vmatpush2.msra.mxu0 0.0
    %2421 = vmatprep.subr.mxu0 0.0
    %2422 = vmatpush2.msra.mxu0 0.0
    %2423 = vmatprep.subr.mxu0 0.0
    %2424 = vmatpush2.msra.mxu0 0.0
    %2425 = vmatprep.subr.mxu0 0.0
    %2426 = vmatpush2.msra.mxu0 0.0
    %2427 = vmatprep.subr.mxu0 0.0
    %2428 = vmatpush2.msra.mxu0 0.0
    %2429 = vmatprep.subr.mxu0 0.0
    %2430 = vmatpush2.msra.mxu0 0.0
    %2431 = vmatprep.subr.mxu0 0.0
    %2432 = vmatpush2.msra.mxu0 0.0
    %2433 = vmatprep.subr.mxu0 0.0
    %2434 = vmatpush2.msra.mxu0 0.0
    %2435 = vmatprep.subr.mxu0 0.0
    %2436 = vmatpush2.msra.mxu0 0.0
    %2437 = vmatprep.subr.mxu0 0.0
    %2438 = vmatpush2.msra.mxu0 0.0
    %2439 = vmatprep.subr.mxu0 0.0
    %2440 = vmatpush2.msra.mxu0 0.0
    %2441 = vmatprep.subr.mxu0 0.0
    %2442 = vmatpush2.msra.mxu0 0.0
    %2443 = vmatprep.subr.mxu0 0.0
    %2444 = vmatpush2.msra.mxu0 0.0
    %2445 = vmatprep.subr.mxu0 0.0
    %2446 = vmatpush2.msra.mxu0 0.0
    %2447 = vmatprep.subr.mxu0 0.0
    %2448 = vmatpush2.msra.mxu0 0.0
    %2449 = vmatprep.mubr.f32.mxu0 0.0
    %2450 = vmatmul.mubr.f32.gmra.mxu0 %v2312
    %v2451 = vpop.f32.mrf.mxu0
    %v2452 = vadd.f32 %v1457, %v2451
    %v2453 = vpop.f32.mrf.mxu0
    %2454 = vdwg.mxu0
    %v2455 = vadd.f32 %v2308, %v2381
    %v2456 = vxor.u32 %v2455, 2147483648
    %v2457 = vmul.f32 %v2456, 1.442695
    %v2458 = vpow.pop %v2457
    %v2459 = vadd.f32 %v2458, 1.0
    %v2460 = vrcp.pop %v2459
    %v2461 = vmul.f32 1.0, %v2460
    %v2462 = vadd.f32 %v2309, %v2383
    %v2463 = vxor.u32 %v2462, 2147483648
    %v2464 = vmul.f32 %v2463, 1.442695
    %v2465 = vpow.pop %v2464
    %v2466 = vadd.f32 %v2465, 1.0
    %v2467 = vrcp.pop %v2466
    %v2468 = vmul.f32 1.0, %v2467
    %v2469 = vmul.f32 %v2461, %v2452
    %v2470 = vadd.f32 %v2310, %v2469
    %v2471 = vtanh.pop %v2470
    %v2472 = vsub.f32 1.0, %v2468
    %v2473 = vmul.f32 %v2472, %v2471
    %v2474 = vmul.f32 %v2468, %v2305
    %v2475 = vadd.f32 %v2473, %v2474
    %s2476 = scalar_lea.vmem [#allocation3], 40
    %2477 = vst [vmem:[%s2476] sm:$0xff] %v2475
    %v2478 = vld [vmem:[%s1276] sm:$0xff]
    %v2479 = vld [vmem:[%s1276 + $0x8] sm:$0xff]
    %v2480 = vld [vmem:[%s1276 + $0x10] sm:$0xff]
    %v2482 = vsel %vm1461, %v2475, 0
    %2484 = vmatprep.subr.mxu0 0.0
    %2485 = vmatpush1.msra.mxu0 0.0
    %2486 = vmatprep.subr.mxu0 0.0
    %2487 = vmatpush1.msra.mxu0 0.0
    %2488 = vmatprep.subr.mxu0 0.0
    %2489 = vmatpush1.msra.mxu0 0.0
    %2490 = vmatprep.subr.mxu0 0.0
    %2491 = vmatpush1.msra.mxu0 0.0
    %2492 = vmatprep.subr.mxu0 0.0
    %2493 = vmatpush1.msra.mxu0 0.0
    %2494 = vmatprep.subr.mxu0 0.0
    %2495 = vmatpush1.msra.mxu0 0.0
    %2496 = vmatprep.subr.mxu0 0.0
    %2497 = vmatpush1.msra.mxu0 0.0
    %2498 = vmatprep.subr.mxu0 0.0
    %2499 = vmatpush1.msra.mxu0 0.0
    %2500 = vmatprep.subr.mxu0 0.0
    %2501 = vmatpush1.msra.mxu0 0.0
    %2502 = vmatprep.subr.mxu0 0.0
    %2503 = vmatpush1.msra.mxu0 0.0
    %2504 = vmatprep.subr.mxu0 0.0
    %2505 = vmatpush1.msra.mxu0 0.0
    %2506 = vmatprep.subr.mxu0 0.0
    %2507 = vmatpush1.msra.mxu0 0.0
    %2508 = vmatprep.subr.mxu0 %v1439
    %2509 = vmatpush1.msra.mxu0 %v1438
    %2510 = vmatprep.subr.mxu0 %v1436
    %2511 = vmatpush1.msra.mxu0 %v1435
    %2512 = vmatprep.subr.mxu0 %v1433
    %2513 = vmatpush1.msra.mxu0 %v1432
    %2514 = vmatprep.subr.mxu0 %v1430
    %2515 = vmatpush1.msra.mxu0 %v1429
    %2516 = vmatprep.subr.mxu0 0.0
    %2517 = vmatpush2.msra.mxu0 0.0
    %2518 = vmatprep.subr.mxu0 0.0
    %2519 = vmatpush2.msra.mxu0 0.0
    %2520 = vmatprep.subr.mxu0 0.0
    %2521 = vmatpush2.msra.mxu0 0.0
    %2522 = vmatprep.subr.mxu0 0.0
    %2523 = vmatpush2.msra.mxu0 0.0
    %2524 = vmatprep.subr.mxu0 0.0
    %2525 = vmatpush2.msra.mxu0 0.0
    %2526 = vmatprep.subr.mxu0 0.0
    %2527 = vmatpush2.msra.mxu0 0.0
    %2528 = vmatprep.subr.mxu0 0.0
    %2529 = vmatpush2.msra.mxu0 0.0
    %2530 = vmatprep.subr.mxu0 0.0
    %2531 = vmatpush2.msra.mxu0 0.0
    %2532 = vmatprep.subr.mxu0 0.0
    %2533 = vmatpush2.msra.mxu0 0.0
    %2534 = vmatprep.subr.mxu0 0.0
    %2535 = vmatpush2.msra.mxu0 0.0
    %2536 = vmatprep.subr.mxu0 0.0
    %2537 = vmatpush2.msra.mxu0 0.0
    %2538 = vmatprep.subr.mxu0 0.0
    %2539 = vmatpush2.msra.mxu0 0.0
    %2540 = vmatprep.subr.mxu0 0.0
    %2541 = vmatpush2.msra.mxu0 0.0
    %2542 = vmatprep.subr.mxu0 0.0
    %2543 = vmatpush2.msra.mxu0 0.0
    %2544 = vmatprep.subr.mxu0 0.0
    %2545 = vmatpush2.msra.mxu0 0.0
    %2546 = vmatprep.subr.mxu0 0.0
    %2547 = vmatpush2.msra.mxu0 0.0
    %2548 = vmatprep.mubr.f32.mxu0 0.0
    %2549 = vmatmul.mubr.f32.gmra.mxu0 %v2482
    %v2550 = vpop.f32.mrf.mxu0
    %v2551 = vadd.f32 %v1449, %v2550
    %v2552 = vpop.f32.mrf.mxu0
    %v2553 = vadd.f32 %v1453, %v2552
    %2554 = vdwg.mxu0
    %2555 = vmatprep.subr.mxu0 0.0
    %2556 = vmatpush1.msra.mxu0 0.0
    %2557 = vmatprep.subr.mxu0 0.0
    %2558 = vmatpush1.msra.mxu0 0.0
    %2559 = vmatprep.subr.mxu0 0.0
    %2560 = vmatpush1.msra.mxu0 0.0
    %2561 = vmatprep.subr.mxu0 0.0
    %2562 = vmatpush1.msra.mxu0 0.0
    %2563 = vmatprep.subr.mxu0 0.0
    %2564 = vmatpush1.msra.mxu0 0.0
    %2565 = vmatprep.subr.mxu0 0.0
    %2566 = vmatpush1.msra.mxu0 0.0
    %2567 = vmatprep.subr.mxu0 0.0
    %2568 = vmatpush1.msra.mxu0 0.0
    %2569 = vmatprep.subr.mxu0 0.0
    %2570 = vmatpush1.msra.mxu0 0.0
    %2571 = vmatprep.subr.mxu0 0.0
    %2572 = vmatpush1.msra.mxu0 0.0
    %2573 = vmatprep.subr.mxu0 0.0
    %2574 = vmatpush1.msra.mxu0 0.0
    %2575 = vmatprep.subr.mxu0 0.0
    %2576 = vmatpush1.msra.mxu0 0.0
    %2577 = vmatprep.subr.mxu0 0.0
    %2578 = vmatpush1.msra.mxu0 0.0
    %2579 = vmatprep.subr.mxu0 0.0
    %2580 = vmatpush1.msra.mxu0 %v1440
    %2581 = vmatprep.subr.mxu0 0.0
    %2582 = vmatpush1.msra.mxu0 %v1437
    %2583 = vmatprep.subr.mxu0 0.0
    %2584 = vmatpush1.msra.mxu0 %v1434
    %2585 = vmatprep.subr.mxu0 0.0
    %2586 = vmatpush1.msra.mxu0 %v1431
    %2587 = vmatprep.subr.mxu0 0.0
    %2588 = vmatpush2.msra.mxu0 0.0
    %2589 = vmatprep.subr.mxu0 0.0
    %2590 = vmatpush2.msra.mxu0 0.0
    %2591 = vmatprep.subr.mxu0 0.0
    %2592 = vmatpush2.msra.mxu0 0.0
    %2593 = vmatprep.subr.mxu0 0.0
    %2594 = vmatpush2.msra.mxu0 0.0
    %2595 = vmatprep.subr.mxu0 0.0
    %2596 = vmatpush2.msra.mxu0 0.0
    %2597 = vmatprep.subr.mxu0 0.0
    %2598 = vmatpush2.msra.mxu0 0.0
    %2599 = vmatprep.subr.mxu0 0.0
    %2600 = vmatpush2.msra.mxu0 0.0
    %2601 = vmatprep.subr.mxu0 0.0
    %2602 = vmatpush2.msra.mxu0 0.0
    %2603 = vmatprep.subr.mxu0 0.0
    %2604 = vmatpush2.msra.mxu0 0.0
    %2605 = vmatprep.subr.mxu0 0.0
    %2606 = vmatpush2.msra.mxu0 0.0
    %2607 = vmatprep.subr.mxu0 0.0
    %2608 = vmatpush2.msra.mxu0 0.0
    %2609 = vmatprep.subr.mxu0 0.0
    %2610 = vmatpush2.msra.mxu0 0.0
    %2611 = vmatprep.subr.mxu0 0.0
    %2612 = vmatpush2.msra.mxu0 0.0
    %2613 = vmatprep.subr.mxu0 0.0
    %2614 = vmatpush2.msra.mxu0 0.0
    %2615 = vmatprep.subr.mxu0 0.0
    %2616 = vmatpush2.msra.mxu0 0.0
    %2617 = vmatprep.subr.mxu0 0.0
    %2618 = vmatpush2.msra.mxu0 0.0
    %2619 = vmatprep.mubr.f32.mxu0 0.0
    %2620 = vmatmul.mubr.f32.gmra.mxu0 %v2482
    %v2621 = vpop.f32.mrf.mxu0
    %v2622 = vadd.f32 %v1457, %v2621
    %v2623 = vpop.f32.mrf.mxu0
    %2624 = vdwg.mxu0
    %v2625 = vadd.f32 %v2478, %v2551
    %v2626 = vxor.u32 %v2625, 2147483648
    %v2627 = vmul.f32 %v2626, 1.442695
    %v2628 = vpow.pop %v2627
    %v2629 = vadd.f32 %v2628, 1.0
    %v2630 = vrcp.pop %v2629
    %v2631 = vmul.f32 1.0, %v2630
    %v2632 = vadd.f32 %v2479, %v2553
    %v2633 = vxor.u32 %v2632, 2147483648
    %v2634 = vmul.f32 %v2633, 1.442695
    %v2635 = vpow.pop %v2634
    %v2636 = vadd.f32 %v2635, 1.0
    %v2637 = vrcp.pop %v2636
    %v2638 = vmul.f32 1.0, %v2637
    %v2639 = vmul.f32 %v2631, %v2622
    %v2640 = vadd.f32 %v2480, %v2639
    %v2641 = vtanh.pop %v2640
    %v2642 = vsub.f32 1.0, %v2638
    %v2643 = vmul.f32 %v2642, %v2641
    %v2644 = vmul.f32 %v2638, %v2475
    %v2645 = vadd.f32 %v2643, %v2644
    %s2646 = scalar_lea.vmem [#allocation3], 48
    %2647 = vst [vmem:[%s2646] sm:$0xff] %v2645
    %v2648 = vld [vmem:[%s1425] sm:$0xff]
    %v2649 = vld [vmem:[%s1425 + $0x8] sm:$0xff]
    %v2650 = vld [vmem:[%s1425 + $0x10] sm:$0xff]
    %v2652 = vsel %vm1461, %v2645, 0
    %2654 = vmatprep.subr.mxu0 0.0
    %2655 = vmatpush1.msra.mxu0 0.0
    %2656 = vmatprep.subr.mxu0 0.0
    %2657 = vmatpush1.msra.mxu0 0.0
    %2658 = vmatprep.subr.mxu0 0.0
    %2659 = vmatpush1.msra.mxu0 0.0
    %2660 = vmatprep.subr.mxu0 0.0
    %2661 = vmatpush1.msra.mxu0 0.0
    %2662 = vmatprep.subr.mxu0 0.0
    %2663 = vmatpush1.msra.mxu0 0.0
    %2664 = vmatprep.subr.mxu0 0.0
    %2665 = vmatpush1.msra.mxu0 0.0
    %2666 = vmatprep.subr.mxu0 0.0
    %2667 = vmatpush1.msra.mxu0 0.0
    %2668 = vmatprep.subr.mxu0 0.0
    %2669 = vmatpush1.msra.mxu0 0.0
    %2670 = vmatprep.subr.mxu0 0.0
    %2671 = vmatpush1.msra.mxu0 0.0
    %2672 = vmatprep.subr.mxu0 0.0
    %2673 = vmatpush1.msra.mxu0 0.0
    %2674 = vmatprep.subr.mxu0 0.0
    %2675 = vmatpush1.msra.mxu0 0.0
    %2676 = vmatprep.subr.mxu0 0.0
    %2677 = vmatpush1.msra.mxu0 0.0
    %2678 = vmatprep.subr.mxu0 %v1439
    %2679 = vmatpush1.msra.mxu0 %v1438
    %2680 = vmatprep.subr.mxu0 %v1436
    %2681 = vmatpush1.msra.mxu0 %v1435
    %2682 = vmatprep.subr.mxu0 %v1433
    %2683 = vmatpush1.msra.mxu0 %v1432
    %2684 = vmatprep.subr.mxu0 %v1430
    %2685 = vmatpush1.msra.mxu0 %v1429
    %2686 = vmatprep.subr.mxu0 0.0
    %2687 = vmatpush2.msra.mxu0 0.0
    %2688 = vmatprep.subr.mxu0 0.0
    %2689 = vmatpush2.msra.mxu0 0.0
    %2690 = vmatprep.subr.mxu0 0.0
    %2691 = vmatpush2.msra.mxu0 0.0
    %2692 = vmatprep.subr.mxu0 0.0
    %2693 = vmatpush2.msra.mxu0 0.0
    %2694 = vmatprep.subr.mxu0 0.0
    %2695 = vmatpush2.msra.mxu0 0.0
    %2696 = vmatprep.subr.mxu0 0.0
    %2697 = vmatpush2.msra.mxu0 0.0
    %2698 = vmatprep.subr.mxu0 0.0
    %2699 = vmatpush2.msra.mxu0 0.0
    %2700 = vmatprep.subr.mxu0 0.0
    %2701 = vmatpush2.msra.mxu0 0.0
    %2702 = vmatprep.subr.mxu0 0.0
    %2703 = vmatpush2.msra.mxu0 0.0
    %2704 = vmatprep.subr.mxu0 0.0
    %2705 = vmatpush2.msra.mxu0 0.0
    %2706 = vmatprep.subr.mxu0 0.0
    %2707 = vmatpush2.msra.mxu0 0.0
    %2708 = vmatprep.subr.mxu0 0.0
    %2709 = vmatpush2.msra.mxu0 0.0
    %2710 = vmatprep.subr.mxu0 0.0
    %2711 = vmatpush2.msra.mxu0 0.0
    %2712 = vmatprep.subr.mxu0 0.0
    %2713 = vmatpush2.msra.mxu0 0.0
    %2714 = vmatprep.subr.mxu0 0.0
    %2715 = vmatpush2.msra.mxu0 0.0
    %2716 = vmatprep.subr.mxu0 0.0
    %2717 = vmatpush2.msra.mxu0 0.0
    %2718 = vmatprep.mubr.f32.mxu0 0.0
    %2719 = vmatmul.mubr.f32.gmra.mxu0 %v2652
    %v2720 = vpop.f32.mrf.mxu0
    %v2721 = vadd.f32 %v1449, %v2720
    %v2722 = vpop.f32.mrf.mxu0
    %v2723 = vadd.f32 %v1453, %v2722
    %2724 = vdwg.mxu0
    %2725 = vmatprep.subr.mxu0 0.0
    %2726 = vmatpush1.msra.mxu0 0.0
    %2727 = vmatprep.subr.mxu0 0.0
    %2728 = vmatpush1.msra.mxu0 0.0
    %2729 = vmatprep.subr.mxu0 0.0
    %2730 = vmatpush1.msra.mxu0 0.0
    %2731 = vmatprep.subr.mxu0 0.0
    %2732 = vmatpush1.msra.mxu0 0.0
    %2733 = vmatprep.subr.mxu0 0.0
    %2734 = vmatpush1.msra.mxu0 0.0
    %2735 = vmatprep.subr.mxu0 0.0
    %2736 = vmatpush1.msra.mxu0 0.0
    %2737 = vmatprep.subr.mxu0 0.0
    %2738 = vmatpush1.msra.mxu0 0.0
    %2739 = vmatprep.subr.mxu0 0.0
    %2740 = vmatpush1.msra.mxu0 0.0
    %2741 = vmatprep.subr.mxu0 0.0
    %2742 = vmatpush1.msra.mxu0 0.0
    %2743 = vmatprep.subr.mxu0 0.0
    %2744 = vmatpush1.msra.mxu0 0.0
    %2745 = vmatprep.subr.mxu0 0.0
    %2746 = vmatpush1.msra.mxu0 0.0
    %2747 = vmatprep.subr.mxu0 0.0
    %2748 = vmatpush1.msra.mxu0 0.0
    %2749 = vmatprep.subr.mxu0 0.0
    %2750 = vmatpush1.msra.mxu0 %v1440
    %2751 = vmatprep.subr.mxu0 0.0
    %2752 = vmatpush1.msra.mxu0 %v1437
    %2753 = vmatprep.subr.mxu0 0.0
    %2754 = vmatpush1.msra.mxu0 %v1434
    %2755 = vmatprep.subr.mxu0 0.0
    %2756 = vmatpush1.msra.mxu0 %v1431
    %2757 = vmatprep.subr.mxu0 0.0
    %2758 = vmatpush2.msra.mxu0 0.0
    %2759 = vmatprep.subr.mxu0 0.0
    %2760 = vmatpush2.msra.mxu0 0.0
    %2761 = vmatprep.subr.mxu0 0.0
    %2762 = vmatpush2.msra.mxu0 0.0
    %2763 = vmatprep.subr.mxu0 0.0
    %2764 = vmatpush2.msra.mxu0 0.0
    %2765 = vmatprep.subr.mxu0 0.0
    %2766 = vmatpush2.msra.mxu0 0.0
    %2767 = vmatprep.subr.mxu0 0.0
    %2768 = vmatpush2.msra.mxu0 0.0
    %2769 = vmatprep.subr.mxu0 0.0
    %2770 = vmatpush2.msra.mxu0 0.0
    %2771 = vmatprep.subr.mxu0 0.0
    %2772 = vmatpush2.msra.mxu0 0.0
    %2773 = vmatprep.subr.mxu0 0.0
    %2774 = vmatpush2.msra.mxu0 0.0
    %2775 = vmatprep.subr.mxu0 0.0
    %2776 = vmatpush2.msra.mxu0 0.0
    %2777 = vmatprep.subr.mxu0 0.0
    %2778 = vmatpush2.msra.mxu0 0.0
    %2779 = vmatprep.subr.mxu0 0.0
    %2780 = vmatpush2.msra.mxu0 0.0
    %2781 = vmatprep.subr.mxu0 0.0
    %2782 = vmatpush2.msra.mxu0 0.0
    %2783 = vmatprep.subr.mxu0 0.0
    %2784 = vmatpush2.msra.mxu0 0.0
    %2785 = vmatprep.subr.mxu0 0.0
    %2786 = vmatpush2.msra.mxu0 0.0
    %2787 = vmatprep.subr.mxu0 0.0
    %2788 = vmatpush2.msra.mxu0 0.0
    %2789 = vmatprep.mubr.f32.mxu0 0.0
    %2790 = vmatmul.mubr.f32.gmra.mxu0 %v2652
    %v2791 = vpop.f32.mrf.mxu0
    %v2792 = vadd.f32 %v1457, %v2791
    %v2793 = vpop.f32.mrf.mxu0
    %2794 = vdwg.mxu0
    %v2795 = vadd.f32 %v2648, %v2721
    %v2796 = vxor.u32 %v2795, 2147483648
    %v2797 = vmul.f32 %v2796, 1.442695
    %v2798 = vpow.pop %v2797
    %v2799 = vadd.f32 %v2798, 1.0
    %v2800 = vrcp.pop %v2799
    %v2801 = vmul.f32 1.0, %v2800
    %v2802 = vadd.f32 %v2649, %v2723
    %v2803 = vxor.u32 %v2802, 2147483648
    %v2804 = vmul.f32 %v2803, 1.442695
    %v2805 = vpow.pop %v2804
    %v2806 = vadd.f32 %v2805, 1.0
    %v2807 = vrcp.pop %v2806
    %v2808 = vmul.f32 1.0, %v2807
    %v2809 = vmul.f32 %v2801, %v2792
    %v2810 = vadd.f32 %v2650, %v2809
    %v2811 = vtanh.pop %v2810
    %v2812 = vsub.f32 1.0, %v2808
    %v2813 = vmul.f32 %v2812, %v2811
    %v2814 = vmul.f32 %v2808, %v2645
    %v2815 = vadd.f32 %v2813, %v2814
    %s2816 = scalar_lea.vmem [#allocation3], 56
    %2817 = vst [vmem:[%s2816] sm:$0xff] %v2815
    %v2818 = vld [vmem:[#allocation3] sm:$0xff]
    %v2819 = vpack.c.bf16 %v2818, %v2818
    %v2820 = vld [vmem:[%s5] sm:$0xff]
    %v2821 = vld [vmem:[%s5 + $0x8] sm:$0xf]
    %v2822 = vld [vmem:[%s5 + $0xc] sm:$0xff]
    %v2823 = vld [vmem:[%s5 + $0x14] sm:$0xf]
    %v2824 = vld [vmem:[%s5 + $0x18] sm:$0xff]
    %v2825 = vld [vmem:[%s5 + $0x20] sm:$0xf]
    %v2826 = vld [vmem:[%s5 + $0x24] sm:$0xff]
    %v2827 = vld [vmem:[%s5 + $0x2c] sm:$0xf]
    %v2828 = vld [vmem:[%s1796] sm:$0xff]
    %v2829 = vpack.c.bf16 %v2828, %v2828
    %v2830 = vld [vmem:[%s5 + $0x30] sm:$0xff]
    %v2831 = vld [vmem:[%s5 + $0x38] sm:$0xf]
    %v2832 = vld [vmem:[%s5 + $0x3c] sm:$0xff]
    %v2833 = vld [vmem:[%s5 + $0x44] sm:$0xf]
    %v2834 = vld [vmem:[%s5 + $0x48] sm:$0xff]
    %v2835 = vld [vmem:[%s5 + $0x50] sm:$0xf]
    %v2836 = vld [vmem:[%s5 + $0x54] sm:$0xff]
    %v2837 = vld [vmem:[%s5 + $0x5c] sm:$0xf]
    %v2846 = vunpack.c.l.b16 %v2830
    %v2847 = vunpack.c.h.b16 %v2830
    %v2848 = vunpack.c.l.b16 %v2831
    %v2849 = vunpack.c.l.b16 %v2832
    %v2850 = vunpack.c.h.b16 %v2832
    %v2851 = vunpack.c.l.b16 %v2833
    %v2852 = vunpack.c.l.b16 %v2834
    %v2853 = vunpack.c.h.b16 %v2834
    %v2854 = vunpack.c.l.b16 %v2835
    %v2855 = vunpack.c.l.b16 %v2836
    %v2856 = vunpack.c.h.b16 %v2836
    %v2857 = vunpack.c.l.b16 %v2837
    %v2858 = vpack.c.b16 %v2849, %v2846
    %v2859 = vpack.c.b16 %v2850, %v2847
    %v2860 = vpack.c.b16 %v2851, %v2848
    %v2861 = vpack.c.b16 %v2855, %v2852
    %v2862 = vpack.c.b16 %v2856, %v2853
    %v2863 = vpack.c.b16 %v2857, %v2854
    %v2871 = vsel %vm1461, %v2829, 0
    %2873 = vmatprep.subr.bf16.mxu0 0
    %2874 = vmatpush1.bf16.msra.mxu0 0
    %2875 = vmatprep.subr.bf16.mxu0 0
    %2876 = vmatpush1.bf16.msra.mxu0 0
    %2877 = vmatprep.subr.bf16.mxu0 0
    %2878 = vmatpush1.bf16.msra.mxu0 0
    %2879 = vmatprep.subr.bf16.mxu0 0
    %2880 = vmatpush1.bf16.msra.mxu0 0
    %2881 = vmatprep.subr.bf16.mxu0 0
    %2882 = vmatpush1.bf16.msra.mxu0 0
    %2883 = vmatprep.subr.bf16.mxu0 0
    %2884 = vmatpush1.bf16.msra.mxu0 0
    %2885 = vmatprep.subr.bf16.mxu0 %v2862
    %2886 = vmatpush1.bf16.msra.mxu0 %v2861
    %2887 = vmatprep.subr.bf16.mxu0 %v2859
    %2888 = vmatpush1.bf16.msra.mxu0 %v2858
    %2889 = vmatprep.subr.bf16.mxu0 0
    %2890 = vmatpush2.bf16.msra.mxu0 0
    %2891 = vmatprep.subr.bf16.mxu0 0
    %2892 = vmatpush2.bf16.msra.mxu0 0
    %2893 = vmatprep.subr.bf16.mxu0 0
    %2894 = vmatpush2.bf16.msra.mxu0 0
    %2895 = vmatprep.subr.bf16.mxu0 0
    %2896 = vmatpush2.bf16.msra.mxu0 0
    %2897 = vmatprep.subr.bf16.mxu0 0
    %2898 = vmatpush2.bf16.msra.mxu0 0
    %2899 = vmatprep.subr.bf16.mxu0 0
    %2900 = vmatpush2.bf16.msra.mxu0 0
    %2901 = vmatprep.subr.bf16.mxu0 0
    %2902 = vmatpush2.bf16.msra.mxu0 0
    %2903 = vmatprep.subr.bf16.mxu0 0
    %2904 = vmatpush2.bf16.msra.mxu0 0
    %2905 = vmatprep.mubr.bf16.mxu0 0
    %2906 = vmatmul.mubr.bf16.gmra.mxu0 %v2871
    %v2907 = vpop.f32.mrf.mxu0
    %v2908 = vadd.f32 0.0, %v2907
    %v2909 = vpop.f32.mrf.mxu0
    %v2910 = vadd.f32 0.0, %v2909
    %v2911 = vpop.f32.mrf.mxu0
    %v2912 = vpop.f32.mrf.mxu0
    %2913 = vdwg.mxu0
    %2914 = vmatprep.subr.bf16.mxu0 0
    %2915 = vmatpush1.bf16.msra.mxu0 0
    %2916 = vmatprep.subr.bf16.mxu0 0
    %2917 = vmatpush1.bf16.msra.mxu0 0
    %2918 = vmatprep.subr.bf16.mxu0 0
    %2919 = vmatpush1.bf16.msra.mxu0 0
    %2920 = vmatprep.subr.bf16.mxu0 0
    %2921 = vmatpush1.bf16.msra.mxu0 0
    %2922 = vmatprep.subr.bf16.mxu0 0
    %2923 = vmatpush1.bf16.msra.mxu0 0
    %2924 = vmatprep.subr.bf16.mxu0 0
    %2925 = vmatpush1.bf16.msra.mxu0 0
    %2926 = vmatprep.subr.bf16.mxu0 0
    %2927 = vmatpush1.bf16.msra.mxu0 %v2863
    %2928 = vmatprep.subr.bf16.mxu0 0
    %2929 = vmatpush1.bf16.msra.mxu0 %v2860
    %2930 = vmatprep.subr.bf16.mxu0 0
    %2931 = vmatpush2.bf16.msra.mxu0 0
    %2932 = vmatprep.subr.bf16.mxu0 0
    %2933 = vmatpush2.bf16.msra.mxu0 0
    %2934 = vmatprep.subr.bf16.mxu0 0
    %2935 = vmatpush2.bf16.msra.mxu0 0
    %2936 = vmatprep.subr.bf16.mxu0 0
    %2937 = vmatpush2.bf16.msra.mxu0 0
    %2938 = vmatprep.subr.bf16.mxu0 0
    %2939 = vmatpush2.bf16.msra.mxu0 0
    %2940 = vmatprep.subr.bf16.mxu0 0
    %2941 = vmatpush2.bf16.msra.mxu0 0
    %2942 = vmatprep.subr.bf16.mxu0 0
    %2943 = vmatpush2.bf16.msra.mxu0 0
    %2944 = vmatprep.subr.bf16.mxu0 0
    %2945 = vmatpush2.bf16.msra.mxu0 0
    %2946 = vmatprep.mubr.bf16.mxu0 0
    %2947 = vmatmul.mubr.bf16.gmra.mxu0 %v2871
    %v2948 = vpop.f32.mrf.mxu0
    %v2949 = vadd.f32 0.0, %v2948
    %v2950 = vpop.f32.mrf.mxu0
    %v2951 = vpop.f32.mrf.mxu0
    %v2952 = vpop.f32.mrf.mxu0
    %2953 = vdwg.mxu0
    %v2962 = vunpack.c.l.b16 %v2820
    %v2963 = vunpack.c.h.b16 %v2820
    %v2964 = vunpack.c.l.b16 %v2821
    %v2965 = vunpack.c.l.b16 %v2822
    %v2966 = vunpack.c.h.b16 %v2822
    %v2967 = vunpack.c.l.b16 %v2823
    %v2968 = vunpack.c.l.b16 %v2824
    %v2969 = vunpack.c.h.b16 %v2824
    %v2970 = vunpack.c.l.b16 %v2825
    %v2971 = vunpack.c.l.b16 %v2826
    %v2972 = vunpack.c.h.b16 %v2826
    %v2973 = vunpack.c.l.b16 %v2827
    %v2974 = vpack.c.b16 %v2965, %v2962
    %v2975 = vpack.c.b16 %v2966, %v2963
    %v2976 = vpack.c.b16 %v2967, %v2964
    %v2977 = vpack.c.b16 %v2971, %v2968
    %v2978 = vpack.c.b16 %v2972, %v2969
    %v2979 = vpack.c.b16 %v2973, %v2970
    %v2987 = vsel %vm1461, %v2819, 0
    %2989 = vmatprep.subr.bf16.mxu0 0
    %2990 = vmatpush1.bf16.msra.mxu0 0
    %2991 = vmatprep.subr.bf16.mxu0 0
    %2992 = vmatpush1.bf16.msra.mxu0 0
    %2993 = vmatprep.subr.bf16.mxu0 0
    %2994 = vmatpush1.bf16.msra.mxu0 0
    %2995 = vmatprep.subr.bf16.mxu0 0
    %2996 = vmatpush1.bf16.msra.mxu0 0
    %2997 = vmatprep.subr.bf16.mxu0 0
    %2998 = vmatpush1.bf16.msra.mxu0 0
    %2999 = vmatprep.subr.bf16.mxu0 0
    %3000 = vmatpush1.bf16.msra.mxu0 0
    %3001 = vmatprep.subr.bf16.mxu0 %v2978
    %3002 = vmatpush1.bf16.msra.mxu0 %v2977
    %3003 = vmatprep.subr.bf16.mxu0 %v2975
    %3004 = vmatpush1.bf16.msra.mxu0 %v2974
    %3005 = vmatprep.subr.bf16.mxu0 0
    %3006 = vmatpush2.bf16.msra.mxu0 0
    %3007 = vmatprep.subr.bf16.mxu0 0
    %3008 = vmatpush2.bf16.msra.mxu0 0
    %3009 = vmatprep.subr.bf16.mxu0 0
    %3010 = vmatpush2.bf16.msra.mxu0 0
    %3011 = vmatprep.subr.bf16.mxu0 0
    %3012 = vmatpush2.bf16.msra.mxu0 0
    %3013 = vmatprep.subr.bf16.mxu0 0
    %3014 = vmatpush2.bf16.msra.mxu0 0
    %3015 = vmatprep.subr.bf16.mxu0 0
    %3016 = vmatpush2.bf16.msra.mxu0 0
    %3017 = vmatprep.subr.bf16.mxu0 0
    %3018 = vmatpush2.bf16.msra.mxu0 0
    %3019 = vmatprep.subr.bf16.mxu0 0
    %3020 = vmatpush2.bf16.msra.mxu0 0
    %3021 = vmatprep.mubr.bf16.mxu0 0
    %3022 = vmatmul.mubr.bf16.gmra.mxu0 %v2987
    %v3023 = vpop.f32.mrf.mxu0
    %v3024 = vadd.f32 %v2908, %v3023
    %v3025 = vpop.f32.mrf.mxu0
    %v3026 = vadd.f32 %v2910, %v3025
    %v3027 = vpop.f32.mrf.mxu0
    %v3028 = vpop.f32.mrf.mxu0
    %3029 = vdwg.mxu0
    %3030 = vmatprep.subr.bf16.mxu0 0
    %3031 = vmatpush1.bf16.msra.mxu0 0
    %3032 = vmatprep.subr.bf16.mxu0 0
    %3033 = vmatpush1.bf16.msra.mxu0 0
    %3034 = vmatprep.subr.bf16.mxu0 0
    %3035 = vmatpush1.bf16.msra.mxu0 0
    %3036 = vmatprep.subr.bf16.mxu0 0
    %3037 = vmatpush1.bf16.msra.mxu0 0
    %3038 = vmatprep.subr.bf16.mxu0 0
    %3039 = vmatpush1.bf16.msra.mxu0 0
    %3040 = vmatprep.subr.bf16.mxu0 0
    %3041 = vmatpush1.bf16.msra.mxu0 0
    %3042 = vmatprep.subr.bf16.mxu0 0
    %3043 = vmatpush1.bf16.msra.mxu0 %v2979
    %3044 = vmatprep.subr.bf16.mxu0 0
    %3045 = vmatpush1.bf16.msra.mxu0 %v2976
    %3046 = vmatprep.subr.bf16.mxu0 0
    %3047 = vmatpush2.bf16.msra.mxu0 0
    %3048 = vmatprep.subr.bf16.mxu0 0
    %3049 = vmatpush2.bf16.msra.mxu0 0
    %3050 = vmatprep.subr.bf16.mxu0 0
    %3051 = vmatpush2.bf16.msra.mxu0 0
    %3052 = vmatprep.subr.bf16.mxu0 0
    %3053 = vmatpush2.bf16.msra.mxu0 0
    %3054 = vmatprep.subr.bf16.mxu0 0
    %3055 = vmatpush2.bf16.msra.mxu0 0
    %3056 = vmatprep.subr.bf16.mxu0 0
    %3057 = vmatpush2.bf16.msra.mxu0 0
    %3058 = vmatprep.subr.bf16.mxu0 0
    %3059 = vmatpush2.bf16.msra.mxu0 0
    %3060 = vmatprep.subr.bf16.mxu0 0
    %3061 = vmatpush2.bf16.msra.mxu0 0
    %3062 = vmatprep.mubr.bf16.mxu0 0
    %3063 = vmatmul.mubr.bf16.gmra.mxu0 %v2987
    %v3064 = vpop.f32.mrf.mxu0
    %v3065 = vadd.f32 %v2949, %v3064
    %v3066 = vpop.f32.mrf.mxu0
    %v3067 = vpop.f32.mrf.mxu0
    %v3068 = vpop.f32.mrf.mxu0
    %3069 = vdwg.mxu0
    %v3070 = vld [vmem:[%s1966] sm:$0xff]
    %v3071 = vpack.c.bf16 %v3070, %v3070
    %v3072 = vld [vmem:[%s5 + $0x60] sm:$0xff]
    %v3073 = vld [vmem:[%s5 + $0x68] sm:$0xf]
    %v3074 = vld [vmem:[%s5 + $0x6c] sm:$0xff]
    %v3075 = vld [vmem:[%s5 + $0x74] sm:$0xf]
    %v3076 = vld [vmem:[%s5 + $0x78] sm:$0xff]
    %v3077 = vld [vmem:[%s5 + $0x80] sm:$0xf]
    %v3078 = vld [vmem:[%s5 + $0x84] sm:$0xff]
    %v3079 = vld [vmem:[%s5 + $0x8c] sm:$0xf]
    %v3088 = vunpack.c.l.b16 %v3072
    %v3089 = vunpack.c.h.b16 %v3072
    %v3090 = vunpack.c.l.b16 %v3073
    %v3091 = vunpack.c.l.b16 %v3074
    %v3092 = vunpack.c.h.b16 %v3074
    %v3093 = vunpack.c.l.b16 %v3075
    %v3094 = vunpack.c.l.b16 %v3076
    %v3095 = vunpack.c.h.b16 %v3076
    %v3096 = vunpack.c.l.b16 %v3077
    %v3097 = vunpack.c.l.b16 %v3078
    %v3098 = vunpack.c.h.b16 %v3078
    %v3099 = vunpack.c.l.b16 %v3079
    %v3100 = vpack.c.b16 %v3091, %v3088
    %v3101 = vpack.c.b16 %v3092, %v3089
    %v3102 = vpack.c.b16 %v3093, %v3090
    %v3103 = vpack.c.b16 %v3097, %v3094
    %v3104 = vpack.c.b16 %v3098, %v3095
    %v3105 = vpack.c.b16 %v3099, %v3096
    %v3113 = vsel %vm1461, %v3071, 0
    %3115 = vmatprep.subr.bf16.mxu0 0
    %3116 = vmatpush1.bf16.msra.mxu0 0
    %3117 = vmatprep.subr.bf16.mxu0 0
    %3118 = vmatpush1.bf16.msra.mxu0 0
    %3119 = vmatprep.subr.bf16.mxu0 0
    %3120 = vmatpush1.bf16.msra.mxu0 0
    %3121 = vmatprep.subr.bf16.mxu0 0
    %3122 = vmatpush1.bf16.msra.mxu0 0
    %3123 = vmatprep.subr.bf16.mxu0 0
    %3124 = vmatpush1.bf16.msra.mxu0 0
    %3125 = vmatprep.subr.bf16.mxu0 0
    %3126 = vmatpush1.bf16.msra.mxu0 0
    %3127 = vmatprep.subr.bf16.mxu0 %v3104
    %3128 = vmatpush1.bf16.msra.mxu0 %v3103
    %3129 = vmatprep.subr.bf16.mxu0 %v3101
    %3130 = vmatpush1.bf16.msra.mxu0 %v3100
    %3131 = vmatprep.subr.bf16.mxu0 0
    %3132 = vmatpush2.bf16.msra.mxu0 0
    %3133 = vmatprep.subr.bf16.mxu0 0
    %3134 = vmatpush2.bf16.msra.mxu0 0
    %3135 = vmatprep.subr.bf16.mxu0 0
    %3136 = vmatpush2.bf16.msra.mxu0 0
    %3137 = vmatprep.subr.bf16.mxu0 0
    %3138 = vmatpush2.bf16.msra.mxu0 0
    %3139 = vmatprep.subr.bf16.mxu0 0
    %3140 = vmatpush2.bf16.msra.mxu0 0
    %3141 = vmatprep.subr.bf16.mxu0 0
    %3142 = vmatpush2.bf16.msra.mxu0 0
    %3143 = vmatprep.subr.bf16.mxu0 0
    %3144 = vmatpush2.bf16.msra.mxu0 0
    %3145 = vmatprep.subr.bf16.mxu0 0
    %3146 = vmatpush2.bf16.msra.mxu0 0
    %3147 = vmatprep.mubr.bf16.mxu0 0
    %3148 = vmatmul.mubr.bf16.gmra.mxu0 %v3113
    %v3149 = vpop.f32.mrf.mxu0
    %v3150 = vadd.f32 0.0, %v3149
    %v3151 = vpop.f32.mrf.mxu0
    %v3152 = vadd.f32 0.0, %v3151
    %v3153 = vpop.f32.mrf.mxu0
    %v3154 = vpop.f32.mrf.mxu0
    %3155 = vdwg.mxu0
    %3156 = vmatprep.subr.bf16.mxu0 0
    %3157 = vmatpush1.bf16.msra.mxu0 0
    %3158 = vmatprep.subr.bf16.mxu0 0
    %3159 = vmatpush1.bf16.msra.mxu0 0
    %3160 = vmatprep.subr.bf16.mxu0 0
    %3161 = vmatpush1.bf16.msra.mxu0 0
    %3162 = vmatprep.subr.bf16.mxu0 0
    %3163 = vmatpush1.bf16.msra.mxu0 0
    %3164 = vmatprep.subr.bf16.mxu0 0
    %3165 = vmatpush1.bf16.msra.mxu0 0
    %3166 = vmatprep.subr.bf16.mxu0 0
    %3167 = vmatpush1.bf16.msra.mxu0 0
    %3168 = vmatprep.subr.bf16.mxu0 0
    %3169 = vmatpush1.bf16.msra.mxu0 %v3105
    %3170 = vmatprep.subr.bf16.mxu0 0
    %3171 = vmatpush1.bf16.msra.mxu0 %v3102
    %3172 = vmatprep.subr.bf16.mxu0 0
    %3173 = vmatpush2.bf16.msra.mxu0 0
    %3174 = vmatprep.subr.bf16.mxu0 0
    %3175 = vmatpush2.bf16.msra.mxu0 0
    %3176 = vmatprep.subr.bf16.mxu0 0
    %3177 = vmatpush2.bf16.msra.mxu0 0
    %3178 = vmatprep.subr.bf16.mxu0 0
    %3179 = vmatpush2.bf16.msra.mxu0 0
    %3180 = vmatprep.subr.bf16.mxu0 0
    %3181 = vmatpush2.bf16.msra.mxu0 0
    %3182 = vmatprep.subr.bf16.mxu0 0
    %3183 = vmatpush2.bf16.msra.mxu0 0
    %3184 = vmatprep.subr.bf16.mxu0 0
    %3185 = vmatpush2.bf16.msra.mxu0 0
    %3186 = vmatprep.subr.bf16.mxu0 0
    %3187 = vmatpush2.bf16.msra.mxu0 0
    %3188 = vmatprep.mubr.bf16.mxu0 0
    %3189 = vmatmul.mubr.bf16.gmra.mxu0 %v3113
    %v3190 = vpop.f32.mrf.mxu0
    %v3191 = vadd.f32 0.0, %v3190
    %v3192 = vpop.f32.mrf.mxu0
    %v3193 = vpop.f32.mrf.mxu0
    %v3194 = vpop.f32.mrf.mxu0
    %3195 = vdwg.mxu0
    %v3196 = vadd.f32 %v3024, %v3150
    %v3197 = vadd.f32 %v3026, %v3152
    %v3198 = vadd.f32 %v3065, %v3191
    %v3199 = vld [vmem:[%s2136] sm:$0xff]
    %v3200 = vpack.c.bf16 %v3199, %v3199
    %v3201 = vld [vmem:[%s5 + $0x90] sm:$0xff]
    %v3202 = vld [vmem:[%s5 + $0x98] sm:$0xf]
    %v3203 = vld [vmem:[%s5 + $0x9c] sm:$0xff]
    %v3204 = vld [vmem:[%s5 + $0xa4] sm:$0xf]
    %v3205 = vld [vmem:[%s5 + $0xa8] sm:$0xff]
    %v3206 = vld [vmem:[%s5 + $0xb0] sm:$0xf]
    %v3207 = vld [vmem:[%s5 + $0xb4] sm:$0xff]
    %v3208 = vld [vmem:[%s5 + $0xbc] sm:$0xf]
    %v3217 = vunpack.c.l.b16 %v3201
    %v3218 = vunpack.c.h.b16 %v3201
    %v3219 = vunpack.c.l.b16 %v3202
    %v3220 = vunpack.c.l.b16 %v3203
    %v3221 = vunpack.c.h.b16 %v3203
    %v3222 = vunpack.c.l.b16 %v3204
    %v3223 = vunpack.c.l.b16 %v3205
    %v3224 = vunpack.c.h.b16 %v3205
    %v3225 = vunpack.c.l.b16 %v3206
    %v3226 = vunpack.c.l.b16 %v3207
    %v3227 = vunpack.c.h.b16 %v3207
    %v3228 = vunpack.c.l.b16 %v3208
    %v3229 = vpack.c.b16 %v3220, %v3217
    %v3230 = vpack.c.b16 %v3221, %v3218
    %v3231 = vpack.c.b16 %v3222, %v3219
    %v3232 = vpack.c.b16 %v3226, %v3223
    %v3233 = vpack.c.b16 %v3227, %v3224
    %v3234 = vpack.c.b16 %v3228, %v3225
    %v3242 = vsel %vm1461, %v3200, 0
    %3244 = vmatprep.subr.bf16.mxu0 0
    %3245 = vmatpush1.bf16.msra.mxu0 0
    %3246 = vmatprep.subr.bf16.mxu0 0
    %3247 = vmatpush1.bf16.msra.mxu0 0
    %3248 = vmatprep.subr.bf16.mxu0 0
    %3249 = vmatpush1.bf16.msra.mxu0 0
    %3250 = vmatprep.subr.bf16.mxu0 0
    %3251 = vmatpush1.bf16.msra.mxu0 0
    %3252 = vmatprep.subr.bf16.mxu0 0
    %3253 = vmatpush1.bf16.msra.mxu0 0
    %3254 = vmatprep.subr.bf16.mxu0 0
    %3255 = vmatpush1.bf16.msra.mxu0 0
    %3256 = vmatprep.subr.bf16.mxu0 %v3233
    %3257 = vmatpush1.bf16.msra.mxu0 %v3232
    %3258 = vmatprep.subr.bf16.mxu0 %v3230
    %3259 = vmatpush1.bf16.msra.mxu0 %v3229
    %3260 = vmatprep.subr.bf16.mxu0 0
    %3261 = vmatpush2.bf16.msra.mxu0 0
    %3262 = vmatprep.subr.bf16.mxu0 0
    %3263 = vmatpush2.bf16.msra.mxu0 0
    %3264 = vmatprep.subr.bf16.mxu0 0
    %3265 = vmatpush2.bf16.msra.mxu0 0
    %3266 = vmatprep.subr.bf16.mxu0 0
    %3267 = vmatpush2.bf16.msra.mxu0 0
    %3268 = vmatprep.subr.bf16.mxu0 0
    %3269 = vmatpush2.bf16.msra.mxu0 0
    %3270 = vmatprep.subr.bf16.mxu0 0
    %3271 = vmatpush2.bf16.msra.mxu0 0
    %3272 = vmatprep.subr.bf16.mxu0 0
    %3273 = vmatpush2.bf16.msra.mxu0 0
    %3274 = vmatprep.subr.bf16.mxu0 0
    %3275 = vmatpush2.bf16.msra.mxu0 0
    %3276 = vmatprep.mubr.bf16.mxu0 0
    %3277 = vmatmul.mubr.bf16.gmra.mxu0 %v3242
    %v3278 = vpop.f32.mrf.mxu0
    %v3279 = vadd.f32 0.0, %v3278
    %v3280 = vpop.f32.mrf.mxu0
    %v3281 = vadd.f32 0.0, %v3280
    %v3282 = vpop.f32.mrf.mxu0
    %v3283 = vpop.f32.mrf.mxu0
    %3284 = vdwg.mxu0
    %3285 = vmatprep.subr.bf16.mxu0 0
    %3286 = vmatpush1.bf16.msra.mxu0 0
    %3287 = vmatprep.subr.bf16.mxu0 0
    %3288 = vmatpush1.bf16.msra.mxu0 0
    %3289 = vmatprep.subr.bf16.mxu0 0
    %3290 = vmatpush1.bf16.msra.mxu0 0
    %3291 = vmatprep.subr.bf16.mxu0 0
    %3292 = vmatpush1.bf16.msra.mxu0 0
    %3293 = vmatprep.subr.bf16.mxu0 0
    %3294 = vmatpush1.bf16.msra.mxu0 0
    %3295 = vmatprep.subr.bf16.mxu0 0
    %3296 = vmatpush1.bf16.msra.mxu0 0
    %3297 = vmatprep.subr.bf16.mxu0 0
    %3298 = vmatpush1.bf16.msra.mxu0 %v3234
    %3299 = vmatprep.subr.bf16.mxu0 0
    %3300 = vmatpush1.bf16.msra.mxu0 %v3231
    %3301 = vmatprep.subr.bf16.mxu0 0
    %3302 = vmatpush2.bf16.msra.mxu0 0
    %3303 = vmatprep.subr.bf16.mxu0 0
    %3304 = vmatpush2.bf16.msra.mxu0 0
    %3305 = vmatprep.subr.bf16.mxu0 0
    %3306 = vmatpush2.bf16.msra.mxu0 0
    %3307 = vmatprep.subr.bf16.mxu0 0
    %3308 = vmatpush2.bf16.msra.mxu0 0
    %3309 = vmatprep.subr.bf16.mxu0 0
    %3310 = vmatpush2.bf16.msra.mxu0 0
    %3311 = vmatprep.subr.bf16.mxu0 0
    %3312 = vmatpush2.bf16.msra.mxu0 0
    %3313 = vmatprep.subr.bf16.mxu0 0
    %3314 = vmatpush2.bf16.msra.mxu0 0
    %3315 = vmatprep.subr.bf16.mxu0 0
    %3316 = vmatpush2.bf16.msra.mxu0 0
    %3317 = vmatprep.mubr.bf16.mxu0 0
    %3318 = vmatmul.mubr.bf16.gmra.mxu0 %v3242
    %v3319 = vpop.f32.mrf.mxu0
    %v3320 = vadd.f32 0.0, %v3319
    %v3321 = vpop.f32.mrf.mxu0
    %v3322 = vpop.f32.mrf.mxu0
    %v3323 = vpop.f32.mrf.mxu0
    %3324 = vdwg.mxu0
    %v3325 = vadd.f32 %v3196, %v3279
    %v3326 = vadd.f32 %v3197, %v3281
    %v3327 = vadd.f32 %v3198, %v3320
    %v3328 = vld [vmem:[%s2306] sm:$0xff]
    %v3329 = vpack.c.bf16 %v3328, %v3328
    %v3330 = vld [vmem:[%s5 + $0xc0] sm:$0xff]
    %v3331 = vld [vmem:[%s5 + $0xc8] sm:$0xf]
    %v3332 = vld [vmem:[%s5 + $0xcc] sm:$0xff]
    %v3333 = vld [vmem:[%s5 + $0xd4] sm:$0xf]
    %v3334 = vld [vmem:[%s5 + $0xd8] sm:$0xff]
    %v3335 = vld [vmem:[%s5 + $0xe0] sm:$0xf]
    %v3336 = vld [vmem:[%s5 + $0xe4] sm:$0xff]
    %v3337 = vld [vmem:[%s5 + $0xec] sm:$0xf]
    %v3346 = vunpack.c.l.b16 %v3330
    %v3347 = vunpack.c.h.b16 %v3330
    %v3348 = vunpack.c.l.b16 %v3331
    %v3349 = vunpack.c.l.b16 %v3332
    %v3350 = vunpack.c.h.b16 %v3332
    %v3351 = vunpack.c.l.b16 %v3333
    %v3352 = vunpack.c.l.b16 %v3334
    %v3353 = vunpack.c.h.b16 %v3334
    %v3354 = vunpack.c.l.b16 %v3335
    %v3355 = vunpack.c.l.b16 %v3336
    %v3356 = vunpack.c.h.b16 %v3336
    %v3357 = vunpack.c.l.b16 %v3337
    %v3358 = vpack.c.b16 %v3349, %v3346
    %v3359 = vpack.c.b16 %v3350, %v3347
    %v3360 = vpack.c.b16 %v3351, %v3348
    %v3361 = vpack.c.b16 %v3355, %v3352
    %v3362 = vpack.c.b16 %v3356, %v3353
    %v3363 = vpack.c.b16 %v3357, %v3354
    %v3371 = vsel %vm1461, %v3329, 0
    %3373 = vmatprep.subr.bf16.mxu0 0
    %3374 = vmatpush1.bf16.msra.mxu0 0
    %3375 = vmatprep.subr.bf16.mxu0 0
    %3376 = vmatpush1.bf16.msra.mxu0 0
    %3377 = vmatprep.subr.bf16.mxu0 0
    %3378 = vmatpush1.bf16.msra.mxu0 0
    %3379 = vmatprep.subr.bf16.mxu0 0
    %3380 = vmatpush1.bf16.msra.mxu0 0
    %3381 = vmatprep.subr.bf16.mxu0 0
    %3382 = vmatpush1.bf16.msra.mxu0 0
    %3383 = vmatprep.subr.bf16.mxu0 0
    %3384 = vmatpush1.bf16.msra.mxu0 0
    %3385 = vmatprep.subr.bf16.mxu0 %v3362
    %3386 = vmatpush1.bf16.msra.mxu0 %v3361
    %3387 = vmatprep.subr.bf16.mxu0 %v3359
    %3388 = vmatpush1.bf16.msra.mxu0 %v3358
    %3389 = vmatprep.subr.bf16.mxu0 0
    %3390 = vmatpush2.bf16.msra.mxu0 0
    %3391 = vmatprep.subr.bf16.mxu0 0
    %3392 = vmatpush2.bf16.msra.mxu0 0
    %3393 = vmatprep.subr.bf16.mxu0 0
    %3394 = vmatpush2.bf16.msra.mxu0 0
    %3395 = vmatprep.subr.bf16.mxu0 0
    %3396 = vmatpush2.bf16.msra.mxu0 0
    %3397 = vmatprep.subr.bf16.mxu0 0
    %3398 = vmatpush2.bf16.msra.mxu0 0
    %3399 = vmatprep.subr.bf16.mxu0 0
    %3400 = vmatpush2.bf16.msra.mxu0 0
    %3401 = vmatprep.subr.bf16.mxu0 0
    %3402 = vmatpush2.bf16.msra.mxu0 0
    %3403 = vmatprep.subr.bf16.mxu0 0
    %3404 = vmatpush2.bf16.msra.mxu0 0
    %3405 = vmatprep.mubr.bf16.mxu0 0
    %3406 = vmatmul.mubr.bf16.gmra.mxu0 %v3371
    %v3407 = vpop.f32.mrf.mxu0
    %v3408 = vadd.f32 0.0, %v3407
    %v3409 = vpop.f32.mrf.mxu0
    %v3410 = vadd.f32 0.0, %v3409
    %v3411 = vpop.f32.mrf.mxu0
    %v3412 = vpop.f32.mrf.mxu0
    %3413 = vdwg.mxu0
    %3414 = vmatprep.subr.bf16.mxu0 0
    %3415 = vmatpush1.bf16.msra.mxu0 0
    %3416 = vmatprep.subr.bf16.mxu0 0
    %3417 = vmatpush1.bf16.msra.mxu0 0
    %3418 = vmatprep.subr.bf16.mxu0 0
    %3419 = vmatpush1.bf16.msra.mxu0 0
    %3420 = vmatprep.subr.bf16.mxu0 0
    %3421 = vmatpush1.bf16.msra.mxu0 0
    %3422 = vmatprep.subr.bf16.mxu0 0
    %3423 = vmatpush1.bf16.msra.mxu0 0
    %3424 = vmatprep.subr.bf16.mxu0 0
    %3425 = vmatpush1.bf16.msra.mxu0 0
    %3426 = vmatprep.subr.bf16.mxu0 0
    %3427 = vmatpush1.bf16.msra.mxu0 %v3363
    %3428 = vmatprep.subr.bf16.mxu0 0
    %3429 = vmatpush1.bf16.msra.mxu0 %v3360
    %3430 = vmatprep.subr.bf16.mxu0 0
    %3431 = vmatpush2.bf16.msra.mxu0 0
    %3432 = vmatprep.subr.bf16.mxu0 0
    %3433 = vmatpush2.bf16.msra.mxu0 0
    %3434 = vmatprep.subr.bf16.mxu0 0
    %3435 = vmatpush2.bf16.msra.mxu0 0
    %3436 = vmatprep.subr.bf16.mxu0 0
    %3437 = vmatpush2.bf16.msra.mxu0 0
    %3438 = vmatprep.subr.bf16.mxu0 0
    %3439 = vmatpush2.bf16.msra.mxu0 0
    %3440 = vmatprep.subr.bf16.mxu0 0
    %3441 = vmatpush2.bf16.msra.mxu0 0
    %3442 = vmatprep.subr.bf16.mxu0 0
    %3443 = vmatpush2.bf16.msra.mxu0 0
    %3444 = vmatprep.subr.bf16.mxu0 0
    %3445 = vmatpush2.bf16.msra.mxu0 0
    %3446 = vmatprep.mubr.bf16.mxu0 0
    %3447 = vmatmul.mubr.bf16.gmra.mxu0 %v3371
    %v3448 = vpop.f32.mrf.mxu0
    %v3449 = vadd.f32 0.0, %v3448
    %v3450 = vpop.f32.mrf.mxu0
    %v3451 = vpop.f32.mrf.mxu0
    %v3452 = vpop.f32.mrf.mxu0
    %3453 = vdwg.mxu0
    %v3454 = vadd.f32 %v3325, %v3408
    %v3455 = vadd.f32 %v3326, %v3410
    %v3456 = vadd.f32 %v3327, %v3449
    %v3457 = vld [vmem:[%s2476] sm:$0xff]
    %v3458 = vpack.c.bf16 %v3457, %v3457
    %v3459 = vld [vmem:[%s5 + $0xf0] sm:$0xff]
    %v3460 = vld [vmem:[%s5 + $0xf8] sm:$0xf]
    %v3461 = vld [vmem:[%s5 + $0xfc] sm:$0xff]
    %v3462 = vld [vmem:[%s5 + $0x104] sm:$0xf]
    %v3463 = vld [vmem:[%s5 + $0x108] sm:$0xff]
    %v3464 = vld [vmem:[%s5 + $0x110] sm:$0xf]
    %v3465 = vld [vmem:[%s5 + $0x114] sm:$0xff]
    %v3466 = vld [vmem:[%s5 + $0x11c] sm:$0xf]
    %v3475 = vunpack.c.l.b16 %v3459
    %v3476 = vunpack.c.h.b16 %v3459
    %v3477 = vunpack.c.l.b16 %v3460
    %v3478 = vunpack.c.l.b16 %v3461
    %v3479 = vunpack.c.h.b16 %v3461
    %v3480 = vunpack.c.l.b16 %v3462
    %v3481 = vunpack.c.l.b16 %v3463
    %v3482 = vunpack.c.h.b16 %v3463
    %v3483 = vunpack.c.l.b16 %v3464
    %v3484 = vunpack.c.l.b16 %v3465
    %v3485 = vunpack.c.h.b16 %v3465
    %v3486 = vunpack.c.l.b16 %v3466
    %v3487 = vpack.c.b16 %v3478, %v3475
    %v3488 = vpack.c.b16 %v3479, %v3476
    %v3489 = vpack.c.b16 %v3480, %v3477
    %v3490 = vpack.c.b16 %v3484, %v3481
    %v3491 = vpack.c.b16 %v3485, %v3482
    %v3492 = vpack.c.b16 %v3486, %v3483
    %v3500 = vsel %vm1461, %v3458, 0
    %3502 = vmatprep.subr.bf16.mxu0 0
    %3503 = vmatpush1.bf16.msra.mxu0 0
    %3504 = vmatprep.subr.bf16.mxu0 0
    %3505 = vmatpush1.bf16.msra.mxu0 0
    %3506 = vmatprep.subr.bf16.mxu0 0
    %3507 = vmatpush1.bf16.msra.mxu0 0
    %3508 = vmatprep.subr.bf16.mxu0 0
    %3509 = vmatpush1.bf16.msra.mxu0 0
    %3510 = vmatprep.subr.bf16.mxu0 0
    %3511 = vmatpush1.bf16.msra.mxu0 0
    %3512 = vmatprep.subr.bf16.mxu0 0
    %3513 = vmatpush1.bf16.msra.mxu0 0
    %3514 = vmatprep.subr.bf16.mxu0 %v3491
    %3515 = vmatpush1.bf16.msra.mxu0 %v3490
    %3516 = vmatprep.subr.bf16.mxu0 %v3488
    %3517 = vmatpush1.bf16.msra.mxu0 %v3487
    %3518 = vmatprep.subr.bf16.mxu0 0
    %3519 = vmatpush2.bf16.msra.mxu0 0
    %3520 = vmatprep.subr.bf16.mxu0 0
    %3521 = vmatpush2.bf16.msra.mxu0 0
    %3522 = vmatprep.subr.bf16.mxu0 0
    %3523 = vmatpush2.bf16.msra.mxu0 0
    %3524 = vmatprep.subr.bf16.mxu0 0
    %3525 = vmatpush2.bf16.msra.mxu0 0
    %3526 = vmatprep.subr.bf16.mxu0 0
    %3527 = vmatpush2.bf16.msra.mxu0 0
    %3528 = vmatprep.subr.bf16.mxu0 0
    %3529 = vmatpush2.bf16.msra.mxu0 0
    %3530 = vmatprep.subr.bf16.mxu0 0
    %3531 = vmatpush2.bf16.msra.mxu0 0
    %3532 = vmatprep.subr.bf16.mxu0 0
    %3533 = vmatpush2.bf16.msra.mxu0 0
    %3534 = vmatprep.mubr.bf16.mxu0 0
    %3535 = vmatmul.mubr.bf16.gmra.mxu0 %v3500
    %v3536 = vpop.f32.mrf.mxu0
    %v3537 = vadd.f32 0.0, %v3536
    %v3538 = vpop.f32.mrf.mxu0
    %v3539 = vadd.f32 0.0, %v3538
    %v3540 = vpop.f32.mrf.mxu0
    %v3541 = vpop.f32.mrf.mxu0
    %3542 = vdwg.mxu0
    %3543 = vmatprep.subr.bf16.mxu0 0
    %3544 = vmatpush1.bf16.msra.mxu0 0
    %3545 = vmatprep.subr.bf16.mxu0 0
    %3546 = vmatpush1.bf16.msra.mxu0 0
    %3547 = vmatprep.subr.bf16.mxu0 0
    %3548 = vmatpush1.bf16.msra.mxu0 0
    %3549 = vmatprep.subr.bf16.mxu0 0
    %3550 = vmatpush1.bf16.msra.mxu0 0
    %3551 = vmatprep.subr.bf16.mxu0 0
    %3552 = vmatpush1.bf16.msra.mxu0 0
    %3553 = vmatprep.subr.bf16.mxu0 0
    %3554 = vmatpush1.bf16.msra.mxu0 0
    %3555 = vmatprep.subr.bf16.mxu0 0
    %3556 = vmatpush1.bf16.msra.mxu0 %v3492
    %3557 = vmatprep.subr.bf16.mxu0 0
    %3558 = vmatpush1.bf16.msra.mxu0 %v3489
    %3559 = vmatprep.subr.bf16.mxu0 0
    %3560 = vmatpush2.bf16.msra.mxu0 0
    %3561 = vmatprep.subr.bf16.mxu0 0
    %3562 = vmatpush2.bf16.msra.mxu0 0
    %3563 = vmatprep.subr.bf16.mxu0 0
    %3564 = vmatpush2.bf16.msra.mxu0 0
    %3565 = vmatprep.subr.bf16.mxu0 0
    %3566 = vmatpush2.bf16.msra.mxu0 0
    %3567 = vmatprep.subr.bf16.mxu0 0
    %3568 = vmatpush2.bf16.msra.mxu0 0
    %3569 = vmatprep.subr.bf16.mxu0 0
    %3570 = vmatpush2.bf16.msra.mxu0 0
    %3571 = vmatprep.subr.bf16.mxu0 0
    %3572 = vmatpush2.bf16.msra.mxu0 0
    %3573 = vmatprep.subr.bf16.mxu0 0
    %3574 = vmatpush2.bf16.msra.mxu0 0
    %3575 = vmatprep.mubr.bf16.mxu0 0
    %3576 = vmatmul.mubr.bf16.gmra.mxu0 %v3500
    %v3577 = vpop.f32.mrf.mxu0
    %v3578 = vadd.f32 0.0, %v3577
    %v3579 = vpop.f32.mrf.mxu0
    %v3580 = vpop.f32.mrf.mxu0
    %v3581 = vpop.f32.mrf.mxu0
    %3582 = vdwg.mxu0
    %v3583 = vadd.f32 %v3454, %v3537
    %v3584 = vadd.f32 %v3455, %v3539
    %v3585 = vadd.f32 %v3456, %v3578
    %v3586 = vld [vmem:[%s2646] sm:$0xff]
    %v3587 = vpack.c.bf16 %v3586, %v3586
    %v3588 = vld [vmem:[%s5 + $0x120] sm:$0xff]
    %v3589 = vld [vmem:[%s5 + $0x128] sm:$0xf]
    %v3590 = vld [vmem:[%s5 + $0x12c] sm:$0xff]
    %v3591 = vld [vmem:[%s5 + $0x134] sm:$0xf]
    %v3592 = vld [vmem:[%s5 + $0x138] sm:$0xff]
    %v3593 = vld [vmem:[%s5 + $0x140] sm:$0xf]
    %v3594 = vld [vmem:[%s5 + $0x144] sm:$0xff]
    %v3595 = vld [vmem:[%s5 + $0x14c] sm:$0xf]
    %v3604 = vunpack.c.l.b16 %v3588
    %v3605 = vunpack.c.h.b16 %v3588
    %v3606 = vunpack.c.l.b16 %v3589
    %v3607 = vunpack.c.l.b16 %v3590
    %v3608 = vunpack.c.h.b16 %v3590
    %v3609 = vunpack.c.l.b16 %v3591
    %v3610 = vunpack.c.l.b16 %v3592
    %v3611 = vunpack.c.h.b16 %v3592
    %v3612 = vunpack.c.l.b16 %v3593
    %v3613 = vunpack.c.l.b16 %v3594
    %v3614 = vunpack.c.h.b16 %v3594
    %v3615 = vunpack.c.l.b16 %v3595
    %v3616 = vpack.c.b16 %v3607, %v3604
    %v3617 = vpack.c.b16 %v3608, %v3605
    %v3618 = vpack.c.b16 %v3609, %v3606
    %v3619 = vpack.c.b16 %v3613, %v3610
    %v3620 = vpack.c.b16 %v3614, %v3611
    %v3621 = vpack.c.b16 %v3615, %v3612
    %v3629 = vsel %vm1461, %v3587, 0
    %3631 = vmatprep.subr.bf16.mxu0 0
    %3632 = vmatpush1.bf16.msra.mxu0 0
    %3633 = vmatprep.subr.bf16.mxu0 0
    %3634 = vmatpush1.bf16.msra.mxu0 0
    %3635 = vmatprep.subr.bf16.mxu0 0
    %3636 = vmatpush1.bf16.msra.mxu0 0
    %3637 = vmatprep.subr.bf16.mxu0 0
    %3638 = vmatpush1.bf16.msra.mxu0 0
    %3639 = vmatprep.subr.bf16.mxu0 0
    %3640 = vmatpush1.bf16.msra.mxu0 0
    %3641 = vmatprep.subr.bf16.mxu0 0
    %3642 = vmatpush1.bf16.msra.mxu0 0
    %3643 = vmatprep.subr.bf16.mxu0 %v3620
    %3644 = vmatpush1.bf16.msra.mxu0 %v3619
    %3645 = vmatprep.subr.bf16.mxu0 %v3617
    %3646 = vmatpush1.bf16.msra.mxu0 %v3616
    %3647 = vmatprep.subr.bf16.mxu0 0
    %3648 = vmatpush2.bf16.msra.mxu0 0
    %3649 = vmatprep.subr.bf16.mxu0 0
    %3650 = vmatpush2.bf16.msra.mxu0 0
    %3651 = vmatprep.subr.bf16.mxu0 0
    %3652 = vmatpush2.bf16.msra.mxu0 0
    %3653 = vmatprep.subr.bf16.mxu0 0
    %3654 = vmatpush2.bf16.msra.mxu0 0
    %3655 = vmatprep.subr.bf16.mxu0 0
    %3656 = vmatpush2.bf16.msra.mxu0 0
    %3657 = vmatprep.subr.bf16.mxu0 0
    %3658 = vmatpush2.bf16.msra.mxu0 0
    %3659 = vmatprep.subr.bf16.mxu0 0
    %3660 = vmatpush2.bf16.msra.mxu0 0
    %3661 = vmatprep.subr.bf16.mxu0 0
    %3662 = vmatpush2.bf16.msra.mxu0 0
    %3663 = vmatprep.mubr.bf16.mxu0 0
    %3664 = vmatmul.mubr.bf16.gmra.mxu0 %v3629
    %v3665 = vpop.f32.mrf.mxu0
    %v3666 = vadd.f32 0.0, %v3665
    %v3667 = vpop.f32.mrf.mxu0
    %v3668 = vadd.f32 0.0, %v3667
    %v3669 = vpop.f32.mrf.mxu0
    %v3670 = vpop.f32.mrf.mxu0
    %3671 = vdwg.mxu0
    %3672 = vmatprep.subr.bf16.mxu0 0
    %3673 = vmatpush1.bf16.msra.mxu0 0
    %3674 = vmatprep.subr.bf16.mxu0 0
    %3675 = vmatpush1.bf16.msra.mxu0 0
    %3676 = vmatprep.subr.bf16.mxu0 0
    %3677 = vmatpush1.bf16.msra.mxu0 0
    %3678 = vmatprep.subr.bf16.mxu0 0
    %3679 = vmatpush1.bf16.msra.mxu0 0
    %3680 = vmatprep.subr.bf16.mxu0 0
    %3681 = vmatpush1.bf16.msra.mxu0 0
    %3682 = vmatprep.subr.bf16.mxu0 0
    %3683 = vmatpush1.bf16.msra.mxu0 0
    %3684 = vmatprep.subr.bf16.mxu0 0
    %3685 = vmatpush1.bf16.msra.mxu0 %v3621
    %3686 = vmatprep.subr.bf16.mxu0 0
    %3687 = vmatpush1.bf16.msra.mxu0 %v3618
    %3688 = vmatprep.subr.bf16.mxu0 0
    %3689 = vmatpush2.bf16.msra.mxu0 0
    %3690 = vmatprep.subr.bf16.mxu0 0
    %3691 = vmatpush2.bf16.msra.mxu0 0
    %3692 = vmatprep.subr.bf16.mxu0 0
    %3693 = vmatpush2.bf16.msra.mxu0 0
    %3694 = vmatprep.subr.bf16.mxu0 0
    %3695 = vmatpush2.bf16.msra.mxu0 0
    %3696 = vmatprep.subr.bf16.mxu0 0
    %3697 = vmatpush2.bf16.msra.mxu0 0
    %3698 = vmatprep.subr.bf16.mxu0 0
    %3699 = vmatpush2.bf16.msra.mxu0 0
    %3700 = vmatprep.subr.bf16.mxu0 0
    %3701 = vmatpush2.bf16.msra.mxu0 0
    %3702 = vmatprep.subr.bf16.mxu0 0
    %3703 = vmatpush2.bf16.msra.mxu0 0
    %3704 = vmatprep.mubr.bf16.mxu0 0
    %3705 = vmatmul.mubr.bf16.gmra.mxu0 %v3629
    %v3706 = vpop.f32.mrf.mxu0
    %v3707 = vadd.f32 0.0, %v3706
    %v3708 = vpop.f32.mrf.mxu0
    %v3709 = vpop.f32.mrf.mxu0
    %v3710 = vpop.f32.mrf.mxu0
    %3711 = vdwg.mxu0
    %v3712 = vadd.f32 %v3583, %v3666
    %v3713 = vadd.f32 %v3584, %v3668
    %v3714 = vadd.f32 %v3585, %v3707
    %v3715 = vld [vmem:[%s2816] sm:$0xff]
    %v3716 = vpack.c.bf16 %v3715, %v3715
    %v3717 = vld [vmem:[%s5 + $0x150] sm:$0xff]
    %v3718 = vld [vmem:[%s5 + $0x158] sm:$0xf]
    %v3719 = vld [vmem:[%s5 + $0x15c] sm:$0xff]
    %v3720 = vld [vmem:[%s5 + $0x164] sm:$0xf]
    %v3721 = vld [vmem:[%s5 + $0x168] sm:$0xff]
    %v3722 = vld [vmem:[%s5 + $0x170] sm:$0xf]
    %v3723 = vld [vmem:[%s5 + $0x174] sm:$0xff]
    %v3724 = vld [vmem:[%s5 + $0x17c] sm:$0xf]
    %v3733 = vunpack.c.l.b16 %v3717
    %v3734 = vunpack.c.h.b16 %v3717
    %v3735 = vunpack.c.l.b16 %v3718
    %v3736 = vunpack.c.l.b16 %v3719
    %v3737 = vunpack.c.h.b16 %v3719
    %v3738 = vunpack.c.l.b16 %v3720
    %v3739 = vunpack.c.l.b16 %v3721
    %v3740 = vunpack.c.h.b16 %v3721
    %v3741 = vunpack.c.l.b16 %v3722
    %v3742 = vunpack.c.l.b16 %v3723
    %v3743 = vunpack.c.h.b16 %v3723
    %v3744 = vunpack.c.l.b16 %v3724
    %v3745 = vpack.c.b16 %v3736, %v3733
    %v3746 = vpack.c.b16 %v3737, %v3734
    %v3747 = vpack.c.b16 %v3738, %v3735
    %v3748 = vpack.c.b16 %v3742, %v3739
    %v3749 = vpack.c.b16 %v3743, %v3740
    %v3750 = vpack.c.b16 %v3744, %v3741
    %v3758 = vsel %vm1461, %v3716, 0
    %3760 = vmatprep.subr.bf16.mxu0 0
    %3761 = vmatpush1.bf16.msra.mxu0 0
    %3762 = vmatprep.subr.bf16.mxu0 0
    %3763 = vmatpush1.bf16.msra.mxu0 0
    %3764 = vmatprep.subr.bf16.mxu0 0
    %3765 = vmatpush1.bf16.msra.mxu0 0
    %3766 = vmatprep.subr.bf16.mxu0 0
    %3767 = vmatpush1.bf16.msra.mxu0 0
    %3768 = vmatprep.subr.bf16.mxu0 0
    %3769 = vmatpush1.bf16.msra.mxu0 0
    %3770 = vmatprep.subr.bf16.mxu0 0
    %3771 = vmatpush1.bf16.msra.mxu0 0
    %3772 = vmatprep.subr.bf16.mxu0 %v3749
    %3773 = vmatpush1.bf16.msra.mxu0 %v3748
    %3774 = vmatprep.subr.bf16.mxu0 %v3746
    %3775 = vmatpush1.bf16.msra.mxu0 %v3745
    %3776 = vmatprep.subr.bf16.mxu0 0
    %3777 = vmatpush2.bf16.msra.mxu0 0
    %3778 = vmatprep.subr.bf16.mxu0 0
    %3779 = vmatpush2.bf16.msra.mxu0 0
    %3780 = vmatprep.subr.bf16.mxu0 0
    %3781 = vmatpush2.bf16.msra.mxu0 0
    %3782 = vmatprep.subr.bf16.mxu0 0
    %3783 = vmatpush2.bf16.msra.mxu0 0
    %3784 = vmatprep.subr.bf16.mxu0 0
    %3785 = vmatpush2.bf16.msra.mxu0 0
    %3786 = vmatprep.subr.bf16.mxu0 0
    %3787 = vmatpush2.bf16.msra.mxu0 0
    %3788 = vmatprep.subr.bf16.mxu0 0
    %3789 = vmatpush2.bf16.msra.mxu0 0
    %3790 = vmatprep.subr.bf16.mxu0 0
    %3791 = vmatpush2.bf16.msra.mxu0 0
    %3792 = vmatprep.mubr.bf16.mxu0 0
    %3793 = vmatmul.mubr.bf16.gmra.mxu0 %v3758
    %v3794 = vpop.f32.mrf.mxu0
    %v3795 = vadd.f32 0.0, %v3794
    %v3796 = vpop.f32.mrf.mxu0
    %v3797 = vadd.f32 0.0, %v3796
    %v3798 = vpop.f32.mrf.mxu0
    %v3799 = vpop.f32.mrf.mxu0
    %3800 = vdwg.mxu0
    %3801 = vmatprep.subr.bf16.mxu0 0
    %3802 = vmatpush1.bf16.msra.mxu0 0
    %3803 = vmatprep.subr.bf16.mxu0 0
    %3804 = vmatpush1.bf16.msra.mxu0 0
    %3805 = vmatprep.subr.bf16.mxu0 0
    %3806 = vmatpush1.bf16.msra.mxu0 0
    %3807 = vmatprep.subr.bf16.mxu0 0
    %3808 = vmatpush1.bf16.msra.mxu0 0
    %3809 = vmatprep.subr.bf16.mxu0 0
    %3810 = vmatpush1.bf16.msra.mxu0 0
    %3811 = vmatprep.subr.bf16.mxu0 0
    %3812 = vmatpush1.bf16.msra.mxu0 0
    %3813 = vmatprep.subr.bf16.mxu0 0
    %3814 = vmatpush1.bf16.msra.mxu0 %v3750
    %3815 = vmatprep.subr.bf16.mxu0 0
    %3816 = vmatpush1.bf16.msra.mxu0 %v3747
    %3817 = vmatprep.subr.bf16.mxu0 0
    %3818 = vmatpush2.bf16.msra.mxu0 0
    %3819 = vmatprep.subr.bf16.mxu0 0
    %3820 = vmatpush2.bf16.msra.mxu0 0
    %3821 = vmatprep.subr.bf16.mxu0 0
    %3822 = vmatpush2.bf16.msra.mxu0 0
    %3823 = vmatprep.subr.bf16.mxu0 0
    %3824 = vmatpush2.bf16.msra.mxu0 0
    %3825 = vmatprep.subr.bf16.mxu0 0
    %3826 = vmatpush2.bf16.msra.mxu0 0
    %3827 = vmatprep.subr.bf16.mxu0 0
    %3828 = vmatpush2.bf16.msra.mxu0 0
    %3829 = vmatprep.subr.bf16.mxu0 0
    %3830 = vmatpush2.bf16.msra.mxu0 0
    %3831 = vmatprep.subr.bf16.mxu0 0
    %3832 = vmatpush2.bf16.msra.mxu0 0
    %3833 = vmatprep.mubr.bf16.mxu0 0
    %3834 = vmatmul.mubr.bf16.gmra.mxu0 %v3758
    %v3835 = vpop.f32.mrf.mxu0
    %v3836 = vadd.f32 0.0, %v3835
    %v3837 = vpop.f32.mrf.mxu0
    %v3838 = vpop.f32.mrf.mxu0
    %v3839 = vpop.f32.mrf.mxu0
    %3840 = vdwg.mxu0
    %v3841 = vadd.f32 %v3712, %v3795
    %v3842 = vadd.f32 %v3713, %v3797
    %v3843 = vadd.f32 %v3714, %v3836
    %v3844 = vld [vmem:[#allocation15] sm:$0xff]
    %v3845 = vld [vmem:[#allocation10] sm:$0x1]
    %v3846 = vlaneseq
    %v3847 = vshrl.u32 %v3846, 7
    %v3848 = vsub.s32 0, %v3847
    %v3849 = vrot.slane %v3845, %v3848
    %v3850 = vmul.f32 %v3841, %v3849
    %3851 = vadd.xlane.f32.xlu0 %v3850
    %v3852 = vpop.xlane.xlu0 %3851
    %v3853 = vld [vmem:[#allocation12] sm:$0x1]
    %v3854 = vlaneseq
    %v3855 = vshrl.u32 %v3854, 7
    %v3856 = vsub.s32 0, %v3855
    %v3857 = vrot.slane %v3853, %v3856
    %v3858 = vmul.f32 %v3841, %v3857
    %3859 = vadd.xlane.f32.xlu0 %v3858
    %v3860 = vpop.xlane.xlu0 %3859
    %3861 = vxpose.xlu0.b32.start [1/16] %v3852, 128
    %3862 = vxpose.xlu0.b32.cont [2/16] 0.0, 128
    %3863 = vxpose.xlu0.b32.cont [3/16] 0.0, 128
    %3864 = vxpose.xlu0.b32.cont [4/16] 0.0, 128
    %3865 = vxpose.xlu0.b32.cont [5/16] 0.0, 128
    %3866 = vxpose.xlu0.b32.cont [6/16] 0.0, 128
    %3867 = vxpose.xlu0.b32.cont [7/16] 0.0, 128
    %3868 = vxpose.xlu0.b32.cont [8/16] 0.0, 128
    %3869 = vxpose.xlu0.b32.cont [9/16] 0.0, 128
    %3870 = vxpose.xlu0.b32.cont [10/16] 0.0, 128
    %3871 = vxpose.xlu0.b32.cont [11/16] 0.0, 128
    %3872 = vxpose.xlu0.b32.cont [12/16] 0.0, 128
    %3873 = vxpose.xlu0.b32.cont [13/16] 0.0, 128
    %3874 = vxpose.xlu0.b32.cont [14/16] 0.0, 128
    %3875 = vxpose.xlu0.b32.cont [15/16] 0.0, 128
    %3876 = vxpose.xlu0.b32.end [16/16] 0.0, 128
    %v3877 = vpop.trf.xlu0
    %v3878 = vpop.trf.xlu0
    %v3879 = vpop.trf.xlu0
    %v3880 = vpop.trf.xlu0
    %v3881 = vpop.trf.xlu0
    %v3882 = vpop.trf.xlu0
    %v3883 = vpop.trf.xlu0
    %v3884 = vpop.trf.xlu0
    %v3885 = vpop.trf.xlu0
    %v3886 = vpop.trf.xlu0
    %v3887 = vpop.trf.xlu0
    %v3888 = vpop.trf.xlu0
    %v3889 = vpop.trf.xlu0
    %v3890 = vpop.trf.xlu0
    %v3891 = vpop.trf.xlu0
    %v3892 = vpop.trf.xlu0
    %v3893 = vlaneseq
    %v3894 = vshrl.u32 %v3893, 7
    %v3895 = vsub.s32 0, %v3894
    %v3896 = vrot.slane %v3877, %v3895
    %v3897 = vadd.f32 %v3860, %v3896
    %v3898 = vld [vmem:[#allocation13] sm:$0xff]
    %v3899 = vadd.f32 %v3897, %v3898
    %v3900 = vmul.f32 %v3899, 0.2
    %v3901 = vmax.f32 %v3899, %v3900
    %vm3902 = vcmask 64512
    %v3903 = vsel %vm3902, %v3901, -inf
    %3904 = vmax.xlane.f32.xlu0 %v3903
    %v3905 = vpop.xlane.xlu0 %3904
    %v3906 = vsub.f32 %v3901, %v3905
    %v3907 = vmul.f32 %v3906, 1.442695
    %v3908 = vpow.pop %v3907
    %v3909 = vmul.f32 %v3908, %v3844
    %v3910 = vsel %vm3902, %v3909, 0.0
    %3911 = vadd.xlane.f32.xlu0 %v3910
    %v3912 = vpop.xlane.xlu0 %3911
    %v3913 = vmax.f32 %v3912, 1e-16
    %v3914 = vrcp.pop %v3913
    %v3915 = vmul.f32 %v3909, %v3914
    %v3916 = vld [vmem:[#allocation10 + $0x1] sm:$0x1]
    %v3917 = vlaneseq
    %v3918 = vshrl.u32 %v3917, 7
    %v3919 = vsub.s32 0, %v3918
    %v3920 = vrot.slane %v3916, %v3919
    %v3921 = vmul.f32 %v3842, %v3920
    %3922 = vadd.xlane.f32.xlu0 %v3921
    %v3923 = vpop.xlane.xlu0 %3922
    %v3924 = vld [vmem:[#allocation12 + $0x1] sm:$0x1]
    %v3925 = vlaneseq
    %v3926 = vshrl.u32 %v3925, 7
    %v3927 = vsub.s32 0, %v3926
    %v3928 = vrot.slane %v3924, %v3927
    %v3929 = vmul.f32 %v3842, %v3928
    %3930 = vadd.xlane.f32.xlu0 %v3929
    %v3931 = vpop.xlane.xlu0 %3930
    %3932 = vxpose.xlu0.b32.start [1/16] %v3923, 128
    %3933 = vxpose.xlu0.b32.cont [2/16] 0.0, 128
    %3934 = vxpose.xlu0.b32.cont [3/16] 0.0, 128
    %3935 = vxpose.xlu0.b32.cont [4/16] 0.0, 128
    %3936 = vxpose.xlu0.b32.cont [5/16] 0.0, 128
    %3937 = vxpose.xlu0.b32.cont [6/16] 0.0, 128
    %3938 = vxpose.xlu0.b32.cont [7/16] 0.0, 128
    %3939 = vxpose.xlu0.b32.cont [8/16] 0.0, 128
    %3940 = vxpose.xlu0.b32.cont [9/16] 0.0, 128
    %3941 = vxpose.xlu0.b32.cont [10/16] 0.0, 128
    %3942 = vxpose.xlu0.b32.cont [11/16] 0.0, 128
    %3943 = vxpose.xlu0.b32.cont [12/16] 0.0, 128
    %3944 = vxpose.xlu0.b32.cont [13/16] 0.0, 128
    %3945 = vxpose.xlu0.b32.cont [14/16] 0.0, 128
    %3946 = vxpose.xlu0.b32.cont [15/16] 0.0, 128
    %3947 = vxpose.xlu0.b32.end [16/16] 0.0, 128
    %v3948 = vpop.trf.xlu0
    %v3949 = vpop.trf.xlu0
    %v3950 = vpop.trf.xlu0
    %v3951 = vpop.trf.xlu0
    %v3952 = vpop.trf.xlu0
    %v3953 = vpop.trf.xlu0
    %v3954 = vpop.trf.xlu0
    %v3955 = vpop.trf.xlu0
    %v3956 = vpop.trf.xlu0
    %v3957 = vpop.trf.xlu0
    %v3958 = vpop.trf.xlu0
    %v3959 = vpop.trf.xlu0
    %v3960 = vpop.trf.xlu0
    %v3961 = vpop.trf.xlu0
    %v3962 = vpop.trf.xlu0
    %v3963 = vpop.trf.xlu0
    %v3964 = vlaneseq
    %v3965 = vshrl.u32 %v3964, 7
    %v3966 = vsub.s32 0, %v3965
    %v3967 = vrot.slane %v3948, %v3966
    %v3968 = vadd.f32 %v3931, %v3967
    %s3969 = scalar_lea.vmem [#allocation13], 8
    %v3970 = vld [vmem:[%s3969] sm:$0xff]
    %v3971 = vadd.f32 %v3968, %v3970
    %v3972 = vmul.f32 %v3971, 0.2
    %v3973 = vmax.f32 %v3971, %v3972
    %v3974 = vsel %vm3902, %v3973, -inf
    %3975 = vmax.xlane.f32.xlu0 %v3974
    %v3976 = vpop.xlane.xlu0 %3975
    %v3977 = vsub.f32 %v3973, %v3976
    %v3978 = vmul.f32 %v3977, 1.442695
    %v3979 = vpow.pop %v3978
    %v3980 = vmul.f32 %v3979, %v3844
    %v3981 = vsel %vm3902, %v3980, 0.0
    %3982 = vadd.xlane.f32.xlu0 %v3981
    %v3983 = vpop.xlane.xlu0 %3982
    %v3984 = vmax.f32 %v3983, 1e-16
    %v3985 = vrcp.pop %v3984
    %v3986 = vmul.f32 %v3980, %v3985
    %v3988 = vsel %vm3902, %v3986, 0
    %3990 = vmatprep.subr.mxu0 0.0
    %3991 = vmatpush1.msra.mxu0 0.0
    %3992 = vmatprep.subr.mxu0 0.0
    %3993 = vmatpush1.msra.mxu0 0.0
    %3994 = vmatprep.subr.mxu0 0.0
    %3995 = vmatpush1.msra.mxu0 0.0
    %3996 = vmatprep.subr.mxu0 0.0
    %3997 = vmatpush1.msra.mxu0 0.0
    %3998 = vmatprep.subr.mxu0 0.0
    %3999 = vmatpush1.msra.mxu0 0.0
    %4000 = vmatprep.subr.mxu0 0.0
    %4001 = vmatpush1.msra.mxu0 0.0
    %4002 = vmatprep.subr.mxu0 0.0
    %4003 = vmatpush1.msra.mxu0 0.0
    %4004 = vmatprep.subr.mxu0 0.0
    %4005 = vmatpush1.msra.mxu0 0.0
    %4006 = vmatprep.subr.mxu0 0.0
    %4007 = vmatpush1.msra.mxu0 0.0
    %4008 = vmatprep.subr.mxu0 0.0
    %4009 = vmatpush1.msra.mxu0 0.0
    %4010 = vmatprep.subr.mxu0 0.0
    %4011 = vmatpush1.msra.mxu0 0.0
    %4012 = vmatprep.subr.mxu0 0.0
    %4013 = vmatpush1.msra.mxu0 0.0
    %4014 = vmatprep.subr.mxu0 0.0
    %4015 = vmatpush1.msra.mxu0 0.0
    %4016 = vmatprep.subr.mxu0 0.0
    %4017 = vmatpush1.msra.mxu0 0.0
    %4018 = vmatprep.subr.mxu0 0.0
    %4019 = vmatpush1.msra.mxu0 0.0
    %4020 = vmatprep.subr.mxu0 0.0
    %4021 = vmatpush1.msra.mxu0 %v3842
    %4022 = vmatprep.subr.mxu0 0.0
    %4023 = vmatpush2.msra.mxu0 0.0
    %4024 = vmatprep.subr.mxu0 0.0
    %4025 = vmatpush2.msra.mxu0 0.0
    %4026 = vmatprep.subr.mxu0 0.0
    %4027 = vmatpush2.msra.mxu0 0.0
    %4028 = vmatprep.subr.mxu0 0.0
    %4029 = vmatpush2.msra.mxu0 0.0
    %4030 = vmatprep.subr.mxu0 0.0
    %4031 = vmatpush2.msra.mxu0 0.0
    %4032 = vmatprep.subr.mxu0 0.0
    %4033 = vmatpush2.msra.mxu0 0.0
    %4034 = vmatprep.subr.mxu0 0.0
    %4035 = vmatpush2.msra.mxu0 0.0
    %4036 = vmatprep.subr.mxu0 0.0
    %4037 = vmatpush2.msra.mxu0 0.0
    %4038 = vmatprep.subr.mxu0 0.0
    %4039 = vmatpush2.msra.mxu0 0.0
    %4040 = vmatprep.subr.mxu0 0.0
    %4041 = vmatpush2.msra.mxu0 0.0
    %4042 = vmatprep.subr.mxu0 0.0
    %4043 = vmatpush2.msra.mxu0 0.0
    %4044 = vmatprep.subr.mxu0 0.0
    %4045 = vmatpush2.msra.mxu0 0.0
    %4046 = vmatprep.subr.mxu0 0.0
    %4047 = vmatpush2.msra.mxu0 0.0
    %4048 = vmatprep.subr.mxu0 0.0
    %4049 = vmatpush2.msra.mxu0 0.0
    %4050 = vmatprep.subr.mxu0 0.0
    %4051 = vmatpush2.msra.mxu0 0.0
    %4052 = vmatprep.subr.mxu0 0.0
    %4053 = vmatpush2.msra.mxu0 0.0
    %4054 = vmatprep.mubr.f32.mxu0 0.0
    %4055 = vmatmul.mubr.f32.gmra.mxu0 %v3988
    %v4056 = vpop.f32.mrf.mxu0
    %v4057 = vadd.f32 0.0, %v4056
    %v4058 = vpop.f32.mrf.mxu0
    %4059 = vdwg.mxu0
    %v4061 = vsel %vm3902, %v3915, 0
    %4063 = vmatprep.subr.mxu0 0.0
    %4064 = vmatpush1.msra.mxu0 0.0
    %4065 = vmatprep.subr.mxu0 0.0
    %4066 = vmatpush1.msra.mxu0 0.0
    %4067 = vmatprep.subr.mxu0 0.0
    %4068 = vmatpush1.msra.mxu0 0.0
    %4069 = vmatprep.subr.mxu0 0.0
    %4070 = vmatpush1.msra.mxu0 0.0
    %4071 = vmatprep.subr.mxu0 0.0
    %4072 = vmatpush1.msra.mxu0 0.0
    %4073 = vmatprep.subr.mxu0 0.0
    %4074 = vmatpush1.msra.mxu0 0.0
    %4075 = vmatprep.subr.mxu0 0.0
    %4076 = vmatpush1.msra.mxu0 0.0
    %4077 = vmatprep.subr.mxu0 0.0
    %4078 = vmatpush1.msra.mxu0 0.0
    %4079 = vmatprep.subr.mxu0 0.0
    %4080 = vmatpush1.msra.mxu0 0.0
    %4081 = vmatprep.subr.mxu0 0.0
    %4082 = vmatpush1.msra.mxu0 0.0
    %4083 = vmatprep.subr.mxu0 0.0
    %4084 = vmatpush1.msra.mxu0 0.0
    %4085 = vmatprep.subr.mxu0 0.0
    %4086 = vmatpush1.msra.mxu0 0.0
    %4087 = vmatprep.subr.mxu0 0.0
    %4088 = vmatpush1.msra.mxu0 0.0
    %4089 = vmatprep.subr.mxu0 0.0
    %4090 = vmatpush1.msra.mxu0 0.0
    %4091 = vmatprep.subr.mxu0 0.0
    %4092 = vmatpush1.msra.mxu0 0.0
    %4093 = vmatprep.subr.mxu0 0.0
    %4094 = vmatpush1.msra.mxu0 %v3841
    %4095 = vmatprep.subr.mxu0 0.0
    %4096 = vmatpush2.msra.mxu0 0.0
    %4097 = vmatprep.subr.mxu0 0.0
    %4098 = vmatpush2.msra.mxu0 0.0
    %4099 = vmatprep.subr.mxu0 0.0
    %4100 = vmatpush2.msra.mxu0 0.0
    %4101 = vmatprep.subr.mxu0 0.0
    %4102 = vmatpush2.msra.mxu0 0.0
    %4103 = vmatprep.subr.mxu0 0.0
    %4104 = vmatpush2.msra.mxu0 0.0
    %4105 = vmatprep.subr.mxu0 0.0
    %4106 = vmatpush2.msra.mxu0 0.0
    %4107 = vmatprep.subr.mxu0 0.0
    %4108 = vmatpush2.msra.mxu0 0.0
    %4109 = vmatprep.subr.mxu0 0.0
    %4110 = vmatpush2.msra.mxu0 0.0
    %4111 = vmatprep.subr.mxu0 0.0
    %4112 = vmatpush2.msra.mxu0 0.0
    %4113 = vmatprep.subr.mxu0 0.0
    %4114 = vmatpush2.msra.mxu0 0.0
    %4115 = vmatprep.subr.mxu0 0.0
    %4116 = vmatpush2.msra.mxu0 0.0
    %4117 = vmatprep.subr.mxu0 0.0
    %4118 = vmatpush2.msra.mxu0 0.0
    %4119 = vmatprep.subr.mxu0 0.0
    %4120 = vmatpush2.msra.mxu0 0.0
    %4121 = vmatprep.subr.mxu0 0.0
    %4122 = vmatpush2.msra.mxu0 0.0
    %4123 = vmatprep.subr.mxu0 0.0
    %4124 = vmatpush2.msra.mxu0 0.0
    %4125 = vmatprep.subr.mxu0 0.0
    %4126 = vmatpush2.msra.mxu0 0.0
    %4127 = vmatprep.mubr.f32.mxu0 0.0
    %4128 = vmatmul.mubr.f32.gmra.mxu0 %v4061
    %v4129 = vpop.f32.mrf.mxu0
    %v4130 = vadd.f32 %v4057, %v4129
    %v4131 = vpop.f32.mrf.mxu0
    %4132 = vdwg.mxu0
    %v4133 = vld [vmem:[#allocation10 + $0x2] sm:$0x1]
    %v4134 = vlaneseq
    %v4135 = vshrl.u32 %v4134, 7
    %v4136 = vsub.s32 0, %v4135
    %v4137 = vrot.slane %v4133, %v4136
    %v4138 = vmul.f32 %v3843, %v4137
    %4139 = vadd.xlane.f32.xlu0 %v4138
    %v4140 = vpop.xlane.xlu0 %4139
    %v4141 = vld [vmem:[#allocation12 + $0x2] sm:$0x1]
    %v4142 = vlaneseq
    %v4143 = vshrl.u32 %v4142, 7
    %v4144 = vsub.s32 0, %v4143
    %v4145 = vrot.slane %v4141, %v4144
    %v4146 = vmul.f32 %v3843, %v4145
    %4147 = vadd.xlane.f32.xlu0 %v4146
    %v4148 = vpop.xlane.xlu0 %4147
    %4149 = vxpose.xlu0.b32.start [1/16] %v4140, 128
    %4150 = vxpose.xlu0.b32.cont [2/16] 0.0, 128
    %4151 = vxpose.xlu0.b32.cont [3/16] 0.0, 128
    %4152 = vxpose.xlu0.b32.cont [4/16] 0.0, 128
    %4153 = vxpose.xlu0.b32.cont [5/16] 0.0, 128
    %4154 = vxpose.xlu0.b32.cont [6/16] 0.0, 128
    %4155 = vxpose.xlu0.b32.cont [7/16] 0.0, 128
    %4156 = vxpose.xlu0.b32.cont [8/16] 0.0, 128
    %4157 = vxpose.xlu0.b32.cont [9/16] 0.0, 128
    %4158 = vxpose.xlu0.b32.cont [10/16] 0.0, 128
    %4159 = vxpose.xlu0.b32.cont [11/16] 0.0, 128
    %4160 = vxpose.xlu0.b32.cont [12/16] 0.0, 128
    %4161 = vxpose.xlu0.b32.cont [13/16] 0.0, 128
    %4162 = vxpose.xlu0.b32.cont [14/16] 0.0, 128
    %4163 = vxpose.xlu0.b32.cont [15/16] 0.0, 128
    %4164 = vxpose.xlu0.b32.end [16/16] 0.0, 128
    %v4165 = vpop.trf.xlu0
    %v4166 = vpop.trf.xlu0
    %v4167 = vpop.trf.xlu0
    %v4168 = vpop.trf.xlu0
    %v4169 = vpop.trf.xlu0
    %v4170 = vpop.trf.xlu0
    %v4171 = vpop.trf.xlu0
    %v4172 = vpop.trf.xlu0
    %v4173 = vpop.trf.xlu0
    %v4174 = vpop.trf.xlu0
    %v4175 = vpop.trf.xlu0
    %v4176 = vpop.trf.xlu0
    %v4177 = vpop.trf.xlu0
    %v4178 = vpop.trf.xlu0
    %v4179 = vpop.trf.xlu0
    %v4180 = vpop.trf.xlu0
    %v4181 = vlaneseq
    %v4182 = vshrl.u32 %v4181, 7
    %v4183 = vsub.s32 0, %v4182
    %v4184 = vrot.slane %v4165, %v4183
    %v4185 = vadd.f32 %v4148, %v4184
    %s4186 = scalar_lea.vmem [#allocation13], 16
    %v4187 = vld [vmem:[%s4186] sm:$0xff]
    %v4188 = vadd.f32 %v4185, %v4187
    %v4189 = vmul.f32 %v4188, 0.2
    %v4190 = vmax.f32 %v4188, %v4189
    %v4191 = vsel %vm3902, %v4190, -inf
    %4192 = vmax.xlane.f32.xlu0 %v4191
    %v4193 = vpop.xlane.xlu0 %4192
    %v4194 = vsub.f32 %v4190, %v4193
    %v4195 = vmul.f32 %v4194, 1.442695
    %v4196 = vpow.pop %v4195
    %v4197 = vmul.f32 %v4196, %v3844
    %v4198 = vsel %vm3902, %v4197, 0.0
    %4199 = vadd.xlane.f32.xlu0 %v4198
    %v4200 = vpop.xlane.xlu0 %4199
    %v4201 = vmax.f32 %v4200, 1e-16
    %v4202 = vrcp.pop %v4201
    %v4203 = vmul.f32 %v4197, %v4202
    %v4205 = vsel %vm3902, %v4203, 0
    %4207 = vmatprep.subr.mxu0 0.0
    %4208 = vmatpush1.msra.mxu0 0.0
    %4209 = vmatprep.subr.mxu0 0.0
    %4210 = vmatpush1.msra.mxu0 0.0
    %4211 = vmatprep.subr.mxu0 0.0
    %4212 = vmatpush1.msra.mxu0 0.0
    %4213 = vmatprep.subr.mxu0 0.0
    %4214 = vmatpush1.msra.mxu0 0.0
    %4215 = vmatprep.subr.mxu0 0.0
    %4216 = vmatpush1.msra.mxu0 0.0
    %4217 = vmatprep.subr.mxu0 0.0
    %4218 = vmatpush1.msra.mxu0 0.0
    %4219 = vmatprep.subr.mxu0 0.0
    %4220 = vmatpush1.msra.mxu0 0.0
    %4221 = vmatprep.subr.mxu0 0.0
    %4222 = vmatpush1.msra.mxu0 0.0
    %4223 = vmatprep.subr.mxu0 0.0
    %4224 = vmatpush1.msra.mxu0 0.0
    %4225 = vmatprep.subr.mxu0 0.0
    %4226 = vmatpush1.msra.mxu0 0.0
    %4227 = vmatprep.subr.mxu0 0.0
    %4228 = vmatpush1.msra.mxu0 0.0
    %4229 = vmatprep.subr.mxu0 0.0
    %4230 = vmatpush1.msra.mxu0 0.0
    %4231 = vmatprep.subr.mxu0 0.0
    %4232 = vmatpush1.msra.mxu0 0.0
    %4233 = vmatprep.subr.mxu0 0.0
    %4234 = vmatpush1.msra.mxu0 0.0
    %4235 = vmatprep.subr.mxu0 0.0
    %4236 = vmatpush1.msra.mxu0 0.0
    %4237 = vmatprep.subr.mxu0 0.0
    %4238 = vmatpush1.msra.mxu0 %v3843
    %4239 = vmatprep.subr.mxu0 0.0
    %4240 = vmatpush2.msra.mxu0 0.0
    %4241 = vmatprep.subr.mxu0 0.0
    %4242 = vmatpush2.msra.mxu0 0.0
    %4243 = vmatprep.subr.mxu0 0.0
    %4244 = vmatpush2.msra.mxu0 0.0
    %4245 = vmatprep.subr.mxu0 0.0
    %4246 = vmatpush2.msra.mxu0 0.0
    %4247 = vmatprep.subr.mxu0 0.0
    %4248 = vmatpush2.msra.mxu0 0.0
    %4249 = vmatprep.subr.mxu0 0.0
    %4250 = vmatpush2.msra.mxu0 0.0
    %4251 = vmatprep.subr.mxu0 0.0
    %4252 = vmatpush2.msra.mxu0 0.0
    %4253 = vmatprep.subr.mxu0 0.0
    %4254 = vmatpush2.msra.mxu0 0.0
    %4255 = vmatprep.subr.mxu0 0.0
    %4256 = vmatpush2.msra.mxu0 0.0
    %4257 = vmatprep.subr.mxu0 0.0
    %4258 = vmatpush2.msra.mxu0 0.0
    %4259 = vmatprep.subr.mxu0 0.0
    %4260 = vmatpush2.msra.mxu0 0.0
    %4261 = vmatprep.subr.mxu0 0.0
    %4262 = vmatpush2.msra.mxu0 0.0
    %4263 = vmatprep.subr.mxu0 0.0
    %4264 = vmatpush2.msra.mxu0 0.0
    %4265 = vmatprep.subr.mxu0 0.0
    %4266 = vmatpush2.msra.mxu0 0.0
    %4267 = vmatprep.subr.mxu0 0.0
    %4268 = vmatpush2.msra.mxu0 0.0
    %4269 = vmatprep.subr.mxu0 0.0
    %4270 = vmatpush2.msra.mxu0 0.0
    %4271 = vmatprep.mubr.f32.mxu0 0.0
    %4272 = vmatmul.mubr.f32.gmra.mxu0 %v4205
    %v4273 = vpop.f32.mrf.mxu0
    %v4274 = vadd.f32 0.0, %v4273
    %v4275 = vpop.f32.mrf.mxu0
    %4276 = vdwg.mxu0
    %v4277 = vadd.f32 %v4130, %v4274
    %v4278 = vmul.f32 %v4277, 0.33333334
    %v4279 = vld [vmem:[%s10] sm:$0x1]
    %v4281 = vlaneseq
    %v4282 = vshrl.u32 %v4281, 7
    %v4283 = vsub.s32 0, %v4282
    %v4284 = vrot.slane %v4279, %v4283
    %v4286 = vadd.f32 %v4278, %v4284
    %v4287 = vld [vmem:[%s11] sm:$0xff]
    %v4288 = vld [vmem:[%s11 + $0x8] sm:$0xff]
    %v4289 = vld [vmem:[%s11 + $0x10] sm:$0xff]
    %v4290 = vld [vmem:[%s11 + $0x18] sm:$0xff]
    %v4291 = vld [vmem:[%s11 + $0x20] sm:$0xff]
    %v4292 = vld [vmem:[%s11 + $0x28] sm:$0xff]
    %v4293 = vld [vmem:[%s11 + $0x30] sm:$0xff]
    %v4294 = vld [vmem:[%s11 + $0x38] sm:$0xff]
    %v4295 = vld [vmem:[%s11 + $0x40] sm:$0xff]
    %v4296 = vld [vmem:[%s11 + $0x48] sm:$0xff]
    %v4297 = vld [vmem:[%s11 + $0x50] sm:$0xff]
    %v4298 = vld [vmem:[%s11 + $0x58] sm:$0xff]
    %v4299 = vld [vmem:[%s11 + $0x60] sm:$0xff]
    %v4300 = vld [vmem:[%s11 + $0x68] sm:$0xff]
    %v4301 = vld [vmem:[%s11 + $0x70] sm:$0xff]
    %v4302 = vld [vmem:[%s11 + $0x78] sm:$0xff]
    %v4303 = vld [vmem:[#allocation4] sm:$0x1]
    %v4305 = vlaneseq
    %v4306 = vshrl.u32 %v4305, 7
    %v4307 = vsub.s32 0, %v4306
    %v4308 = vrot.slane %v4303, %v4307
    %4309 = vset.pattern.permute.xlu0 0
    %4310 = vperm.xlu0 %4309, %v4308
    %v4311 = vpop.permute.xlu0 %4310
    %4313 = vmatprep.subr.mxu0 0.0
    %4314 = vmatpush1.msra.mxu0 %v4302
    %4315 = vmatprep.subr.mxu0 0.0
    %4316 = vmatpush1.msra.mxu0 %v4301
    %4317 = vmatprep.subr.mxu0 0.0
    %4318 = vmatpush1.msra.mxu0 %v4300
    %4319 = vmatprep.subr.mxu0 0.0
    %4320 = vmatpush1.msra.mxu0 %v4299
    %4321 = vmatprep.subr.mxu0 0.0
    %4322 = vmatpush1.msra.mxu0 %v4298
    %4323 = vmatprep.subr.mxu0 0.0
    %4324 = vmatpush1.msra.mxu0 %v4297
    %4325 = vmatprep.subr.mxu0 0.0
    %4326 = vmatpush1.msra.mxu0 %v4296
    %4327 = vmatprep.subr.mxu0 0.0
    %4328 = vmatpush1.msra.mxu0 %v4295
    %4329 = vmatprep.subr.mxu0 0.0
    %4330 = vmatpush1.msra.mxu0 %v4294
    %4331 = vmatprep.subr.mxu0 0.0
    %4332 = vmatpush1.msra.mxu0 %v4293
    %4333 = vmatprep.subr.mxu0 0.0
    %4334 = vmatpush1.msra.mxu0 %v4292
    %4335 = vmatprep.subr.mxu0 0.0
    %4336 = vmatpush1.msra.mxu0 %v4291
    %4337 = vmatprep.subr.mxu0 0.0
    %4338 = vmatpush1.msra.mxu0 %v4290
    %4339 = vmatprep.subr.mxu0 0.0
    %4340 = vmatpush1.msra.mxu0 %v4289
    %4341 = vmatprep.subr.mxu0 0.0
    %4342 = vmatpush1.msra.mxu0 %v4288
    %4343 = vmatprep.subr.mxu0 0.0
    %4344 = vmatpush1.msra.mxu0 %v4287
    %4345 = vmatprep.subr.mxu0 0.0
    %4346 = vmatpush2.msra.mxu0 0.0
    %4347 = vmatprep.subr.mxu0 0.0
    %4348 = vmatpush2.msra.mxu0 0.0
    %4349 = vmatprep.subr.mxu0 0.0
    %4350 = vmatpush2.msra.mxu0 0.0
    %4351 = vmatprep.subr.mxu0 0.0
    %4352 = vmatpush2.msra.mxu0 0.0
    %4353 = vmatprep.subr.mxu0 0.0
    %4354 = vmatpush2.msra.mxu0 0.0
    %4355 = vmatprep.subr.mxu0 0.0
    %4356 = vmatpush2.msra.mxu0 0.0
    %4357 = vmatprep.subr.mxu0 0.0
    %4358 = vmatpush2.msra.mxu0 0.0
    %4359 = vmatprep.subr.mxu0 0.0
    %4360 = vmatpush2.msra.mxu0 0.0
    %4361 = vmatprep.subr.mxu0 0.0
    %4362 = vmatpush2.msra.mxu0 0.0
    %4363 = vmatprep.subr.mxu0 0.0
    %4364 = vmatpush2.msra.mxu0 0.0
    %4365 = vmatprep.subr.mxu0 0.0
    %4366 = vmatpush2.msra.mxu0 0.0
    %4367 = vmatprep.subr.mxu0 0.0
    %4368 = vmatpush2.msra.mxu0 0.0
    %4369 = vmatprep.subr.mxu0 0.0
    %4370 = vmatpush2.msra.mxu0 0.0
    %4371 = vmatprep.subr.mxu0 0.0
    %4372 = vmatpush2.msra.mxu0 0.0
    %4373 = vmatprep.subr.mxu0 0.0
    %4374 = vmatpush2.msra.mxu0 0.0
    %4375 = vmatprep.subr.mxu0 0.0
    %4376 = vmatpush2.msra.mxu0 0.0
    %4377 = vmatprep.mubr.f32.mxu0 0.0
    %4378 = vmatmul.mubr.f32.gmra.mxu0 %v4286
    %v4379 = vpop.f32.mrf.mxu0
    %v4380 = vadd.f32 %v4311, %v4379
    %v4381 = vpop.f32.mrf.mxu0
    %4382 = vdwg.mxu0
    %v4383 = vmax.f32 %v4380, 0.0
    %v4384 = vld [vmem:[#allocation16] sm:$0xff]
    %v4385 = vld [vmem:[#allocation18] sm:$0x1]
    %v4387 = vlaneseq
    %v4388 = vshrl.u32 %v4387, 7
    %v4389 = vsub.s32 0, %v4388
    %v4390 = vrot.slane %v4385, %v4389
    %v4393 = vsel %vm3902, %v4383, 0
    %4395 = vmatprep.subr.mxu0 0.0
    %4396 = vmatpush1.msra.mxu0 0.0
    %4397 = vmatprep.subr.mxu0 0.0
    %4398 = vmatpush1.msra.mxu0 0.0
    %4399 = vmatprep.subr.mxu0 0.0
    %4400 = vmatpush1.msra.mxu0 0.0
    %4401 = vmatprep.subr.mxu0 0.0
    %4402 = vmatpush1.msra.mxu0 0.0
    %4403 = vmatprep.subr.mxu0 0.0
    %4404 = vmatpush1.msra.mxu0 0.0
    %4405 = vmatprep.subr.mxu0 0.0
    %4406 = vmatpush1.msra.mxu0 0.0
    %4407 = vmatprep.subr.mxu0 0.0
    %4408 = vmatpush1.msra.mxu0 0.0
    %4409 = vmatprep.subr.mxu0 0.0
    %4410 = vmatpush1.msra.mxu0 0.0
    %4411 = vmatprep.subr.mxu0 0.0
    %4412 = vmatpush1.msra.mxu0 0.0
    %4413 = vmatprep.subr.mxu0 0.0
    %4414 = vmatpush1.msra.mxu0 0.0
    %4415 = vmatprep.subr.mxu0 0.0
    %4416 = vmatpush1.msra.mxu0 0.0
    %4417 = vmatprep.subr.mxu0 0.0
    %4418 = vmatpush1.msra.mxu0 0.0
    %4419 = vmatprep.subr.mxu0 0.0
    %4420 = vmatpush1.msra.mxu0 0.0
    %4421 = vmatprep.subr.mxu0 0.0
    %4422 = vmatpush1.msra.mxu0 0.0
    %4423 = vmatprep.subr.mxu0 0.0
    %4424 = vmatpush1.msra.mxu0 0.0
    %4425 = vmatprep.subr.mxu0 0.0
    %4426 = vmatpush1.msra.mxu0 %v4384
    %4427 = vmatprep.subr.mxu0 0.0
    %4428 = vmatpush2.msra.mxu0 0.0
    %4429 = vmatprep.subr.mxu0 0.0
    %4430 = vmatpush2.msra.mxu0 0.0
    %4431 = vmatprep.subr.mxu0 0.0
    %4432 = vmatpush2.msra.mxu0 0.0
    %4433 = vmatprep.subr.mxu0 0.0
    %4434 = vmatpush2.msra.mxu0 0.0
    %4435 = vmatprep.subr.mxu0 0.0
    %4436 = vmatpush2.msra.mxu0 0.0
    %4437 = vmatprep.subr.mxu0 0.0
    %4438 = vmatpush2.msra.mxu0 0.0
    %4439 = vmatprep.subr.mxu0 0.0
    %4440 = vmatpush2.msra.mxu0 0.0
    %4441 = vmatprep.subr.mxu0 0.0
    %4442 = vmatpush2.msra.mxu0 0.0
    %4443 = vmatprep.subr.mxu0 0.0
    %4444 = vmatpush2.msra.mxu0 0.0
    %4445 = vmatprep.subr.mxu0 0.0
    %4446 = vmatpush2.msra.mxu0 0.0
    %4447 = vmatprep.subr.mxu0 0.0
    %4448 = vmatpush2.msra.mxu0 0.0
    %4449 = vmatprep.subr.mxu0 0.0
    %4450 = vmatpush2.msra.mxu0 0.0
    %4451 = vmatprep.subr.mxu0 0.0
    %4452 = vmatpush2.msra.mxu0 0.0
    %4453 = vmatprep.subr.mxu0 0.0
    %4454 = vmatpush2.msra.mxu0 0.0
    %4455 = vmatprep.subr.mxu0 0.0
    %4456 = vmatpush2.msra.mxu0 0.0
    %4457 = vmatprep.subr.mxu0 0.0
    %4458 = vmatpush2.msra.mxu0 0.0
    %4459 = vmatprep.mubr.f32.mxu0 0.0
    %4460 = vmatmul.mubr.f32.gmra.mxu0 %v4393
    %v4461 = vpop.f32.mrf.mxu0
    %v4462 = vadd.f32 %v4390, %v4461
    %v4463 = vpop.f32.mrf.mxu0
    %4464 = vdwg.mxu0
    %v4465 = vmax.f32 %v4462, 0.0
    %v4466 = vsel %vm235, %v4286, -inf
    %v4467 = vrot.slane %v4466, 4
    %v4468 = vmax.f32 %v4466, %v4467
    %v4469 = vrot.slane %v4468, 2
    %v4470 = vmax.f32 %v4468, %v4469
    %v4471 = vrot.slane %v4470, 1
    %v4472 = vmax.f32 %v4470, %v4471
    %vm4473 = vcmask 1047556
    %v4474 = vsel %vm4473, %v4286, -inf
    %v4475 = vrot.slane %v4474, 4
    %v4476 = vmax.f32 %v4474, %v4475
    %v4477 = vrot.slane %v4476, 2
    %v4478 = vmax.f32 %v4476, %v4477
    %v4479 = vrot.slane %v4478, 1
    %v4480 = vmax.f32 %v4478, %v4479
    %vm4481 = vcmask 1040384
    %v4482 = vsel %vm4481, %v4472, %v4480
    %v4483 = vld [vmem:[%s15] sm:$0xff]
    %v4484 = vld [vmem:[%s15 + $0x8] sm:$0xff]
    %v4485 = vld [vmem:[%s15 + $0x10] sm:$0xff]
    %v4486 = vld [vmem:[%s15 + $0x18] sm:$0xff]
    %v4487 = vld [vmem:[%s15 + $0x20] sm:$0xff]
    %v4488 = vld [vmem:[%s15 + $0x28] sm:$0xff]
    %v4489 = vld [vmem:[%s15 + $0x30] sm:$0xff]
    %v4490 = vld [vmem:[%s15 + $0x38] sm:$0xff]
    %v4491 = vld [vmem:[%s15 + $0x40] sm:$0xff]
    %v4492 = vld [vmem:[%s15 + $0x48] sm:$0xff]
    %v4493 = vld [vmem:[%s15 + $0x50] sm:$0xff]
    %v4494 = vld [vmem:[%s15 + $0x58] sm:$0xff]
    %v4495 = vld [vmem:[%s15 + $0x60] sm:$0xff]
    %v4496 = vld [vmem:[%s15 + $0x68] sm:$0xff]
    %v4497 = vld [vmem:[%s15 + $0x70] sm:$0xff]
    %v4498 = vld [vmem:[%s15 + $0x78] sm:$0xff]
    %v4499 = vld [vmem:[#allocation19] sm:$0x1]
    %v4501 = vlaneseq
    %v4502 = vshrl.u32 %v4501, 7
    %v4503 = vsub.s32 0, %v4502
    %v4504 = vrot.slane %v4499, %v4503
    %4506 = vmatprep.subr.mxu0 0.0
    %4507 = vmatpush1.msra.mxu0 %v4498
    %4508 = vmatprep.subr.mxu0 0.0
    %4509 = vmatpush1.msra.mxu0 %v4497
    %4510 = vmatprep.subr.mxu0 0.0
    %4511 = vmatpush1.msra.mxu0 %v4496
    %4512 = vmatprep.subr.mxu0 0.0
    %4513 = vmatpush1.msra.mxu0 %v4495
    %4514 = vmatprep.subr.mxu0 0.0
    %4515 = vmatpush1.msra.mxu0 %v4494
    %4516 = vmatprep.subr.mxu0 0.0
    %4517 = vmatpush1.msra.mxu0 %v4493
    %4518 = vmatprep.subr.mxu0 0.0
    %4519 = vmatpush1.msra.mxu0 %v4492
    %4520 = vmatprep.subr.mxu0 0.0
    %4521 = vmatpush1.msra.mxu0 %v4491
    %4522 = vmatprep.subr.mxu0 0.0
    %4523 = vmatpush1.msra.mxu0 %v4490
    %4524 = vmatprep.subr.mxu0 0.0
    %4525 = vmatpush1.msra.mxu0 %v4489
    %4526 = vmatprep.subr.mxu0 0.0
    %4527 = vmatpush1.msra.mxu0 %v4488
    %4528 = vmatprep.subr.mxu0 0.0
    %4529 = vmatpush1.msra.mxu0 %v4487
    %4530 = vmatprep.subr.mxu0 0.0
    %4531 = vmatpush1.msra.mxu0 %v4486
    %4532 = vmatprep.subr.mxu0 0.0
    %4533 = vmatpush1.msra.mxu0 %v4485
    %4534 = vmatprep.subr.mxu0 0.0
    %4535 = vmatpush1.msra.mxu0 %v4484
    %4536 = vmatprep.subr.mxu0 0.0
    %4537 = vmatpush1.msra.mxu0 %v4483
    %4538 = vmatprep.subr.mxu0 0.0
    %4539 = vmatpush2.msra.mxu0 0.0
    %4540 = vmatprep.subr.mxu0 0.0
    %4541 = vmatpush2.msra.mxu0 0.0
    %4542 = vmatprep.subr.mxu0 0.0
    %4543 = vmatpush2.msra.mxu0 0.0
    %4544 = vmatprep.subr.mxu0 0.0
    %4545 = vmatpush2.msra.mxu0 0.0
    %4546 = vmatprep.subr.mxu0 0.0
    %4547 = vmatpush2.msra.mxu0 0.0
    %4548 = vmatprep.subr.mxu0 0.0
    %4549 = vmatpush2.msra.mxu0 0.0
    %4550 = vmatprep.subr.mxu0 0.0
    %4551 = vmatpush2.msra.mxu0 0.0
    %4552 = vmatprep.subr.mxu0 0.0
    %4553 = vmatpush2.msra.mxu0 0.0
    %4554 = vmatprep.subr.mxu0 0.0
    %4555 = vmatpush2.msra.mxu0 0.0
    %4556 = vmatprep.subr.mxu0 0.0
    %4557 = vmatpush2.msra.mxu0 0.0
    %4558 = vmatprep.subr.mxu0 0.0
    %4559 = vmatpush2.msra.mxu0 0.0
    %4560 = vmatprep.subr.mxu0 0.0
    %4561 = vmatpush2.msra.mxu0 0.0
    %4562 = vmatprep.subr.mxu0 0.0
    %4563 = vmatpush2.msra.mxu0 0.0
    %4564 = vmatprep.subr.mxu0 0.0
    %4565 = vmatpush2.msra.mxu0 0.0
    %4566 = vmatprep.subr.mxu0 0.0
    %4567 = vmatpush2.msra.mxu0 0.0
    %4568 = vmatprep.subr.mxu0 0.0
    %4569 = vmatpush2.msra.mxu0 0.0
    %4570 = vmatprep.mubr.f32.mxu0 0.0
    %4571 = vmatmul.mubr.f32.gmra.mxu0 %v4482
    %v4572 = vpop.f32.mrf.mxu0
    %v4573 = vadd.f32 %v4504, %v4572
    %v4574 = vpop.f32.mrf.mxu0
    %4575 = vdwg.mxu0
    %v4576 = vld [vmem:[#allocation21] sm:$0xff]
    %v4577 = vld [vmem:[#allocation21 + $0x8] sm:$0xff]
    %v4578 = vld [vmem:[#allocation22] sm:$0x1]
    %v4580 = vlaneseq
    %v4581 = vshrl.u32 %v4580, 7
    %v4582 = vsub.s32 0, %v4581
    %v4583 = vrot.slane %v4578, %v4582
    %vm4585 = vcmask 130048
    %v4587 = vsel %vm4585, %v4573, 0
    %4589 = vmatprep.subr.mxu0 0.0
    %4590 = vmatpush1.msra.mxu0 0.0
    %4591 = vmatprep.subr.mxu0 0.0
    %4592 = vmatpush1.msra.mxu0 0.0
    %4593 = vmatprep.subr.mxu0 0.0
    %4594 = vmatpush1.msra.mxu0 0.0
    %4595 = vmatprep.subr.mxu0 0.0
    %4596 = vmatpush1.msra.mxu0 0.0
    %4597 = vmatprep.subr.mxu0 0.0
    %4598 = vmatpush1.msra.mxu0 0.0
    %4599 = vmatprep.subr.mxu0 0.0
    %4600 = vmatpush1.msra.mxu0 0.0
    %4601 = vmatprep.subr.mxu0 0.0
    %4602 = vmatpush1.msra.mxu0 0.0
    %4603 = vmatprep.subr.mxu0 0.0
    %4604 = vmatpush1.msra.mxu0 0.0
    %4605 = vmatprep.subr.mxu0 0.0
    %4606 = vmatpush1.msra.mxu0 0.0
    %4607 = vmatprep.subr.mxu0 0.0
    %4608 = vmatpush1.msra.mxu0 0.0
    %4609 = vmatprep.subr.mxu0 0.0
    %4610 = vmatpush1.msra.mxu0 0.0
    %4611 = vmatprep.subr.mxu0 0.0
    %4612 = vmatpush1.msra.mxu0 0.0
    %4613 = vmatprep.subr.mxu0 0.0
    %4614 = vmatpush1.msra.mxu0 0.0
    %4615 = vmatprep.subr.mxu0 0.0
    %4616 = vmatpush1.msra.mxu0 0.0
    %4617 = vmatprep.subr.mxu0 0.0
    %4618 = vmatpush1.msra.mxu0 %v4577
    %4619 = vmatprep.subr.mxu0 0.0
    %4620 = vmatpush1.msra.mxu0 %v4576
    %4621 = vmatprep.subr.mxu0 0.0
    %4622 = vmatpush2.msra.mxu0 0.0
    %4623 = vmatprep.subr.mxu0 0.0
    %4624 = vmatpush2.msra.mxu0 0.0
    %4625 = vmatprep.subr.mxu0 0.0
    %4626 = vmatpush2.msra.mxu0 0.0
    %4627 = vmatprep.subr.mxu0 0.0
    %4628 = vmatpush2.msra.mxu0 0.0
    %4629 = vmatprep.subr.mxu0 0.0
    %4630 = vmatpush2.msra.mxu0 0.0
    %4631 = vmatprep.subr.mxu0 0.0
    %4632 = vmatpush2.msra.mxu0 0.0
    %4633 = vmatprep.subr.mxu0 0.0
    %4634 = vmatpush2.msra.mxu0 0.0
    %4635 = vmatprep.subr.mxu0 0.0
    %4636 = vmatpush2.msra.mxu0 0.0
    %4637 = vmatprep.subr.mxu0 0.0
    %4638 = vmatpush2.msra.mxu0 0.0
    %4639 = vmatprep.subr.mxu0 0.0
    %4640 = vmatpush2.msra.mxu0 0.0
    %4641 = vmatprep.subr.mxu0 0.0
    %4642 = vmatpush2.msra.mxu0 0.0
    %4643 = vmatprep.subr.mxu0 0.0
    %4644 = vmatpush2.msra.mxu0 0.0
    %4645 = vmatprep.subr.mxu0 0.0
    %4646 = vmatpush2.msra.mxu0 0.0
    %4647 = vmatprep.subr.mxu0 0.0
    %4648 = vmatpush2.msra.mxu0 0.0
    %4649 = vmatprep.subr.mxu0 0.0
    %4650 = vmatpush2.msra.mxu0 0.0
    %4651 = vmatprep.subr.mxu0 0.0
    %4652 = vmatpush2.msra.mxu0 0.0
    %4653 = vmatprep.mubr.f32.mxu0 0.0
    %4654 = vmatmul.mubr.f32.gmra.mxu0 %v4587
    %v4655 = vpop.f32.mrf.mxu0
    %v4656 = vadd.f32 %v4583, %v4655
    %v4657 = vpop.f32.mrf.mxu0
    %4658 = vdwg.mxu0
    %vm4659 = vcmask 1041408
    %v4660 = vsel %vm4659, %v4656, -inf
    %4661 = vmax.xlane.f32.xlu0 %v4660
    %v4662 = vpop.xlane.xlu0 %4661
    %v4663 = vsub.f32 %v4656, %v4662
    %v4664 = vmul.f32 %v4663, 1.442695
    %v4665 = vpow.pop %v4664
    %v4666 = vsel %vm4659, %v4665, 0.0
    %4667 = vadd.xlane.f32.xlu0 %v4666
    %v4668 = vpop.xlane.xlu0 %4667
    %v4669 = vrcp.pop %v4668
    %v4670 = vmul.f32 %v4665, %v4669
    %v4671 = vsel %vm4659, %v4670, 0.0
    %4672 = vst [vmem:[%s19] sm:$0xff] %v4465
    %4673 = vst [vmem:[%s19 + $0x8] sm:$0xff] %v4671
    // Predicated region
    $region126: #{grugat_forward.1} parent=1 // pred_check
      _
    $region127: #{grugat_forward.1} parent=1 // pred_check_branch
      %4675 = sbr.rel (0) target = $region129
    $region128: #{grugat_forward.1} parent=1 // pred_region
      _
    $region129: #{grugat_forward.1} parent=1 // pred_fallthru
      _
    // Predicated region
    $region130: #{grugat_forward.1} parent=1 // pred_check
      _
    $region131: #{grugat_forward.1} parent=1 // pred_check_branch
      %4677 = sbr.rel (0) target = $region133
    $region132: #{grugat_forward.1} parent=1 // pred_region
      _
    $region133: #{grugat_forward.1} parent=1 // pred_fallthru
      _
    %4678 = vsyncpa [#allocation6], 1
    %4679 = vsyncpa [#allocation8], 1
    %4680 = vsyncpa [#allocation11], 1
    %4681 = vsyncpa [#allocation14], 1
    %4682 = vsyncpa [#allocation17], 1
    %4683 = vsyncpa [#allocation20], 1
    %4684 = vsyncpa [#allocation23], 1

</llo_original>
